<compile_context>
chip_gen: v6e
topology: v6e:2x2x1
jax: 0.10.0
libtpu: 0.0.40
codegen_flags: <defaults>
</compile_context>

<pallas_src>
import numpy as np
import jax
import jax.numpy as jnp
from jax.experimental import pallas as pl
from jax.experimental.pallas import tpu as pltpu

# ----- configuration (EqMotion(in_node_nf=8, in_edge_nf=2, hidden_nf=32,
#                               in_channel=8, hid_channel=16, out_channel=10)) -----
HIDDEN_NF = 32
IN_CHANNEL = 8          # == in_node_nf == past sequence length L
HID_CHANNEL = 16
OUT_CHANNEL = 10
CATEGORY_NUM = 4
N_LAYERS = 4
N_HEADS = 20
TAO = 1.0
EPS = 1e-6


def silu(x):
    return x * jax.nn.sigmoid(x)


def mm(a, b):
    return jnp.dot(a, b, preferred_element_type=jnp.float32)


# --------------------------------------------------------------------------
# Fused kernel factory.  One grid step, both batches folded along sublanes.
# --------------------------------------------------------------------------
def make_kernel(Bn, N, D):
    Hn = HIDDEN_NF
    hid = HID_CHANNEL
    C2 = 2 * hid            # == Hn for this configuration
    K = CATEGORY_NUM
    L2 = 2 * IN_CHANNEL
    NN = N * N

    def kernel(xv_ref, hin_ref, aux_ref, wpair_ref, wpre_ref, wcat_ref,
               bcat_ref, whead_ref, pmat_ref, sagg_ref, out_ref, cat_ref):
        xv = xv_ref[...]            # (B*DN, 2L)   lanes [x time | vel time], rows (b,d,n)
        hin = hin_ref[...]          # (B*N, 2L)    lanes [h | vel_angle], rows (b,n)
        aux = aux_ref[...]          # (B*DN, 3)    [x_mean(dct), valid*scale, x_center]
        wpair = wpair_ref[...]      # (B*NN, 1)    off-diagonal * validity mask
        xmr = aux[:, 0:1]
        mask_s = aux[:, 1:2]
        xcen = aux[:, 2:3]

        # ---- packed preprocess weights ----
        wpre = wpre_ref[...]
        Wxv = wpre[0:L2, :]                  # block-diag [dct@Wc, 0; 0, dct@Wv] (2L, 2hid)
        Wemb = wpre[L2:2 * L2, :]            # block-diag [We1, 0; 0, We2]        (2L, Hn)
        bemb = wpre[2 * L2:2 * L2 + 1, :]    # (1, Hn)
        corr = wpre[2 * L2 + 1:2 * L2 + 2, :]  # (1, 2hid)  x_mean add-back correction

        # ---------- stage 1: DCT + coord/vel transform (folded) + node embedding ----------
        xvh = mm(xv, Wxv) + xmr * corr       # (B*DN, 2hid)  lanes [x chans | vel chans]
        hemb = mm(hin, Wemb) + bemb          # (B*N, Hn)

        # ---- packed calc_category weights ----
        wcat = wcat_ref[...]
        r = 0
        cw1 = wcat[r:r + C2, 0:Hn]
        cw2 = wcat[r:r + C2, Hn:Hn + C2];   r += C2
        W_eij = wcat[r:r + Hn, :];          r += Hn      # [ew1_i | ew1_j]
        W_kij = wcat[r:r + Hn, :];          r += Hn      # [kw1_i | kw1_j]
        W_dek = wcat[r:r + C2, :];          r += C2      # [ew1_dist | kw1_dist]
        ew2 = wcat[r:r + Hn, 0:Hn]
        nw2 = wcat[r:r + Hn, Hn:2 * Hn];    r += Hn
        nw1h = wcat[r:r + Hn, 0:Hn]
        nw1a = wcat[r:r + Hn, Hn:2 * Hn];   r += Hn
        kw2 = wcat[r:r + Hn, :]                          # first K cols valid

        bcat = bcat_ref[...]
        cb1 = bcat[0:1]; cb2 = bcat[1:2]; eb1 = bcat[2:3]; eb2 = bcat[3:4]
        nb1 = bcat[4:5]; nb2 = bcat[5:6]; kb1 = bcat[6:7]; kb2 = bcat[7:8, 0:K]

        # ---------- stage 2: calc_category ----------
        # pairwise per-channel distances over the D spatial dims; x/vel channel halves
        # are lane-adjacent so one diff/square/sqrt covers all 2*hid channels.
        dist_parts = []
        for b in range(Bn):
            sq = jnp.zeros((N, N, C2), jnp.float32)
            for d in range(D):
                blk = xvh[(b * D + d) * N:(b * D + d + 1) * N, :]
                df = blk[:, None, :] - blk[None, :, :]
                sq = sq + df * df
            dist_parts.append(jnp.sqrt(sq).reshape(NN, C2))
        dist = jnp.concatenate(dist_parts, axis=0)        # (B*NN, 2hid)

        # coord_mlp
        cd = silu(mm(dist, cw1) + cb1)
        cd = silu(mm(cd, cw2) + cb2)                      # (B*NN, 2hid)

        # shared first-layer pieces for edge_mlp / category_mlp
        e_ij = mm(hemb, W_eij)                            # (B*N, 2Hn)  [eA | eB]
        ec_kc = mm(cd, W_dek)                             # (B*NN, 2Hn) [eC | kC]

        def ij_broadcast(ab, c):
            # row (b, i*N+j) <- c[b, i, j] + ab[b, i, :Hn] + ab[b, j, Hn:]
            parts = []
            for b in range(Bn):
                A = ab[b * N:(b + 1) * N, 0:Hn]
                Bj = ab[b * N:(b + 1) * N, Hn:2 * Hn]
                Cb = c[b * NN:(b + 1) * NN, :].reshape(N, N, Hn)
                parts.append((Cb + A[:, None, :] + Bj[None, :, :]).reshape(NN, Hn))
            return jnp.concatenate(parts, axis=0)

        # edge_mlp
        e_pre = ij_broadcast(e_ij, ec_kc[:, 0:Hn]) + eb1
        ef = silu(mm(silu(e_pre), ew2) + eb2)             # (B*NN, Hn)

        # masked neighbour aggregation as one matmul against kron(I_{B*N}, ones(1,N))
        agg = mm(sagg_ref[...], ef * wpair)               # (B*N, Hn)

        # node_mlp
        nd = silu(mm(hemb, nw1h) + mm(agg, nw1a) + nb1)
        nd = silu(mm(nd, nw2) + nb2)                      # (B*N, Hn)

        # category_mlp + softmax(tau)  (exact division for the denominator)
        k_ij = mm(nd, W_kij)                              # (B*N, 2Hn)
        k_pre = ij_broadcast(k_ij, ec_kc[:, Hn:2 * Hn]) + kb1
        kf = mm(silu(k_pre), kw2)[:, 0:K] + kb2
        kf = silu(kf) * (1.0 / TAO)
        mx = jnp.max(kf, axis=-1, keepdims=True)
        ex = jnp.exp(kf - mx)
        cat_ref[...] = ex / jnp.sum(ex, axis=-1, keepdims=True)

        # ---------- stage 3: 20 prediction heads (+ folded block-diag IDCT) ----------
        # TODO(synk): Feature_learning_layer (gcl_* / head_*) bodies are not defined in
        # the provided source, so those sub-layers act as identity on (h, x) here.
        xh = xvh[:, 0:hid]                                # (B*DN, hid)
        rowsum = jnp.sum(xh * mask_s, axis=1, keepdims=True)
        omr = mm(pmat_ref[...], rowsum)                   # (B*DN, 1)  out_mean per row
        whead = whead_ref[...]
        out_ref[...] = mm(xh, whead[0:hid, :]) + omr * whead[hid:hid + 1, :] + xcen

    return kernel


def run_fused(xv, hin, aux, wpair, pmatB, sagg, packed, Bn, N, D):
    DN = D * N
    NN = N * N
    H2 = N_HEADS * OUT_CHANNEL

    arrays = [xv, hin, aux, wpair, packed["Wpre"], packed["Wcat"],
              packed["Bcat"], packed["Whead"], pmatB, sagg]

    def full(arr):
        nd = arr.ndim
        return pl.BlockSpec(arr.shape, lambda i, _n=nd: (0,) * _n)

    in_specs = [full(a) for a in arrays]
    out_specs = (pl.BlockSpec((Bn * DN, H2), lambda i: (0, 0)),
                 pl.BlockSpec((Bn * NN, CATEGORY_NUM), lambda i: (0, 0)))
    out_shape = (jax.ShapeDtypeStruct((Bn * DN, H2), jnp.float32),
                 jax.ShapeDtypeStruct((Bn * NN, CATEGORY_NUM), jnp.float32))

    return pl.pallas_call(
        make_kernel(Bn, N, D),
        out_shape=out_shape,
        grid=(1,),
        in_specs=in_specs,
        out_specs=out_specs,
        compiler_params=pltpu.CompilerParams(dimension_semantics=("arbitrary",)),
    )(*arrays)


# --------------------------------------------------------------------------
# Parameters (deterministic, synthetic), DCT matrices, host-side packing.
# --------------------------------------------------------------------------
def get_dct_matrix(K):
    dct_m = np.eye(K)
    for k in range(K):
        for i in range(K):
            w = np.sqrt(2.0 / K)
            if k == 0:
                w = np.sqrt(1.0 / K)
            dct_m[k, i] = w * np.cos(np.pi * (i + 0.5) * k / K)
    idct_m = np.linalg.inv(dct_m)
    return dct_m, idct_m


def init_params(key):
    Hn, Hh = HIDDEN_NF, HIDDEN_NF // 2
    hid, L, O = HID_CHANNEL, IN_CHANNEL, OUT_CHANNEL
    C2 = 2 * hid
    shapes = dict(
        We1=(L, Hh), be1=(1, Hh), We2=(L, Hh), be2=(1, Hh),
        Wc=(L, hid), Wv=(L, hid),
        cw1=(C2, Hn), cb1=(1, Hn), cw2=(Hn, C2), cb2=(1, C2),
        ew1=(2 * Hn + C2, Hn), eb1=(1, Hn), ew2=(Hn, Hn), eb2=(1, Hn),
        nw1=(2 * Hn, Hn), nb1=(1, Hn), nw2=(Hn, Hn), nb2=(1, Hn),
        kw1=(2 * Hn + C2, Hn), kb1=(1, Hn), kw2=(Hn, CATEGORY_NUM), kb2=(1, CATEGORY_NUM),
        Whead=(N_HEADS, hid, O),
    )
    names = sorted(shapes)
    keys = jax.random.split(key, len(names))
    return {n: jax.random.normal(k, shapes[n], jnp.float32) * 0.1
            for n, k in zip(names, keys)}


def pack_params(p):
    """Host-side, one-time packing/folding of all weights into a few kernel inputs."""
    f32 = jnp.float32
    L, hid, O = IN_CHANNEL, HID_CHANNEL, OUT_CHANNEL
    Hn, Hh = HIDDEN_NF, HIDDEN_NF // 2
    C2 = 2 * hid
    H2 = N_HEADS * O
    K = CATEGORY_NUM

    dct_m, _ = get_dct_matrix(L)
    _, idct_m = get_dct_matrix(O)
    dct_T = jnp.asarray(dct_m.T, f32)

    def lane2(a, b):
        return jnp.concatenate([jnp.asarray(a, f32), jnp.asarray(b, f32)], axis=1)

    # stage 1: block-diag embedding + (DCT folded into coord/vel transforms)
    z = jnp.zeros((L, Hh), f32)
    Wemb = jnp.concatenate([lane2(p["We1"], z), lane2(z, p["We2"])], axis=0)   # (2L, Hn)
    bemb = lane2(p["be1"], p["be2"])                                            # (1, Hn)
    zl = jnp.zeros((L, hid), f32)
    Wxv = jnp.concatenate([lane2(dct_T @ p["Wc"], zl),
                           lane2(zl, dct_T @ p["Wv"])], axis=0)                 # (2L, 2hid)
    corr = lane2(1.0 - jnp.sum(p["Wc"], axis=0, keepdims=True),
                 jnp.zeros((1, hid), f32))                                      # (1, 2hid)
    pad_rows = (-(2 * 2 * L + 2)) % 8
    Wpre = jnp.concatenate([Wxv, Wemb, bemb, corr,
                            jnp.zeros((pad_rows, Hn), f32)], axis=0)

    # calc_category weights: merge paired matmuls via lane-concatenated weights
    W_eij = lane2(p["ew1"][0:Hn], p["ew1"][Hn:2 * Hn])        # (Hn, 2Hn)
    W_kij = lane2(p["kw1"][0:Hn], p["kw1"][Hn:2 * Hn])        # (Hn, 2Hn)
    W_dek = lane2(p["ew1"][2 * Hn:], p["kw1"][2 * Hn:])       # (C2, 2Hn)
    kw2p = jnp.concatenate([p["kw2"], jnp.zeros((Hn, 2 * Hn - K), f32)], axis=1)
    Wcat = jnp.concatenate([
        lane2(p["cw1"], p["cw2"]),                            # rows 0:C2
        W_eij, W_kij, W_dek,                                  # rows C2:C2+2Hn+C2
        lane2(p["ew2"], p["nw2"]),
        lane2(p["nw1"][0:Hn], p["nw1"][Hn:2 * Hn]),
        kw2p,
    ], axis=0)

    kb2p = jnp.concatenate([p["kb2"], jnp.zeros((1, Hn - K), f32)], axis=1)
    Bcat = jnp.concatenate([p["cb1"], p["cb2"], p["eb1"], p["eb2"],
                            p["nb1"], p["nb2"], p["kb1"], kb2p], axis=0)        # (8, Hn)

    # head weights with the block-diagonal IDCT and out_mean correction folded in
    Whead2 = jnp.transpose(p["Whead"], (1, 0, 2)).reshape(hid, H2)              # (hid, 200)
    IdctBlk = jnp.asarray(np.kron(np.eye(N_HEADS), idct_m.T), f32)              # (200, 200)
    Wcomb = Whead2 @ IdctBlk                                                     # (hid, 200)
    head_corr = (jnp.ones((1, H2), f32)
                 - jnp.sum(Whead2, axis=0, keepdims=True)) @ IdctBlk            # (1, 200)
    pad_h = (-(hid + 1)) % 8
    Whead = jnp.concatenate([Wcomb, head_corr, jnp.zeros((pad_h, H2), f32)], axis=0)

    return dict(Wpre=Wpre, Wcat=Wcat, Bcat=Bcat, Whead=Whead,
                dct_colsum=jnp.asarray(dct_m.sum(axis=0), f32))


# --------------------------------------------------------------------------
# Forward pass: tiny elementwise glue in plain JAX (fused by XLA under jit),
# everything else in the single fused Pallas kernel above.
# --------------------------------------------------------------------------
def eqmotion_forward(packed, h, x, vel, num_valid):
    B, N, L, D = x.shape
    f32 = jnp.float32
    DN = D * N

    nv = num_valid.astype(f32)
    scale = N / nv                                          # agent_num / num_valid, [B]

    # velocity-angle features
    vel_pre = jnp.concatenate([vel[:, :, :1], vel[:, :, :-1]], axis=2)
    vn = jnp.sqrt(jnp.sum(vel * vel, axis=-1))
    vpn = jnp.sqrt(jnp.sum(vel_pre * vel_pre, axis=-1))
    cosang = jnp.sum(vel_pre * vel, axis=-1) / ((vpn + EPS) * (vn + EPS))
    ang = jnp.arccos(jnp.clip(cosang, -1.0, 1.0))           # [B, N, L]

    # agent-validity mask
    idx = jnp.arange(N)
    row = (idx[None, :] < num_valid[:, None]).astype(f32)   # [B, N]

    # x_center (pre-DCT masked mean) and centered x
    x_center = jnp.einsum('bn,bnld->bd', row, x) * (scale / (N * L))[:, None]   # [B, D]
    x0 = x - x_center[:, None, None, :]

    # x_mean of the DCT'd x, via linearity of the DCT (no kernel round-trip needed)
    xm = jnp.einsum('bn,bnld,l->bd', row, x0, packed["dct_colsum"]) \
        * (scale / (N * L))[:, None]                                            # [B, D]

    # kernel-layout inputs: batches folded along rows, x|vel lane-stacked
    x_t = jnp.transpose(x0, (0, 3, 1, 2))                   # [B, D, N, L]
    v_t = jnp.transpose(vel, (0, 3, 1, 2))
    xv = jnp.concatenate([x_t, v_t], axis=-1).reshape(B * DN, 2 * L)
    hin = jnp.concatenate([h, ang], axis=-1).reshape(B * N, 2 * L)

    xmr = jnp.broadcast_to(xm[:, :, None], (B, D, N)).reshape(B * DN, 1)
    msk = jnp.broadcast_to((row * scale[:, None])[:, None, :], (B, D, N)).reshape(B * DN, 1)
    xcr = jnp.broadcast_to(x_center[:, :, None], (B, D, N)).reshape(B * DN, 1)
    aux = jnp.concatenate([xmr, msk, xcr], axis=1)          # [B*DN, 3]

    off_diag = 1.0 - jnp.eye(N, dtype=f32)
    wpair = (off_diag[None] * row[:, :, None] * row[:, None, :]).reshape(B * N * N, 1)

    # constant selector / group-average matrices (constants under jit)
    pmatB = jnp.asarray(np.kron(np.eye(B * D), np.ones((N, N))) / (N * HID_CHANNEL), f32)
    sagg = jnp.asarray(np.kron(np.eye(B * N), np.ones((1, N))), f32)

    out_k, cat = run_fused(xv, hin, aux, wpair, pmatB, sagg, packed, B, N, D)

    # (B*DN, 20*O) -> torch layout [B, N, 20, out_channel, D]
    x_out = jnp.transpose(out_k.reshape(B, D, N, N_HEADS, OUT_CHANNEL),
                          (0, 2, 3, 4, 1))
    category = cat.reshape(B, N, N, CATEGORY_NUM)
    category_per_layer = [category] * (N_LAYERS - 1)
    return x_out, category_per_layer


# --------------------------------------------------------------------------
if __name__ == "__main__":
    B, N, D = 2, 8, 3
    L = IN_CHANNEL

    root = jax.random.PRNGKey(0)
    kp, kh, kx, kv = jax.random.split(root, 4)
    params = init_params(kp)
    packed = pack_params(params)

    h = jax.random.normal(kh, (B, N, L), jnp.float32)
    x = jax.random.normal(kx, (B, N, L, D), jnp.float32)
    vel = jax.random.normal(kv, (B, N, L, D), jnp.float32)
    num_valid = jnp.array([N, 5], dtype=jnp.int32)

    fwd = jax.jit(eqmotion_forward)
    out, cats = fwd(packed, h, x, vel, num_valid)
    out = jax.block_until_ready(out)
    cats = [jax.block_until_ready(c) for c in cats]

    assert out.shape == (B, N, N_HEADS, OUT_CHANNEL, D)
    assert len(cats) == N_LAYERS - 1
    assert cats[0].shape == (B, N, N, CATEGORY_NUM)
    assert bool(jnp.all(jnp.isfinite(out)))
    assert bool(jnp.all(jnp.isfinite(cats[0])))
    # exact-division softmax -> rows sum to 1 within f32 rounding
    assert bool(jnp.allclose(jnp.sum(cats[0], axis=-1), 1.0, atol=1e-5))
    print("KERNEL_OK")
</pallas_src>

<mosaic_0001>
module attributes {stable_mosaic.version = 11 : i64} {
  func.func @kernel(%arg0: i32, %arg1: memref<48x16xf32, #tpu.memory_space<vmem>>, %arg2: memref<16x16xf32, #tpu.memory_space<vmem>>, %arg3: memref<48x3xf32, #tpu.memory_space<vmem>>, %arg4: memref<128x1xf32, #tpu.memory_space<vmem>>, %arg5: memref<40x32xf32, #tpu.memory_space<vmem>>, %arg6: memref<224x64xf32, #tpu.memory_space<vmem>>, %arg7: memref<8x32xf32, #tpu.memory_space<vmem>>, %arg8: memref<24x200xf32, #tpu.memory_space<vmem>>, %arg9: memref<48x48xf32, #tpu.memory_space<vmem>>, %arg10: memref<16x128xf32, #tpu.memory_space<vmem>>, %arg11: memref<48x200xf32, #tpu.memory_space<vmem>>, %arg12: memref<128x4xf32, #tpu.memory_space<vmem>>) attributes {dimension_semantics = [#tpu.dimension_semantics<arbitrary>], iteration_bounds = array<i64: 1>, scalar_prefetch = 0 : i64, scratch_operands = 0 : i64, tpu.core_type = #tpu.core_type<tc>, window_params = [{pipeline_mode = #tpu.pipeline_mode<synchronous>, transform_indices = @transform_0, window_bounds = array<i64: 48, 16>}, {pipeline_mode = #tpu.pipeline_mode<synchronous>, transform_indices = @transform_1, window_bounds = array<i64: 16, 16>}, {pipeline_mode = #tpu.pipeline_mode<synchronous>, transform_indices = @transform_2, window_bounds = array<i64: 48, 3>}, {pipeline_mode = #tpu.pipeline_mode<synchronous>, transform_indices = @transform_3, window_bounds = array<i64: 128, 1>}, {pipeline_mode = #tpu.pipeline_mode<synchronous>, transform_indices = @transform_4, window_bounds = array<i64: 40, 32>}, {pipeline_mode = #tpu.pipeline_mode<synchronous>, transform_indices = @transform_5, window_bounds = array<i64: 224, 64>}, {pipeline_mode = #tpu.pipeline_mode<synchronous>, transform_indices = @transform_6, window_bounds = array<i64: 8, 32>}, {pipeline_mode = #tpu.pipeline_mode<synchronous>, transform_indices = @transform_7, window_bounds = array<i64: 24, 200>}, {pipeline_mode = #tpu.pipeline_mode<synchronous>, transform_indices = @transform_8, window_bounds = array<i64: 48, 48>}, {pipeline_mode = #tpu.pipeline_mode<synchronous>, transform_indices = @transform_9, window_bounds = array<i64: 16, 128>}, {pipeline_mode = #tpu.pipeline_mode<synchronous>, transform_indices = @transform_10, window_bounds = array<i64: 48, 200>}, {pipeline_mode = #tpu.pipeline_mode<synchronous>, transform_indices = @transform_11, window_bounds = array<i64: 128, 4>}]} {
    %c0 = arith.constant 0 : index
    %c0_0 = arith.constant 0 : index
    %0 = vector.load %arg1[%c0, %c0_0] : memref<48x16xf32, #tpu.memory_space<vmem>>, vector<48x16xf32>
    %c0_1 = arith.constant 0 : index
    %c0_2 = arith.constant 0 : index
    %1 = vector.load %arg2[%c0_1, %c0_2] : memref<16x16xf32, #tpu.memory_space<vmem>>, vector<16x16xf32>
    %c0_3 = arith.constant 0 : index
    %c0_4 = arith.constant 0 : index
    %2 = vector.load %arg3[%c0_3, %c0_4] : memref<48x3xf32, #tpu.memory_space<vmem>>, vector<48x3xf32>
    %c0_5 = arith.constant 0 : index
    %c0_6 = arith.constant 0 : index
    %3 = vector.load %arg4[%c0_5, %c0_6] : memref<128x1xf32, #tpu.memory_space<vmem>>, vector<128x1xf32>
    %4 = vector.extract_strided_slice %2 {offsets = [0, 0], sizes = [48, 1], strides = [1, 1]} : vector<48x3xf32> to vector<48x1xf32>
    %5 = vector.extract_strided_slice %2 {offsets = [0, 1], sizes = [48, 1], strides = [1, 1]} : vector<48x3xf32> to vector<48x1xf32>
    %6 = vector.extract_strided_slice %2 {offsets = [0, 2], sizes = [48, 1], strides = [1, 1]} : vector<48x3xf32> to vector<48x1xf32>
    %c0_7 = arith.constant 0 : index
    %c0_8 = arith.constant 0 : index
    %7 = vector.load %arg5[%c0_7, %c0_8] : memref<40x32xf32, #tpu.memory_space<vmem>>, vector<40x32xf32>
    %8 = vector.extract_strided_slice %7 {offsets = [0, 0], sizes = [16, 32], strides = [1, 1]} : vector<40x32xf32> to vector<16x32xf32>
    %9 = vector.extract_strided_slice %7 {offsets = [16, 0], sizes = [16, 32], strides = [1, 1]} : vector<40x32xf32> to vector<16x32xf32>
    %10 = vector.extract_strided_slice %7 {offsets = [32, 0], sizes = [1, 32], strides = [1, 1]} : vector<40x32xf32> to vector<1x32xf32>
    %11 = vector.extract_strided_slice %7 {offsets = [33, 0], sizes = [1, 32], strides = [1, 1]} : vector<40x32xf32> to vector<1x32xf32>
    %cst = arith.constant dense<0.000000e+00> : vector<48x32xf32>
    %12 = tpu.matmul %0, %8, %cst {dimension_numbers = #tpu.dot_dimension_numbers<[1], [0], [0], [1], [0, 0, 1, 1], [], []>} : vector<48x16xf32>, vector<16x32xf32>, vector<48x32xf32> -> vector<48x32xf32>
    %13 = vector.broadcast %4 : vector<48x1xf32> to vector<48x32xf32>
    %14 = vector.broadcast %11 : vector<1x32xf32> to vector<48x32xf32>
    %15 = arith.mulf %13, %14 : vector<48x32xf32>
    %16 = arith.addf %12, %15 : vector<48x32xf32>
    %cst_9 = arith.constant dense<0.000000e+00> : vector<16x32xf32>
    %17 = tpu.matmul %1, %9, %cst_9 {dimension_numbers = #tpu.dot_dimension_numbers<[1], [0], [0], [1], [0, 0, 1, 1], [], []>} : vector<16x16xf32>, vector<16x32xf32>, vector<16x32xf32> -> vector<16x32xf32>
    %18 = vector.broadcast %10 : vector<1x32xf32> to vector<16x32xf32>
    %19 = arith.addf %17, %18 : vector<16x32xf32>
    %c0_10 = arith.constant 0 : index
    %c0_11 = arith.constant 0 : index
    %20 = vector.load %arg6[%c0_10, %c0_11] : memref<224x64xf32, #tpu.memory_space<vmem>>, vector<224x64xf32>
    %21 = vector.extract_strided_slice %20 {offsets = [0, 0], sizes = [32, 32], strides = [1, 1]} : vector<224x64xf32> to vector<32x32xf32>
    %22 = vector.extract_strided_slice %20 {offsets = [0, 32], sizes = [32, 32], strides = [1, 1]} : vector<224x64xf32> to vector<32x32xf32>
    %23 = vector.extract_strided_slice %20 {offsets = [32, 0], sizes = [32, 64], strides = [1, 1]} : vector<224x64xf32> to vector<32x64xf32>
    %24 = vector.extract_strided_slice %20 {offsets = [64, 0], sizes = [32, 64], strides = [1, 1]} : vector<224x64xf32> to vector<32x64xf32>
    %25 = vector.extract_strided_slice %20 {offsets = [96, 0], sizes = [32, 64], strides = [1, 1]} : vector<224x64xf32> to vector<32x64xf32>
    %26 = vector.extract_strided_slice %20 {offsets = [128, 0], sizes = [32, 32], strides = [1, 1]} : vector<224x64xf32> to vector<32x32xf32>
    %27 = vector.extract_strided_slice %20 {offsets = [128, 32], sizes = [32, 32], strides = [1, 1]} : vector<224x64xf32> to vector<32x32xf32>
    %28 = vector.extract_strided_slice %20 {offsets = [160, 0], sizes = [32, 32], strides = [1, 1]} : vector<224x64xf32> to vector<32x32xf32>
    %29 = vector.extract_strided_slice %20 {offsets = [160, 32], sizes = [32, 32], strides = [1, 1]} : vector<224x64xf32> to vector<32x32xf32>
    %30 = vector.extract_strided_slice %20 {offsets = [192, 0], sizes = [32, 64], strides = [1, 1]} : vector<224x64xf32> to vector<32x64xf32>
    %c0_12 = arith.constant 0 : index
    %c0_13 = arith.constant 0 : index
    %31 = vector.load %arg7[%c0_12, %c0_13] : memref<8x32xf32, #tpu.memory_space<vmem>>, vector<8x32xf32>
    %32 = vector.extract_strided_slice %31 {offsets = [0, 0], sizes = [1, 32], strides = [1, 1]} : vector<8x32xf32> to vector<1x32xf32>
    %33 = vector.extract_strided_slice %31 {offsets = [1, 0], sizes = [1, 32], strides = [1, 1]} : vector<8x32xf32> to vector<1x32xf32>
    %34 = vector.extract_strided_slice %31 {offsets = [2, 0], sizes = [1, 32], strides = [1, 1]} : vector<8x32xf32> to vector<1x32xf32>
    %35 = vector.extract_strided_slice %31 {offsets = [3, 0], sizes = [1, 32], strides = [1, 1]} : vector<8x32xf32> to vector<1x32xf32>
    %36 = vector.extract_strided_slice %31 {offsets = [4, 0], sizes = [1, 32], strides = [1, 1]} : vector<8x32xf32> to vector<1x32xf32>
    %37 = vector.extract_strided_slice %31 {offsets = [5, 0], sizes = [1, 32], strides = [1, 1]} : vector<8x32xf32> to vector<1x32xf32>
    %38 = vector.extract_strided_slice %31 {offsets = [6, 0], sizes = [1, 32], strides = [1, 1]} : vector<8x32xf32> to vector<1x32xf32>
    %39 = vector.extract_strided_slice %31 {offsets = [7, 0], sizes = [1, 4], strides = [1, 1]} : vector<8x32xf32> to vector<1x4xf32>
    %cst_14 = arith.constant 0.000000e+00 : f32
    %40 = vector.broadcast %cst_14 : f32 to vector<8x8x32xf32>
    %41 = vector.extract_strided_slice %16 {offsets = [0, 0], sizes = [8, 32], strides = [1, 1]} : vector<48x32xf32> to vector<8x32xf32>
    %42 = vector.shape_cast %41 : vector<8x32xf32> to vector<8x1x32xf32>
    %43 = vector.shape_cast %41 : vector<8x32xf32> to vector<1x8x32xf32>
    %44 = vector.broadcast %42 : vector<8x1x32xf32> to vector<8x8x32xf32>
    %45 = vector.broadcast %43 : vector<1x8x32xf32> to vector<8x8x32xf32>
    %46 = arith.subf %44, %45 : vector<8x8x32xf32>
    %47 = arith.mulf %46, %46 : vector<8x8x32xf32>
    %48 = arith.addf %40, %47 : vector<8x8x32xf32>
    %49 = vector.extract_strided_slice %16 {offsets = [8, 0], sizes = [8, 32], strides = [1, 1]} : vector<48x32xf32> to vector<8x32xf32>
    %50 = vector.shape_cast %49 : vector<8x32xf32> to vector<8x1x32xf32>
    %51 = vector.shape_cast %49 : vector<8x32xf32> to vector<1x8x32xf32>
    %52 = vector.broadcast %50 : vector<8x1x32xf32> to vector<8x8x32xf32>
    %53 = vector.broadcast %51 : vector<1x8x32xf32> to vector<8x8x32xf32>
    %54 = arith.subf %52, %53 : vector<8x8x32xf32>
    %55 = arith.mulf %54, %54 : vector<8x8x32xf32>
    %56 = arith.addf %48, %55 : vector<8x8x32xf32>
    %57 = vector.extract_strided_slice %16 {offsets = [16, 0], sizes = [8, 32], strides = [1, 1]} : vector<48x32xf32> to vector<8x32xf32>
    %58 = vector.shape_cast %57 : vector<8x32xf32> to vector<8x1x32xf32>
    %59 = vector.shape_cast %57 : vector<8x32xf32> to vector<1x8x32xf32>
    %60 = vector.broadcast %58 : vector<8x1x32xf32> to vector<8x8x32xf32>
    %61 = vector.broadcast %59 : vector<1x8x32xf32> to vector<8x8x32xf32>
    %62 = arith.subf %60, %61 : vector<8x8x32xf32>
    %63 = arith.mulf %62, %62 : vector<8x8x32xf32>
    %64 = arith.addf %56, %63 : vector<8x8x32xf32>
    %65 = math.sqrt %64 : vector<8x8x32xf32>
    %66 = vector.shape_cast %65 : vector<8x8x32xf32> to vector<64x32xf32>
    %cst_15 = arith.constant 0.000000e+00 : f32
    %67 = vector.broadcast %cst_15 : f32 to vector<8x8x32xf32>
    %68 = vector.extract_strided_slice %16 {offsets = [24, 0], sizes = [8, 32], strides = [1, 1]} : vector<48x32xf32> to vector<8x32xf32>
    %69 = vector.shape_cast %68 : vector<8x32xf32> to vector<8x1x32xf32>
    %70 = vector.shape_cast %68 : vector<8x32xf32> to vector<1x8x32xf32>
    %71 = vector.broadcast %69 : vector<8x1x32xf32> to vector<8x8x32xf32>
    %72 = vector.broadcast %70 : vector<1x8x32xf32> to vector<8x8x32xf32>
    %73 = arith.subf %71, %72 : vector<8x8x32xf32>
    %74 = arith.mulf %73, %73 : vector<8x8x32xf32>
    %75 = arith.addf %67, %74 : vector<8x8x32xf32>
    %76 = vector.extract_strided_slice %16 {offsets = [32, 0], sizes = [8, 32], strides = [1, 1]} : vector<48x32xf32> to vector<8x32xf32>
    %77 = vector.shape_cast %76 : vector<8x32xf32> to vector<8x1x32xf32>
    %78 = vector.shape_cast %76 : vector<8x32xf32> to vector<1x8x32xf32>
    %79 = vector.broadcast %77 : vector<8x1x32xf32> to vector<8x8x32xf32>
    %80 = vector.broadcast %78 : vector<1x8x32xf32> to vector<8x8x32xf32>
    %81 = arith.subf %79, %80 : vector<8x8x32xf32>
    %82 = arith.mulf %81, %81 : vector<8x8x32xf32>
    %83 = arith.addf %75, %82 : vector<8x8x32xf32>
    %84 = vector.extract_strided_slice %16 {offsets = [40, 0], sizes = [8, 32], strides = [1, 1]} : vector<48x32xf32> to vector<8x32xf32>
    %85 = vector.shape_cast %84 : vector<8x32xf32> to vector<8x1x32xf32>
    %86 = vector.shape_cast %84 : vector<8x32xf32> to vector<1x8x32xf32>
    %87 = vector.broadcast %85 : vector<8x1x32xf32> to vector<8x8x32xf32>
    %88 = vector.broadcast %86 : vector<1x8x32xf32> to vector<8x8x32xf32>
    %89 = arith.subf %87, %88 : vector<8x8x32xf32>
    %90 = arith.mulf %89, %89 : vector<8x8x32xf32>
    %91 = arith.addf %83, %90 : vector<8x8x32xf32>
    %92 = math.sqrt %91 : vector<8x8x32xf32>
    %93 = vector.shape_cast %92 : vector<8x8x32xf32> to vector<64x32xf32>
    %94 = tpu.concatenate %66, %93 in 0 : vector<64x32xf32>, vector<64x32xf32> -> vector<128x32xf32>
    %cst_16 = arith.constant dense<0.000000e+00> : vector<128x32xf32>
    %95 = tpu.matmul %94, %21, %cst_16 {dimension_numbers = #tpu.dot_dimension_numbers<[1], [0], [0], [1], [0, 0, 1, 1], [], []>} : vector<128x32xf32>, vector<32x32xf32>, vector<128x32xf32> -> vector<128x32xf32>
    %96 = vector.broadcast %32 : vector<1x32xf32> to vector<128x32xf32>
    %97 = arith.addf %95, %96 : vector<128x32xf32>
    %98 = arith.negf %97 : vector<128x32xf32>
    %99 = math.exp %98 : vector<128x32xf32>
    %cst_17 = arith.constant 1.000000e+00 : f32
    %100 = vector.broadcast %cst_17 : f32 to vector<128x32xf32>
    %101 = arith.addf %100, %99 : vector<128x32xf32>
    %102 = arith.divf %100, %101 : vector<128x32xf32>
    %103 = arith.mulf %97, %102 : vector<128x32xf32>
    %cst_18 = arith.constant dense<0.000000e+00> : vector<128x32xf32>
    %104 = tpu.matmul %103, %22, %cst_18 {dimension_numbers = #tpu.dot_dimension_numbers<[1], [0], [0], [1], [0, 0, 1, 1], [], []>} : vector<128x32xf32>, vector<32x32xf32>, vector<128x32xf32> -> vector<128x32xf32>
    %105 = vector.broadcast %33 : vector<1x32xf32> to vector<128x32xf32>
    %106 = arith.addf %104, %105 : vector<128x32xf32>
    %107 = arith.negf %106 : vector<128x32xf32>
    %108 = math.exp %107 : vector<128x32xf32>
    %cst_19 = arith.constant 1.000000e+00 : f32
    %109 = vector.broadcast %cst_19 : f32 to vector<128x32xf32>
    %110 = arith.addf %109, %108 : vector<128x32xf32>
    %111 = arith.divf %109, %110 : vector<128x32xf32>
    %112 = arith.mulf %106, %111 : vector<128x32xf32>
    %cst_20 = arith.constant dense<0.000000e+00> : vector<16x64xf32>
    %113 = tpu.matmul %19, %23, %cst_20 {dimension_numbers = #tpu.dot_dimension_numbers<[1], [0], [0], [1], [0, 0, 1, 1], [], []>} : vector<16x32xf32>, vector<32x64xf32>, vector<16x64xf32> -> vector<16x64xf32>
    %cst_21 = arith.constant dense<0.000000e+00> : vector<128x64xf32>
    %114 = tpu.matmul %112, %25, %cst_21 {dimension_numbers = #tpu.dot_dimension_numbers<[1], [0], [0], [1], [0, 0, 1, 1], [], []>} : vector<128x32xf32>, vector<32x64xf32>, vector<128x64xf32> -> vector<128x64xf32>
    %115 = vector.extract_strided_slice %114 {offsets = [0, 0], sizes = [128, 32], strides = [1, 1]} : vector<128x64xf32> to vector<128x32xf32>
    %116 = vector.extract_strided_slice %113 {offsets = [0, 0], sizes = [8, 32], strides = [1, 1]} : vector<16x64xf32> to vector<8x32xf32>
    %117 = vector.extract_strided_slice %113 {offsets = [0, 32], sizes = [8, 32], strides = [1, 1]} : vector<16x64xf32> to vector<8x32xf32>
    %118 = vector.extract_strided_slice %115 {offsets = [0, 0], sizes = [64, 32], strides = [1, 1]} : vector<128x32xf32> to vector<64x32xf32>
    %119 = vector.shape_cast %118 : vector<64x32xf32> to vector<8x8x32xf32>
    %120 = vector.shape_cast %116 : vector<8x32xf32> to vector<8x1x32xf32>
    %121 = vector.broadcast %120 : vector<8x1x32xf32> to vector<8x8x32xf32>
    %122 = arith.addf %119, %121 : vector<8x8x32xf32>
    %123 = vector.shape_cast %117 : vector<8x32xf32> to vector<1x8x32xf32>
    %124 = vector.broadcast %123 : vector<1x8x32xf32> to vector<8x8x32xf32>
    %125 = arith.addf %122, %124 : vector<8x8x32xf32>
    %126 = vector.shape_cast %125 : vector<8x8x32xf32> to vector<64x32xf32>
    %127 = vector.extract_strided_slice %113 {offsets = [8, 0], sizes = [8, 32], strides = [1, 1]} : vector<16x64xf32> to vector<8x32xf32>
    %128 = vector.extract_strided_slice %113 {offsets = [8, 32], sizes = [8, 32], strides = [1, 1]} : vector<16x64xf32> to vector<8x32xf32>
    %129 = vector.extract_strided_slice %115 {offsets = [64, 0], sizes = [64, 32], strides = [1, 1]} : vector<128x32xf32> to vector<64x32xf32>
    %130 = vector.shape_cast %129 : vector<64x32xf32> to vector<8x8x32xf32>
    %131 = vector.shape_cast %127 : vector<8x32xf32> to vector<8x1x32xf32>
    %132 = vector.broadcast %131 : vector<8x1x32xf32> to vector<8x8x32xf32>
    %133 = arith.addf %130, %132 : vector<8x8x32xf32>
    %134 = vector.shape_cast %128 : vector<8x32xf32> to vector<1x8x32xf32>
    %135 = vector.broadcast %134 : vector<1x8x32xf32> to vector<8x8x32xf32>
    %136 = arith.addf %133, %135 : vector<8x8x32xf32>
    %137 = vector.shape_cast %136 : vector<8x8x32xf32> to vector<64x32xf32>
    %138 = tpu.concatenate %126, %137 in 0 : vector<64x32xf32>, vector<64x32xf32> -> vector<128x32xf32>
    %139 = vector.broadcast %34 : vector<1x32xf32> to vector<128x32xf32>
    %140 = arith.addf %138, %139 : vector<128x32xf32>
    %141 = arith.negf %140 : vector<128x32xf32>
    %142 = math.exp %141 : vector<128x32xf32>
    %cst_22 = arith.constant 1.000000e+00 : f32
    %143 = vector.broadcast %cst_22 : f32 to vector<128x32xf32>
    %144 = arith.addf %143, %142 : vector<128x32xf32>
    %145 = arith.divf %143, %144 : vector<128x32xf32>
    %146 = arith.mulf %140, %145 : vector<128x32xf32>
    %cst_23 = arith.constant dense<0.000000e+00> : vector<128x32xf32>
    %147 = tpu.matmul %146, %26, %cst_23 {dimension_numbers = #tpu.dot_dimension_numbers<[1], [0], [0], [1], [0, 0, 1, 1], [], []>} : vector<128x32xf32>, vector<32x32xf32>, vector<128x32xf32> -> vector<128x32xf32>
    %148 = vector.broadcast %35 : vector<1x32xf32> to vector<128x32xf32>
    %149 = arith.addf %147, %148 : vector<128x32xf32>
    %150 = arith.negf %149 : vector<128x32xf32>
    %151 = math.exp %150 : vector<128x32xf32>
    %cst_24 = arith.constant 1.000000e+00 : f32
    %152 = vector.broadcast %cst_24 : f32 to vector<128x32xf32>
    %153 = arith.addf %152, %151 : vector<128x32xf32>
    %154 = arith.divf %152, %153 : vector<128x32xf32>
    %155 = arith.mulf %149, %154 : vector<128x32xf32>
    %c0_25 = arith.constant 0 : index
    %c0_26 = arith.constant 0 : index
    %156 = vector.load %arg10[%c0_25, %c0_26] : memref<16x128xf32, #tpu.memory_space<vmem>>, vector<16x128xf32>
    %157 = vector.broadcast %3 : vector<128x1xf32> to vector<128x32xf32>
    %158 = arith.mulf %155, %157 : vector<128x32xf32>
    %cst_27 = arith.constant dense<0.000000e+00> : vector<16x32xf32>
    %159 = tpu.matmul %156, %158, %cst_27 {dimension_numbers = #tpu.dot_dimension_numbers<[1], [0], [0], [1], [0, 0, 1, 1], [], []>} : vector<16x128xf32>, vector<128x32xf32>, vector<16x32xf32> -> vector<16x32xf32>
    %cst_28 = arith.constant dense<0.000000e+00> : vector<16x32xf32>
    %160 = tpu.matmul %19, %28, %cst_28 {dimension_numbers = #tpu.dot_dimension_numbers<[1], [0], [0], [1], [0, 0, 1, 1], [], []>} : vector<16x32xf32>, vector<32x32xf32>, vector<16x32xf32> -> vector<16x32xf32>
    %cst_29 = arith.constant dense<0.000000e+00> : vector<16x32xf32>
    %161 = tpu.matmul %159, %29, %cst_29 {dimension_numbers = #tpu.dot_dimension_numbers<[1], [0], [0], [1], [0, 0, 1, 1], [], []>} : vector<16x32xf32>, vector<32x32xf32>, vector<16x32xf32> -> vector<16x32xf32>
    %162 = arith.addf %160, %161 : vector<16x32xf32>
    %163 = vector.broadcast %36 : vector<1x32xf32> to vector<16x32xf32>
    %164 = arith.addf %162, %163 : vector<16x32xf32>
    %165 = arith.negf %164 : vector<16x32xf32>
    %166 = math.exp %165 : vector<16x32xf32>
    %cst_30 = arith.constant 1.000000e+00 : f32
    %167 = vector.broadcast %cst_30 : f32 to vector<16x32xf32>
    %168 = arith.addf %167, %166 : vector<16x32xf32>
    %169 = arith.divf %167, %168 : vector<16x32xf32>
    %170 = arith.mulf %164, %169 : vector<16x32xf32>
    %cst_31 = arith.constant dense<0.000000e+00> : vector<16x32xf32>
    %171 = tpu.matmul %170, %27, %cst_31 {dimension_numbers = #tpu.dot_dimension_numbers<[1], [0], [0], [1], [0, 0, 1, 1], [], []>} : vector<16x32xf32>, vector<32x32xf32>, vector<16x32xf32> -> vector<16x32xf32>
    %172 = vector.broadcast %37 : vector<1x32xf32> to vector<16x32xf32>
    %173 = arith.addf %171, %172 : vector<16x32xf32>
    %174 = arith.negf %173 : vector<16x32xf32>
    %175 = math.exp %174 : vector<16x32xf32>
    %cst_32 = arith.constant 1.000000e+00 : f32
    %176 = vector.broadcast %cst_32 : f32 to vector<16x32xf32>
    %177 = arith.addf %176, %175 : vector<16x32xf32>
    %178 = arith.divf %176, %177 : vector<16x32xf32>
    %179 = arith.mulf %173, %178 : vector<16x32xf32>
    %cst_33 = arith.constant dense<0.000000e+00> : vector<16x64xf32>
    %180 = tpu.matmul %179, %24, %cst_33 {dimension_numbers = #tpu.dot_dimension_numbers<[1], [0], [0], [1], [0, 0, 1, 1], [], []>} : vector<16x32xf32>, vector<32x64xf32>, vector<16x64xf32> -> vector<16x64xf32>
    %181 = vector.extract_strided_slice %114 {offsets = [0, 32], sizes = [128, 32], strides = [1, 1]} : vector<128x64xf32> to vector<128x32xf32>
    %182 = vector.extract_strided_slice %180 {offsets = [0, 0], sizes = [8, 32], strides = [1, 1]} : vector<16x64xf32> to vector<8x32xf32>
    %183 = vector.extract_strided_slice %180 {offsets = [0, 32], sizes = [8, 32], strides = [1, 1]} : vector<16x64xf32> to vector<8x32xf32>
    %184 = vector.extract_strided_slice %181 {offsets = [0, 0], sizes = [64, 32], strides = [1, 1]} : vector<128x32xf32> to vector<64x32xf32>
    %185 = vector.shape_cast %184 : vector<64x32xf32> to vector<8x8x32xf32>
    %186 = vector.shape_cast %182 : vector<8x32xf32> to vector<8x1x32xf32>
    %187 = vector.broadcast %186 : vector<8x1x32xf32> to vector<8x8x32xf32>
    %188 = arith.addf %185, %187 : vector<8x8x32xf32>
    %189 = vector.shape_cast %183 : vector<8x32xf32> to vector<1x8x32xf32>
    %190 = vector.broadcast %189 : vector<1x8x32xf32> to vector<8x8x32xf32>
    %191 = arith.addf %188, %190 : vector<8x8x32xf32>
    %192 = vector.shape_cast %191 : vector<8x8x32xf32> to vector<64x32xf32>
    %193 = vector.extract_strided_slice %180 {offsets = [8, 0], sizes = [8, 32], strides = [1, 1]} : vector<16x64xf32> to vector<8x32xf32>
    %194 = vector.extract_strided_slice %180 {offsets = [8, 32], sizes = [8, 32], strides = [1, 1]} : vector<16x64xf32> to vector<8x32xf32>
    %195 = vector.extract_strided_slice %181 {offsets = [64, 0], sizes = [64, 32], strides = [1, 1]} : vector<128x32xf32> to vector<64x32xf32>
    %196 = vector.shape_cast %195 : vector<64x32xf32> to vector<8x8x32xf32>
    %197 = vector.shape_cast %193 : vector<8x32xf32> to vector<8x1x32xf32>
    %198 = vector.broadcast %197 : vector<8x1x32xf32> to vector<8x8x32xf32>
    %199 = arith.addf %196, %198 : vector<8x8x32xf32>
    %200 = vector.shape_cast %194 : vector<8x32xf32> to vector<1x8x32xf32>
    %201 = vector.broadcast %200 : vector<1x8x32xf32> to vector<8x8x32xf32>
    %202 = arith.addf %199, %201 : vector<8x8x32xf32>
    %203 = vector.shape_cast %202 : vector<8x8x32xf32> to vector<64x32xf32>
    %204 = tpu.concatenate %192, %203 in 0 : vector<64x32xf32>, vector<64x32xf32> -> vector<128x32xf32>
    %205 = vector.broadcast %38 : vector<1x32xf32> to vector<128x32xf32>
    %206 = arith.addf %204, %205 : vector<128x32xf32>
    %207 = arith.negf %206 : vector<128x32xf32>
    %208 = math.exp %207 : vector<128x32xf32>
    %cst_34 = arith.constant 1.000000e+00 : f32
    %209 = vector.broadcast %cst_34 : f32 to vector<128x32xf32>
    %210 = arith.addf %209, %208 : vector<128x32xf32>
    %211 = arith.divf %209, %210 : vector<128x32xf32>
    %212 = arith.mulf %206, %211 : vector<128x32xf32>
    %cst_35 = arith.constant dense<0.000000e+00> : vector<128x64xf32>
    %213 = tpu.matmul %212, %30, %cst_35 {dimension_numbers = #tpu.dot_dimension_numbers<[1], [0], [0], [1], [0, 0, 1, 1], [], []>} : vector<128x32xf32>, vector<32x64xf32>, vector<128x64xf32> -> vector<128x64xf32>
    %214 = vector.extract_strided_slice %213 {offsets = [0, 0], sizes = [128, 4], strides = [1, 1]} : vector<128x64xf32> to vector<128x4xf32>
    %215 = vector.broadcast %39 : vector<1x4xf32> to vector<128x4xf32>
    %216 = arith.addf %214, %215 : vector<128x4xf32>
    %217 = arith.negf %216 : vector<128x4xf32>
    %218 = math.exp %217 : vector<128x4xf32>
    %cst_36 = arith.constant 1.000000e+00 : f32
    %219 = vector.broadcast %cst_36 : f32 to vector<128x4xf32>
    %220 = arith.addf %219, %218 : vector<128x4xf32>
    %221 = arith.divf %219, %220 : vector<128x4xf32>
    %222 = arith.mulf %216, %221 : vector<128x4xf32>
    %cst_37 = arith.constant 1.000000e+00 : f32
    %223 = vector.broadcast %cst_37 : f32 to vector<128x4xf32>
    %224 = arith.mulf %222, %223 : vector<128x4xf32>
    %cst_38 = arith.constant dense<0xFF800000> : vector<128xf32>
    %225 = vector.multi_reduction <maximumf>, %224, %cst_38 [1] : vector<128x4xf32> to vector<128xf32>
    %226 = vector.shape_cast %225 : vector<128xf32> to vector<128x1xf32>
    %227 = vector.broadcast %226 : vector<128x1xf32> to vector<128x4xf32>
    %228 = arith.subf %224, %227 : vector<128x4xf32>
    %229 = math.exp %228 : vector<128x4xf32>
    %cst_39 = arith.constant dense<0.000000e+00> : vector<128xf32>
    %230 = vector.multi_reduction <add>, %229, %cst_39 [1] : vector<128x4xf32> to vector<128xf32>
    %231 = vector.shape_cast %230 : vector<128xf32> to vector<128x1xf32>
    %232 = vector.broadcast %231 : vector<128x1xf32> to vector<128x4xf32>
    %233 = arith.divf %229, %232 : vector<128x4xf32>
    %c0_40 = arith.constant 0 : index
    %c0_41 = arith.constant 0 : index
    %234 = vector.load %arg12[%c0_40, %c0_41] : memref<128x4xf32, #tpu.memory_space<vmem>>, vector<128x4xf32>
    tpu.vector_store %arg12[%c0_40, %c0_41], %233 {strides = array<i32>} : memref<128x4xf32, #tpu.memory_space<vmem>>, vector<128x4xf32>,
    %235 = vector.extract_strided_slice %16 {offsets = [0, 0], sizes = [48, 16], strides = [1, 1]} : vector<48x32xf32> to vector<48x16xf32>
    %236 = vector.broadcast %5 : vector<48x1xf32> to vector<48x16xf32>
    %237 = arith.mulf %235, %236 : vector<48x16xf32>
    %cst_42 = arith.constant dense<0.000000e+00> : vector<48xf32>
    %238 = vector.multi_reduction <add>, %237, %cst_42 [1] : vector<48x16xf32> to vector<48xf32>
    %239 = vector.shape_cast %238 : vector<48xf32> to vector<48x1xf32>
    %c0_43 = arith.constant 0 : index
    %c0_44 = arith.constant 0 : index
    %240 = vector.load %arg9[%c0_43, %c0_44] : memref<48x48xf32, #tpu.memory_space<vmem>>, vector<48x48xf32>
    %cst_45 = arith.constant dense<0.000000e+00> : vector<48x1xf32>
    %241 = tpu.matmul %240, %239, %cst_45 {dimension_numbers = #tpu.dot_dimension_numbers<[1], [0], [0], [1], [0, 0, 1, 1], [], []>} : vector<48x48xf32>, vector<48x1xf32>, vector<48x1xf32> -> vector<48x1xf32>
    %c0_46 = arith.constant 0 : index
    %c0_47 = arith.constant 0 : index
    %242 = vector.load %arg8[%c0_46, %c0_47] : memref<24x200xf32, #tpu.memory_space<vmem>>, vector<24x200xf32>
    %243 = vector.extract_strided_slice %242 {offsets = [0, 0], sizes = [16, 200], strides = [1, 1]} : vector<24x200xf32> to vector<16x200xf32>
    %cst_48 = arith.constant dense<0.000000e+00> : vector<48x200xf32>
    %244 = tpu.matmul %235, %243, %cst_48 {dimension_numbers = #tpu.dot_dimension_numbers<[1], [0], [0], [1], [0, 0, 1, 1], [], []>} : vector<48x16xf32>, vector<16x200xf32>, vector<48x200xf32> -> vector<48x200xf32>
    %245 = vector.extract_strided_slice %242 {offsets = [16, 0], sizes = [1, 200], strides = [1, 1]} : vector<24x200xf32> to vector<1x200xf32>
    %246 = vector.broadcast %241 : vector<48x1xf32> to vector<48x200xf32>
    %247 = vector.broadcast %245 : vector<1x200xf32> to vector<48x200xf32>
    %248 = arith.mulf %246, %247 : vector<48x200xf32>
    %249 = arith.addf %244, %248 : vector<48x200xf32>
    %250 = vector.broadcast %6 : vector<48x1xf32> to vector<48x200xf32>
    %251 = arith.addf %249, %250 : vector<48x200xf32>
    %c0_49 = arith.constant 0 : index
    %c0_50 = arith.constant 0 : index
    %252 = vector.load %arg11[%c0_49, %c0_50] : memref<48x200xf32, #tpu.memory_space<vmem>>, vector<48x200xf32>
    tpu.vector_store %arg11[%c0_49, %c0_50], %251 {strides = array<i32>} : memref<48x200xf32, #tpu.memory_space<vmem>>, vector<48x200xf32>,
    return
  }
  func.func @transform_0(%arg0: i32) -> (i32, i32) {
    %c0_i32 = arith.constant 0 : i32
    %c0_i32_0 = arith.constant 0 : i32
    %c0_i32_1 = arith.constant 0 : i32
    return %c0_i32, %c0_i32_0 : i32, i32
  }
  func.func @transform_1(%arg0: i32) -> (i32, i32) {
    %c0_i32 = arith.constant 0 : i32
    %c0_i32_0 = arith.constant 0 : i32
    %c0_i32_1 = arith.constant 0 : i32
    return %c0_i32, %c0_i32_0 : i32, i32
  }
  func.func @transform_2(%arg0: i32) -> (i32, i32) {
    %c0_i32 = arith.constant 0 : i32
    %c0_i32_0 = arith.constant 0 : i32
    %c0_i32_1 = arith.constant 0 : i32
    return %c0_i32, %c0_i32_0 : i32, i32
  }
  func.func @transform_3(%arg0: i32) -> (i32, i32) {
    %c0_i32 = arith.constant 0 : i32
    %c0_i32_0 = arith.constant 0 : i32
    %c0_i32_1 = arith.constant 0 : i32
    return %c0_i32, %c0_i32_0 : i32, i32
  }
  func.func @transform_4(%arg0: i32) -> (i32, i32) {
    %c0_i32 = arith.constant 0 : i32
    %c0_i32_0 = arith.constant 0 : i32
    %c0_i32_1 = arith.constant 0 : i32
    return %c0_i32, %c0_i32_0 : i32, i32
  }
  func.func @transform_5(%arg0: i32) -> (i32, i32) {
    %c0_i32 = arith.constant 0 : i32
    %c0_i32_0 = arith.constant 0 : i32
    %c0_i32_1 = arith.constant 0 : i32
    return %c0_i32, %c0_i32_0 : i32, i32
  }
  func.func @transform_6(%arg0: i32) -> (i32, i32) {
    %c0_i32 = arith.constant 0 : i32
    %c0_i32_0 = arith.constant 0 : i32
    %c0_i32_1 = arith.constant 0 : i32
    return %c0_i32, %c0_i32_0 : i32, i32
  }
  func.func @transform_7(%arg0: i32) -> (i32, i32) {
    %c0_i32 = arith.constant 0 : i32
    %c0_i32_0 = arith.constant 0 : i32
    %c0_i32_1 = arith.constant 0 : i32
    return %c0_i32, %c0_i32_0 : i32, i32
  }
  func.func @transform_8(%arg0: i32) -> (i32, i32) {
    %c0_i32 = arith.constant 0 : i32
    %c0_i32_0 = arith.constant 0 : i32
    %c0_i32_1 = arith.constant 0 : i32
    return %c0_i32, %c0_i32_0 : i32, i32
  }
  func.func @transform_9(%arg0: i32) -> (i32, i32) {
    %c0_i32 = arith.constant 0 : i32
    %c0_i32_0 = arith.constant 0 : i32
    %c0_i32_1 = arith.constant 0 : i32
    return %c0_i32, %c0_i32_0 : i32, i32
  }
  func.func @transform_10(%arg0: i32) -> (i32, i32) {
    %c0_i32 = arith.constant 0 : i32
    %c0_i32_0 = arith.constant 0 : i32
    %c0_i32_1 = arith.constant 0 : i32
    return %c0_i32, %c0_i32_0 : i32, i32
  }
  func.func @transform_11(%arg0: i32) -> (i32, i32) {
    %c0_i32 = arith.constant 0 : i32
    %c0_i32_0 = arith.constant 0 : i32
    %c0_i32_1 = arith.constant 0 : i32
    return %c0_i32, %c0_i32_0 : i32, i32
  }
}

</mosaic_0001>

<llo_original>
// kernel: eqmotion_forward.1
$region0: #{eqmotion_forward.1}
  #allocation0 [shape = 'u32[]', space=smem, size = 0x4, offset = 0x4, fixed_abs, tag = 'smem constant byte address 0x4 - core index']
  #allocation1 [shape = 'u32[144,128]{1,0:T(1,128)}', space=vmem, size = 0x12000, scoped, tag = 'internal scratch']
  %s0 = inlined_call_operand.vmem [shape: f32[48,16], index: 0, kind: input, shape index: {}]
  %s1 = inlined_call_operand.vmem [shape: f32[16,16], index: 1, kind: input, shape index: {}]
  %s2 = inlined_call_operand.vmem [shape: f32[48,3], index: 2, kind: input, shape index: {}]
  %s3 = inlined_call_operand.vmem [shape: f32[128,1], index: 3, kind: input, shape index: {}]
  %s4 = inlined_call_operand.vmem [shape: f32[40,32], index: 4, kind: input, shape index: {}]
  %s5 = inlined_call_operand.vmem [shape: f32[224,64], index: 5, kind: input, shape index: {}]
  %s6 = inlined_call_operand.vmem [shape: f32[8,32], index: 6, kind: input, shape index: {}]
  %s7 = inlined_call_operand.vmem [shape: f32[24,200], index: 7, kind: input, shape index: {}]
  %s8 = inlined_call_operand.vmem [shape: f32[48,48], index: 8, kind: input, shape index: {}]
  %s9 = inlined_call_operand.vmem [shape: f32[16,128], index: 9, kind: input, shape index: {}]
  %s10 = inlined_call_operand.vmem [shape: f32[48,200], index: 10, kind: output, shape index: {0}]
  %s11 = inlined_call_operand.vmem [shape: f32[128,4], index: 11, kind: output, shape index: {1}]
  %12 = xla_tuple %s10, %s11
  %s13 = sld [smem:[#allocation0]]
  $region58: #{eqmotion_forward.1} parent=0
    _
  %s15 = ssub.s32 1, %s13
  %s16 = scalar_select 0, %s15, %s13
  // Predicated region
  $region2: #{eqmotion_forward.1} parent=0 // pred_check
    _
  $region3: #{eqmotion_forward.1} parent=0 // pred_check_branch
    %18 = sbr.rel (0) target = $region5
  $region4: #{eqmotion_forward.1} parent=0 // pred_region
    _
  $region5: #{eqmotion_forward.1} parent=0 // pred_fallthru
    _
  // Predicated region
  $region6: #{eqmotion_forward.1} parent=0 // pred_check
    _
  $region7: #{eqmotion_forward.1} parent=0 // pred_check_branch
    %20 = sbr.rel (0) target = $region9
  $region8: #{eqmotion_forward.1} parent=0 // pred_region
    _
  $region9: #{eqmotion_forward.1} parent=0 // pred_fallthru
    _
  // Predicated region
  $region10: #{eqmotion_forward.1} parent=0 // pred_check
    _
  $region11: #{eqmotion_forward.1} parent=0 // pred_check_branch
    %22 = sbr.rel (0) target = $region13
  $region12: #{eqmotion_forward.1} parent=0 // pred_region
    _
  $region13: #{eqmotion_forward.1} parent=0 // pred_fallthru
    _
  // Predicated region
  $region14: #{eqmotion_forward.1} parent=0 // pred_check
    _
  $region15: #{eqmotion_forward.1} parent=0 // pred_check_branch
    %24 = sbr.rel (0) target = $region17
  $region16: #{eqmotion_forward.1} parent=0 // pred_region
    _
  $region17: #{eqmotion_forward.1} parent=0 // pred_fallthru
    _
  // Predicated region
  $region18: #{eqmotion_forward.1} parent=0 // pred_check
    _
  $region19: #{eqmotion_forward.1} parent=0 // pred_check_branch
    %26 = sbr.rel (0) target = $region21
  $region20: #{eqmotion_forward.1} parent=0 // pred_region
    _
  $region21: #{eqmotion_forward.1} parent=0 // pred_fallthru
    _
  // Predicated region
  $region22: #{eqmotion_forward.1} parent=0 // pred_check
    _
  $region23: #{eqmotion_forward.1} parent=0 // pred_check_branch
    %28 = sbr.rel (0) target = $region25
  $region24: #{eqmotion_forward.1} parent=0 // pred_region
    _
  $region25: #{eqmotion_forward.1} parent=0 // pred_fallthru
    _
  // Predicated region
  $region26: #{eqmotion_forward.1} parent=0 // pred_check
    _
  $region27: #{eqmotion_forward.1} parent=0 // pred_check_branch
    %30 = sbr.rel (0) target = $region29
  $region28: #{eqmotion_forward.1} parent=0 // pred_region
    _
  $region29: #{eqmotion_forward.1} parent=0 // pred_fallthru
    _
  // Predicated region
  $region30: #{eqmotion_forward.1} parent=0 // pred_check
    _
  $region31: #{eqmotion_forward.1} parent=0 // pred_check_branch
    %32 = sbr.rel (0) target = $region33
  $region32: #{eqmotion_forward.1} parent=0 // pred_region
    _
  $region33: #{eqmotion_forward.1} parent=0 // pred_fallthru
    _
  // Predicated region
  $region34: #{eqmotion_forward.1} parent=0 // pred_check
    _
  $region35: #{eqmotion_forward.1} parent=0 // pred_check_branch
    %34 = sbr.rel (0) target = $region37
  $region36: #{eqmotion_forward.1} parent=0 // pred_region
    _
  $region37: #{eqmotion_forward.1} parent=0 // pred_fallthru
    _
  // Predicated region
  $region38: #{eqmotion_forward.1} parent=0 // pred_check
    _
  $region39: #{eqmotion_forward.1} parent=0 // pred_check_branch
    %36 = sbr.rel (0) target = $region41
  $region40: #{eqmotion_forward.1} parent=0 // pred_region
    _
  $region41: #{eqmotion_forward.1} parent=0 // pred_fallthru
    _
  %v37 = vld [vmem:[%s0] sm:$0xff]
  %v38 = vld [vmem:[%s0 + $0x8] sm:$0xff]
  %v39 = vld [vmem:[%s0 + $0x10] sm:$0xff]
  %v40 = vld [vmem:[%s0 + $0x18] sm:$0xff]
  %v41 = vld [vmem:[%s0 + $0x20] sm:$0xff]
  %v42 = vld [vmem:[%s0 + $0x28] sm:$0xff]
  %v43 = vld [vmem:[%s1] sm:$0xff]
  %v44 = vld [vmem:[%s1 + $0x8] sm:$0xff]
  %v45 = vld [vmem:[%s2] sm:$0xff]
  %v46 = vld [vmem:[%s2 + $0x8] sm:$0xff]
  %v47 = vld [vmem:[%s2 + $0x10] sm:$0xff]
  %v48 = vld [vmem:[%s2 + $0x18] sm:$0xff]
  %v49 = vld [vmem:[%s2 + $0x20] sm:$0xff]
  %v50 = vld [vmem:[%s2 + $0x28] sm:$0xff]
  %v51 = vld [vmem:[%s3] sm:$0xff]
  %v52 = vld [vmem:[%s3 + $0x8] sm:$0xff]
  %v53 = vld [vmem:[%s3 + $0x10] sm:$0xff]
  %v54 = vld [vmem:[%s3 + $0x18] sm:$0xff]
  %v55 = vld [vmem:[%s3 + $0x20] sm:$0xff]
  %v56 = vld [vmem:[%s3 + $0x28] sm:$0xff]
  %v57 = vld [vmem:[%s3 + $0x30] sm:$0xff]
  %v58 = vld [vmem:[%s3 + $0x38] sm:$0xff]
  %v59 = vld [vmem:[%s3 + $0x40] sm:$0xff]
  %v60 = vld [vmem:[%s3 + $0x48] sm:$0xff]
  %v61 = vld [vmem:[%s3 + $0x50] sm:$0xff]
  %v62 = vld [vmem:[%s3 + $0x58] sm:$0xff]
  %v63 = vld [vmem:[%s3 + $0x60] sm:$0xff]
  %v64 = vld [vmem:[%s3 + $0x68] sm:$0xff]
  %v65 = vld [vmem:[%s3 + $0x70] sm:$0xff]
  %v66 = vld [vmem:[%s3 + $0x78] sm:$0xff]
  %v67 = vld [vmem:[%s4] sm:$0xff]
  %v68 = vld [vmem:[%s4 + $0x8] sm:$0xff]
  %v69 = vld [vmem:[%s4 + $0x10] sm:$0xff]
  %v70 = vld [vmem:[%s4 + $0x18] sm:$0xff]
  %v71 = vld [vmem:[%s4 + $0x20] sm:$0xff]
  %73 = vset.pattern.permute.xlu0 0
  %74 = vperm.xlu0 %73, %v45
  %v75 = vpop.permute.xlu0 %74
  %78 = vset.pattern.permute.xlu0 0
  %79 = vperm.xlu0 %78, %v46
  %v80 = vpop.permute.xlu0 %79
  %83 = vset.pattern.permute.xlu0 0
  %84 = vperm.xlu0 %83, %v47
  %v85 = vpop.permute.xlu0 %84
  %88 = vset.pattern.permute.xlu0 0
  %89 = vperm.xlu0 %88, %v48
  %v90 = vpop.permute.xlu0 %89
  %93 = vset.pattern.permute.xlu0 0
  %94 = vperm.xlu0 %93, %v49
  %v95 = vpop.permute.xlu0 %94
  %98 = vset.pattern.permute.xlu0 0
  %99 = vperm.xlu0 %98, %v50
  %v100 = vpop.permute.xlu0 %99
  %v102 = vlaneseq
  %v103 = vshrl.u32 %v102, 7
  %v104 = vsub.s32 1, %v103
  %v105 = vrot.slane %v71, %v104
  %v106 = vmul.f32 %v75, %v105
  %v107 = vmul.f32 %v80, %v105
  %v108 = vmul.f32 %v85, %v105
  %v109 = vmul.f32 %v90, %v105
  %v110 = vmul.f32 %v95, %v105
  %v111 = vmul.f32 %v100, %v105
  %vm112 = vcmask 130048
  %v114 = vsel %vm112, %v37, 0
  %v117 = vsel %vm112, %v38, 0
  %v120 = vsel %vm112, %v39, 0
  %v123 = vsel %vm112, %v40, 0
  %v126 = vsel %vm112, %v41, 0
  %v129 = vsel %vm112, %v42, 0
  %131 = vmatprep.subr.mxu0 0.0
  %132 = vmatpush1.msra.mxu0 0.0
  %133 = vmatprep.subr.mxu0 0.0
  %134 = vmatpush1.msra.mxu0 0.0
  %135 = vmatprep.subr.mxu0 0.0
  %136 = vmatpush1.msra.mxu0 0.0
  %137 = vmatprep.subr.mxu0 0.0
  %138 = vmatpush1.msra.mxu0 0.0
  %139 = vmatprep.subr.mxu0 0.0
  %140 = vmatpush1.msra.mxu0 0.0
  %141 = vmatprep.subr.mxu0 0.0
  %142 = vmatpush1.msra.mxu0 0.0
  %143 = vmatprep.subr.mxu0 0.0
  %144 = vmatpush1.msra.mxu0 0.0
  %145 = vmatprep.subr.mxu0 0.0
  %146 = vmatpush1.msra.mxu0 0.0
  %147 = vmatprep.subr.mxu0 0.0
  %148 = vmatpush1.msra.mxu0 0.0
  %149 = vmatprep.subr.mxu0 0.0
  %150 = vmatpush1.msra.mxu0 0.0
  %151 = vmatprep.subr.mxu0 0.0
  %152 = vmatpush1.msra.mxu0 0.0
  %153 = vmatprep.subr.mxu0 0.0
  %154 = vmatpush1.msra.mxu0 0.0
  %155 = vmatprep.subr.mxu0 0.0
  %156 = vmatpush1.msra.mxu0 0.0
  %157 = vmatprep.subr.mxu0 0.0
  %158 = vmatpush1.msra.mxu0 0.0
  %159 = vmatprep.subr.mxu0 0.0
  %160 = vmatpush1.msra.mxu0 %v68
  %161 = vmatprep.subr.mxu0 0.0
  %162 = vmatpush1.msra.mxu0 %v67
  %163 = vmatprep.subr.mxu0 0.0
  %164 = vmatpush2.msra.mxu0 0.0
  %165 = vmatprep.subr.mxu0 0.0
  %166 = vmatpush2.msra.mxu0 0.0
  %167 = vmatprep.subr.mxu0 0.0
  %168 = vmatpush2.msra.mxu0 0.0
  %169 = vmatprep.subr.mxu0 0.0
  %170 = vmatpush2.msra.mxu0 0.0
  %171 = vmatprep.subr.mxu0 0.0
  %172 = vmatpush2.msra.mxu0 0.0
  %173 = vmatprep.subr.mxu0 0.0
  %174 = vmatpush2.msra.mxu0 0.0
  %175 = vmatprep.subr.mxu0 0.0
  %176 = vmatpush2.msra.mxu0 0.0
  %177 = vmatprep.subr.mxu0 0.0
  %178 = vmatpush2.msra.mxu0 0.0
  %179 = vmatprep.subr.mxu0 0.0
  %180 = vmatpush2.msra.mxu0 0.0
  %181 = vmatprep.subr.mxu0 0.0
  %182 = vmatpush2.msra.mxu0 0.0
  %183 = vmatprep.subr.mxu0 0.0
  %184 = vmatpush2.msra.mxu0 0.0
  %185 = vmatprep.subr.mxu0 0.0
  %186 = vmatpush2.msra.mxu0 0.0
  %187 = vmatprep.subr.mxu0 0.0
  %188 = vmatpush2.msra.mxu0 0.0
  %189 = vmatprep.subr.mxu0 0.0
  %190 = vmatpush2.msra.mxu0 0.0
  %191 = vmatprep.subr.mxu0 0.0
  %192 = vmatpush2.msra.mxu0 0.0
  %193 = vmatprep.subr.mxu0 0.0
  %194 = vmatpush2.msra.mxu0 0.0
  %195 = vmatprep.mubr.f32.mxu0 0.0
  %196 = vmatmul.mubr.f32.gmra.mxu0 %v114
  %v197 = vpop.f32.mrf.mxu0
  %v198 = vadd.f32 %v106, %v197
  %v199 = vpop.f32.mrf.mxu0
  %200 = vmatprep.mubr.f32.mxu0 0.0
  %201 = vmatmul.mubr.f32.gmra.mxu0 %v117
  %v202 = vpop.f32.mrf.mxu0
  %v203 = vadd.f32 %v107, %v202
  %v204 = vpop.f32.mrf.mxu0
  %205 = vmatprep.mubr.f32.mxu0 0.0
  %206 = vmatmul.mubr.f32.gmra.mxu0 %v120
  %v207 = vpop.f32.mrf.mxu0
  %v208 = vadd.f32 %v108, %v207
  %v209 = vpop.f32.mrf.mxu0
  %210 = vmatprep.mubr.f32.mxu0 0.0
  %211 = vmatmul.mubr.f32.gmra.mxu0 %v123
  %v212 = vpop.f32.mrf.mxu0
  %v213 = vadd.f32 %v109, %v212
  %v214 = vpop.f32.mrf.mxu0
  %215 = vmatprep.mubr.f32.mxu0 0.0
  %216 = vmatmul.mubr.f32.gmra.mxu0 %v126
  %v217 = vpop.f32.mrf.mxu0
  %v218 = vadd.f32 %v110, %v217
  %v219 = vpop.f32.mrf.mxu0
  %220 = vmatprep.mubr.f32.mxu0 0.0
  %221 = vmatmul.mubr.f32.gmra.mxu0 %v129
  %v222 = vpop.f32.mrf.mxu0
  %v223 = vadd.f32 %v111, %v222
  %v224 = vpop.f32.mrf.mxu0
  %225 = vdwg.mxu0
  %v226 = vlaneseq
  %v227 = vshrl.u32 %v226, 7
  %v228 = vsub.s32 0, %v227
  %v229 = vrot.slane %v71, %v228
  %v231 = vsel %vm112, %v43, 0
  %v234 = vsel %vm112, %v44, 0
  %236 = vmatprep.subr.mxu0 0.0
  %237 = vmatpush1.msra.mxu0 0.0
  %238 = vmatprep.subr.mxu0 0.0
  %239 = vmatpush1.msra.mxu0 0.0
  %240 = vmatprep.subr.mxu0 0.0
  %241 = vmatpush1.msra.mxu0 0.0
  %242 = vmatprep.subr.mxu0 0.0
  %243 = vmatpush1.msra.mxu0 0.0
  %244 = vmatprep.subr.mxu0 0.0
  %245 = vmatpush1.msra.mxu0 0.0
  %246 = vmatprep.subr.mxu0 0.0
  %247 = vmatpush1.msra.mxu0 0.0
  %248 = vmatprep.subr.mxu0 0.0
  %249 = vmatpush1.msra.mxu0 0.0
  %250 = vmatprep.subr.mxu0 0.0
  %251 = vmatpush1.msra.mxu0 0.0
  %252 = vmatprep.subr.mxu0 0.0
  %253 = vmatpush1.msra.mxu0 0.0
  %254 = vmatprep.subr.mxu0 0.0
  %255 = vmatpush1.msra.mxu0 0.0
  %256 = vmatprep.subr.mxu0 0.0
  %257 = vmatpush1.msra.mxu0 0.0
  %258 = vmatprep.subr.mxu0 0.0
  %259 = vmatpush1.msra.mxu0 0.0
  %260 = vmatprep.subr.mxu0 0.0
  %261 = vmatpush1.msra.mxu0 0.0
  %262 = vmatprep.subr.mxu0 0.0
  %263 = vmatpush1.msra.mxu0 0.0
  %264 = vmatprep.subr.mxu0 0.0
  %265 = vmatpush1.msra.mxu0 %v70
  %266 = vmatprep.subr.mxu0 0.0
  %267 = vmatpush1.msra.mxu0 %v69
  %268 = vmatprep.subr.mxu0 0.0
  %269 = vmatpush2.msra.mxu0 0.0
  %270 = vmatprep.subr.mxu0 0.0
  %271 = vmatpush2.msra.mxu0 0.0
  %272 = vmatprep.subr.mxu0 0.0
  %273 = vmatpush2.msra.mxu0 0.0
  %274 = vmatprep.subr.mxu0 0.0
  %275 = vmatpush2.msra.mxu0 0.0
  %276 = vmatprep.subr.mxu0 0.0
  %277 = vmatpush2.msra.mxu0 0.0
  %278 = vmatprep.subr.mxu0 0.0
  %279 = vmatpush2.msra.mxu0 0.0
  %280 = vmatprep.subr.mxu0 0.0
  %281 = vmatpush2.msra.mxu0 0.0
  %282 = vmatprep.subr.mxu0 0.0
  %283 = vmatpush2.msra.mxu0 0.0
  %284 = vmatprep.subr.mxu0 0.0
  %285 = vmatpush2.msra.mxu0 0.0
  %286 = vmatprep.subr.mxu0 0.0
  %287 = vmatpush2.msra.mxu0 0.0
  %288 = vmatprep.subr.mxu0 0.0
  %289 = vmatpush2.msra.mxu0 0.0
  %290 = vmatprep.subr.mxu0 0.0
  %291 = vmatpush2.msra.mxu0 0.0
  %292 = vmatprep.subr.mxu0 0.0
  %293 = vmatpush2.msra.mxu0 0.0
  %294 = vmatprep.subr.mxu0 0.0
  %295 = vmatpush2.msra.mxu0 0.0
  %296 = vmatprep.subr.mxu0 0.0
  %297 = vmatpush2.msra.mxu0 0.0
  %298 = vmatprep.subr.mxu0 0.0
  %299 = vmatpush2.msra.mxu0 0.0
  %300 = vmatprep.mubr.f32.mxu0 0.0
  %301 = vmatmul.mubr.f32.gmra.mxu0 %v231
  %v302 = vpop.f32.mrf.mxu0
  %v303 = vadd.f32 %v229, %v302
  %v304 = vpop.f32.mrf.mxu0
  %305 = vmatprep.mubr.f32.mxu0 0.0
  %306 = vmatmul.mubr.f32.gmra.mxu0 %v234
  %v307 = vpop.f32.mrf.mxu0
  %v308 = vadd.f32 %v229, %v307
  %v309 = vpop.f32.mrf.mxu0
  %310 = vdwg.mxu0
  %v311 = vld [vmem:[%s5] sm:$0xff]
  %v312 = vld [vmem:[%s5 + $0x8] sm:$0xff]
  %v313 = vld [vmem:[%s5 + $0x10] sm:$0xff]
  %v314 = vld [vmem:[%s5 + $0x18] sm:$0xff]
  %v315 = vld [vmem:[%s5 + $0x20] sm:$0xff]
  %v316 = vld [vmem:[%s5 + $0x28] sm:$0xff]
  %v317 = vld [vmem:[%s5 + $0x30] sm:$0xff]
  %v318 = vld [vmem:[%s5 + $0x38] sm:$0xff]
  %v319 = vld [vmem:[%s5 + $0x40] sm:$0xff]
  %v320 = vld [vmem:[%s5 + $0x48] sm:$0xff]
  %v321 = vld [vmem:[%s5 + $0x50] sm:$0xff]
  %v322 = vld [vmem:[%s5 + $0x58] sm:$0xff]
  %v323 = vld [vmem:[%s5 + $0x60] sm:$0xff]
  %v324 = vld [vmem:[%s5 + $0x68] sm:$0xff]
  %v325 = vld [vmem:[%s5 + $0x70] sm:$0xff]
  %v326 = vld [vmem:[%s5 + $0x78] sm:$0xff]
  %v327 = vld [vmem:[%s5 + $0x80] sm:$0xff]
  %v328 = vld [vmem:[%s5 + $0x88] sm:$0xff]
  %v329 = vld [vmem:[%s5 + $0x90] sm:$0xff]
  %v330 = vld [vmem:[%s5 + $0x98] sm:$0xff]
  %v331 = vld [vmem:[%s5 + $0xa0] sm:$0xff]
  %v332 = vld [vmem:[%s5 + $0xa8] sm:$0xff]
  %v333 = vld [vmem:[%s5 + $0xb0] sm:$0xff]
  %v334 = vld [vmem:[%s5 + $0xb8] sm:$0xff]
  %v335 = vld [vmem:[%s5 + $0xc0] sm:$0xff]
  %v336 = vld [vmem:[%s5 + $0xc8] sm:$0xff]
  %v337 = vld [vmem:[%s5 + $0xd0] sm:$0xff]
  %v338 = vld [vmem:[%s5 + $0xd8] sm:$0xff]
  %v339 = vld [vmem:[%s6] sm:$0xff]
  %v341 = vcombine.high %v198, %v198
  %v343 = vunpack.c.l.s4 1966171168
  %v344 = vunpack.c.0.s8 %v343
  %v345 = vlaneseq
  %v346 = vshrl.u32 %v345, 7
  %v347 = vsub.s32 %v344, %v346
  %v348 = vrot.slane %v198, %v347
  %v350 = vunpack.c.l.s4 1966171168
  %v351 = vunpack.c.0.s8 %v350
  %v352 = vlaneseq
  %v353 = vshrl.u32 %v352, 7
  %v354 = vsub.s32 %v351, %v353
  %v355 = vrot.slane %v341, %v354
  %v356 = vcombine.high %v348, %v348
  %v357 = vcombine.high %v355, %v355
  %v359 = vunpack.c.l.s4 1966171168
  %v360 = vunpack.c.0.s8 %v359
  %v361 = vlaneseq
  %v362 = vshrl.u32 %v361, 7
  %v363 = vsub.s32 %v360, %v362
  %v364 = vrot.slane %v348, %v363
  %v366 = vunpack.c.l.s4 1966171168
  %v367 = vunpack.c.0.s8 %v366
  %v368 = vlaneseq
  %v369 = vshrl.u32 %v368, 7
  %v370 = vsub.s32 %v367, %v369
  %v371 = vrot.slane %v355, %v370
  %v373 = vunpack.c.l.s4 1966171168
  %v374 = vunpack.c.0.s8 %v373
  %v375 = vlaneseq
  %v376 = vshrl.u32 %v375, 7
  %v377 = vsub.s32 %v374, %v376
  %v378 = vrot.slane %v356, %v377
  %v380 = vunpack.c.l.s4 1966171168
  %v381 = vunpack.c.0.s8 %v380
  %v382 = vlaneseq
  %v383 = vshrl.u32 %v382, 7
  %v384 = vsub.s32 %v381, %v383
  %v385 = vrot.slane %v357, %v384
  %v386 = vcombine.high %v364, %v364
  %v387 = vcombine.high %v371, %v371
  %v388 = vcombine.high %v378, %v378
  %v389 = vcombine.high %v385, %v385
  %v390 = vlaneseq
  %v391 = vshrl.u32 %v390, 7
  %v392 = vsub.s32 0, %v391
  %v393 = vrot.slane %v364, %v392
  %v394 = vlaneseq
  %v395 = vshrl.u32 %v394, 7
  %v396 = vsub.s32 0, %v395
  %v397 = vrot.slane %v378, %v396
  %v398 = vlaneseq
  %v399 = vshrl.u32 %v398, 7
  %v400 = vsub.s32 0, %v399
  %v401 = vrot.slane %v386, %v400
  %v402 = vlaneseq
  %v403 = vshrl.u32 %v402, 7
  %v404 = vsub.s32 0, %v403
  %v405 = vrot.slane %v388, %v404
  %v406 = vlaneseq
  %v407 = vshrl.u32 %v406, 7
  %v408 = vsub.s32 0, %v407
  %v409 = vrot.slane %v371, %v408
  %v410 = vlaneseq
  %v411 = vshrl.u32 %v410, 7
  %v412 = vsub.s32 0, %v411
  %v413 = vrot.slane %v385, %v412
  %v414 = vlaneseq
  %v415 = vshrl.u32 %v414, 7
  %v416 = vsub.s32 0, %v415
  %v417 = vrot.slane %v387, %v416
  %v418 = vlaneseq
  %v419 = vshrl.u32 %v418, 7
  %v420 = vsub.s32 0, %v419
  %v421 = vrot.slane %v389, %v420
  %v430 = vsub.f32 %v393, %v198
  %v431 = vsub.f32 %v397, %v198
  %v432 = vsub.f32 %v401, %v198
  %v433 = vsub.f32 %v405, %v198
  %v434 = vsub.f32 %v409, %v198
  %v435 = vsub.f32 %v413, %v198
  %v436 = vsub.f32 %v417, %v198
  %v437 = vsub.f32 %v421, %v198
  %v438 = vmul.f32 %v430, %v430
  %v439 = vmul.f32 %v431, %v431
  %v440 = vmul.f32 %v432, %v432
  %v441 = vmul.f32 %v433, %v433
  %v442 = vmul.f32 %v434, %v434
  %v443 = vmul.f32 %v435, %v435
  %v444 = vmul.f32 %v436, %v436
  %v445 = vmul.f32 %v437, %v437
  %v446 = vadd.f32 %v438, 0.0
  %v447 = vadd.f32 %v439, 0.0
  %v448 = vadd.f32 %v440, 0.0
  %v449 = vadd.f32 %v441, 0.0
  %v450 = vadd.f32 %v442, 0.0
  %v451 = vadd.f32 %v443, 0.0
  %v452 = vadd.f32 %v444, 0.0
  %v453 = vadd.f32 %v445, 0.0
  %v455 = vcombine.high %v203, %v203
  %v457 = vunpack.c.l.s4 1966171168
  %v458 = vunpack.c.0.s8 %v457
  %v459 = vlaneseq
  %v460 = vshrl.u32 %v459, 7
  %v461 = vsub.s32 %v458, %v460
  %v462 = vrot.slane %v203, %v461
  %v464 = vunpack.c.l.s4 1966171168
  %v465 = vunpack.c.0.s8 %v464
  %v466 = vlaneseq
  %v467 = vshrl.u32 %v466, 7
  %v468 = vsub.s32 %v465, %v467
  %v469 = vrot.slane %v455, %v468
  %v470 = vcombine.high %v462, %v462
  %v471 = vcombine.high %v469, %v469
  %v473 = vunpack.c.l.s4 1966171168
  %v474 = vunpack.c.0.s8 %v473
  %v475 = vlaneseq
  %v476 = vshrl.u32 %v475, 7
  %v477 = vsub.s32 %v474, %v476
  %v478 = vrot.slane %v462, %v477
  %v480 = vunpack.c.l.s4 1966171168
  %v481 = vunpack.c.0.s8 %v480
  %v482 = vlaneseq
  %v483 = vshrl.u32 %v482, 7
  %v484 = vsub.s32 %v481, %v483
  %v485 = vrot.slane %v469, %v484
  %v487 = vunpack.c.l.s4 1966171168
  %v488 = vunpack.c.0.s8 %v487
  %v489 = vlaneseq
  %v490 = vshrl.u32 %v489, 7
  %v491 = vsub.s32 %v488, %v490
  %v492 = vrot.slane %v470, %v491
  %v494 = vunpack.c.l.s4 1966171168
  %v495 = vunpack.c.0.s8 %v494
  %v496 = vlaneseq
  %v497 = vshrl.u32 %v496, 7
  %v498 = vsub.s32 %v495, %v497
  %v499 = vrot.slane %v471, %v498
  %v500 = vcombine.high %v478, %v478
  %v501 = vcombine.high %v485, %v485
  %v502 = vcombine.high %v492, %v492
  %v503 = vcombine.high %v499, %v499
  %v504 = vlaneseq
  %v505 = vshrl.u32 %v504, 7
  %v506 = vsub.s32 0, %v505
  %v507 = vrot.slane %v478, %v506
  %v508 = vlaneseq
  %v509 = vshrl.u32 %v508, 7
  %v510 = vsub.s32 0, %v509
  %v511 = vrot.slane %v492, %v510
  %v512 = vlaneseq
  %v513 = vshrl.u32 %v512, 7
  %v514 = vsub.s32 0, %v513
  %v515 = vrot.slane %v500, %v514
  %v516 = vlaneseq
  %v517 = vshrl.u32 %v516, 7
  %v518 = vsub.s32 0, %v517
  %v519 = vrot.slane %v502, %v518
  %v520 = vlaneseq
  %v521 = vshrl.u32 %v520, 7
  %v522 = vsub.s32 0, %v521
  %v523 = vrot.slane %v485, %v522
  %v524 = vlaneseq
  %v525 = vshrl.u32 %v524, 7
  %v526 = vsub.s32 0, %v525
  %v527 = vrot.slane %v499, %v526
  %v528 = vlaneseq
  %v529 = vshrl.u32 %v528, 7
  %v530 = vsub.s32 0, %v529
  %v531 = vrot.slane %v501, %v530
  %v532 = vlaneseq
  %v533 = vshrl.u32 %v532, 7
  %v534 = vsub.s32 0, %v533
  %v535 = vrot.slane %v503, %v534
  %v544 = vsub.f32 %v507, %v203
  %v545 = vsub.f32 %v511, %v203
  %v546 = vsub.f32 %v515, %v203
  %v547 = vsub.f32 %v519, %v203
  %v548 = vsub.f32 %v523, %v203
  %v549 = vsub.f32 %v527, %v203
  %v550 = vsub.f32 %v531, %v203
  %v551 = vsub.f32 %v535, %v203
  %v552 = vmul.f32 %v544, %v544
  %v553 = vmul.f32 %v545, %v545
  %v554 = vmul.f32 %v546, %v546
  %v555 = vmul.f32 %v547, %v547
  %v556 = vmul.f32 %v548, %v548
  %v557 = vmul.f32 %v549, %v549
  %v558 = vmul.f32 %v550, %v550
  %v559 = vmul.f32 %v551, %v551
  %v560 = vadd.f32 %v446, %v552
  %v561 = vadd.f32 %v447, %v553
  %v562 = vadd.f32 %v448, %v554
  %v563 = vadd.f32 %v449, %v555
  %v564 = vadd.f32 %v450, %v556
  %v565 = vadd.f32 %v451, %v557
  %v566 = vadd.f32 %v452, %v558
  %v567 = vadd.f32 %v453, %v559
  %v569 = vcombine.high %v208, %v208
  %v571 = vunpack.c.l.s4 1966171168
  %v572 = vunpack.c.0.s8 %v571
  %v573 = vlaneseq
  %v574 = vshrl.u32 %v573, 7
  %v575 = vsub.s32 %v572, %v574
  %v576 = vrot.slane %v208, %v575
  %v578 = vunpack.c.l.s4 1966171168
  %v579 = vunpack.c.0.s8 %v578
  %v580 = vlaneseq
  %v581 = vshrl.u32 %v580, 7
  %v582 = vsub.s32 %v579, %v581
  %v583 = vrot.slane %v569, %v582
  %v584 = vcombine.high %v576, %v576
  %v585 = vcombine.high %v583, %v583
  %v587 = vunpack.c.l.s4 1966171168
  %v588 = vunpack.c.0.s8 %v587
  %v589 = vlaneseq
  %v590 = vshrl.u32 %v589, 7
  %v591 = vsub.s32 %v588, %v590
  %v592 = vrot.slane %v576, %v591
  %v594 = vunpack.c.l.s4 1966171168
  %v595 = vunpack.c.0.s8 %v594
  %v596 = vlaneseq
  %v597 = vshrl.u32 %v596, 7
  %v598 = vsub.s32 %v595, %v597
  %v599 = vrot.slane %v583, %v598
  %v601 = vunpack.c.l.s4 1966171168
  %v602 = vunpack.c.0.s8 %v601
  %v603 = vlaneseq
  %v604 = vshrl.u32 %v603, 7
  %v605 = vsub.s32 %v602, %v604
  %v606 = vrot.slane %v584, %v605
  %v608 = vunpack.c.l.s4 1966171168
  %v609 = vunpack.c.0.s8 %v608
  %v610 = vlaneseq
  %v611 = vshrl.u32 %v610, 7
  %v612 = vsub.s32 %v609, %v611
  %v613 = vrot.slane %v585, %v612
  %v614 = vcombine.high %v592, %v592
  %v615 = vcombine.high %v599, %v599
  %v616 = vcombine.high %v606, %v606
  %v617 = vcombine.high %v613, %v613
  %v618 = vlaneseq
  %v619 = vshrl.u32 %v618, 7
  %v620 = vsub.s32 0, %v619
  %v621 = vrot.slane %v592, %v620
  %v622 = vlaneseq
  %v623 = vshrl.u32 %v622, 7
  %v624 = vsub.s32 0, %v623
  %v625 = vrot.slane %v606, %v624
  %v626 = vlaneseq
  %v627 = vshrl.u32 %v626, 7
  %v628 = vsub.s32 0, %v627
  %v629 = vrot.slane %v614, %v628
  %v630 = vlaneseq
  %v631 = vshrl.u32 %v630, 7
  %v632 = vsub.s32 0, %v631
  %v633 = vrot.slane %v616, %v632
  %v634 = vlaneseq
  %v635 = vshrl.u32 %v634, 7
  %v636 = vsub.s32 0, %v635
  %v637 = vrot.slane %v599, %v636
  %v638 = vlaneseq
  %v639 = vshrl.u32 %v638, 7
  %v640 = vsub.s32 0, %v639
  %v641 = vrot.slane %v613, %v640
  %v642 = vlaneseq
  %v643 = vshrl.u32 %v642, 7
  %v644 = vsub.s32 0, %v643
  %v645 = vrot.slane %v615, %v644
  %v646 = vlaneseq
  %v647 = vshrl.u32 %v646, 7
  %v648 = vsub.s32 0, %v647
  %v649 = vrot.slane %v617, %v648
  %v658 = vsub.f32 %v621, %v208
  %v659 = vsub.f32 %v625, %v208
  %v660 = vsub.f32 %v629, %v208
  %v661 = vsub.f32 %v633, %v208
  %v662 = vsub.f32 %v637, %v208
  %v663 = vsub.f32 %v641, %v208
  %v664 = vsub.f32 %v645, %v208
  %v665 = vsub.f32 %v649, %v208
  %v666 = vmul.f32 %v658, %v658
  %v667 = vmul.f32 %v659, %v659
  %v668 = vmul.f32 %v660, %v660
  %v669 = vmul.f32 %v661, %v661
  %v670 = vmul.f32 %v662, %v662
  %v671 = vmul.f32 %v663, %v663
  %v672 = vmul.f32 %v664, %v664
  %v673 = vmul.f32 %v665, %v665
  %v674 = vadd.f32 %v560, %v666
  %v675 = vadd.f32 %v561, %v667
  %v676 = vadd.f32 %v562, %v668
  %v677 = vadd.f32 %v563, %v669
  %v678 = vadd.f32 %v564, %v670
  %v679 = vadd.f32 %v565, %v671
  %v680 = vadd.f32 %v566, %v672
  %v681 = vadd.f32 %v567, %v673
  %v682 = vrsqrt.pop %v674
  %v683 = vmul.f32 %v674, %v682
  %vm684 = vcmp.eq.f32.partialorder %v674, inf
  %v685 = vsel %vm684, %v674, %v683
  %vm686 = vcmp.eq.f32.partialorder %v674, 0.0
  %v687 = vand.u32 %v674, 2147483648
  %v688 = vsel %vm686, %v687, %v685
  %v689 = vrsqrt.pop %v675
  %v690 = vmul.f32 %v675, %v689
  %vm691 = vcmp.eq.f32.partialorder %v675, inf
  %v692 = vsel %vm691, %v675, %v690
  %vm693 = vcmp.eq.f32.partialorder %v675, 0.0
  %v694 = vand.u32 %v675, 2147483648
  %v695 = vsel %vm693, %v694, %v692
  %v696 = vrsqrt.pop %v676
  %v697 = vmul.f32 %v676, %v696
  %vm698 = vcmp.eq.f32.partialorder %v676, inf
  %v699 = vsel %vm698, %v676, %v697
  %vm700 = vcmp.eq.f32.partialorder %v676, 0.0
  %v701 = vand.u32 %v676, 2147483648
  %v702 = vsel %vm700, %v701, %v699
  %v703 = vrsqrt.pop %v677
  %v704 = vmul.f32 %v677, %v703
  %vm705 = vcmp.eq.f32.partialorder %v677, inf
  %v706 = vsel %vm705, %v677, %v704
  %vm707 = vcmp.eq.f32.partialorder %v677, 0.0
  %v708 = vand.u32 %v677, 2147483648
  %v709 = vsel %vm707, %v708, %v706
  %v710 = vrsqrt.pop %v678
  %v711 = vmul.f32 %v678, %v710
  %vm712 = vcmp.eq.f32.partialorder %v678, inf
  %v713 = vsel %vm712, %v678, %v711
  %vm714 = vcmp.eq.f32.partialorder %v678, 0.0
  %v715 = vand.u32 %v678, 2147483648
  %v716 = vsel %vm714, %v715, %v713
  %v717 = vrsqrt.pop %v679
  %v718 = vmul.f32 %v679, %v717
  %vm719 = vcmp.eq.f32.partialorder %v679, inf
  %v720 = vsel %vm719, %v679, %v718
  %vm721 = vcmp.eq.f32.partialorder %v679, 0.0
  %v722 = vand.u32 %v679, 2147483648
  %v723 = vsel %vm721, %v722, %v720
  %v724 = vrsqrt.pop %v680
  %v725 = vmul.f32 %v680, %v724
  %vm726 = vcmp.eq.f32.partialorder %v680, inf
  %v727 = vsel %vm726, %v680, %v725
  %vm728 = vcmp.eq.f32.partialorder %v680, 0.0
  %v729 = vand.u32 %v680, 2147483648
  %v730 = vsel %vm728, %v729, %v727
  %v731 = vrsqrt.pop %v681
  %v732 = vmul.f32 %v681, %v731
  %vm733 = vcmp.eq.f32.partialorder %v681, inf
  %v734 = vsel %vm733, %v681, %v732
  %vm735 = vcmp.eq.f32.partialorder %v681, 0.0
  %v736 = vand.u32 %v681, 2147483648
  %v737 = vsel %vm735, %v736, %v734
  %v739 = vcombine.high %v213, %v213
  %v741 = vunpack.c.l.s4 1966171168
  %v742 = vunpack.c.0.s8 %v741
  %v743 = vlaneseq
  %v744 = vshrl.u32 %v743, 7
  %v745 = vsub.s32 %v742, %v744
  %v746 = vrot.slane %v213, %v745
  %v748 = vunpack.c.l.s4 1966171168
  %v749 = vunpack.c.0.s8 %v748
  %v750 = vlaneseq
  %v751 = vshrl.u32 %v750, 7
  %v752 = vsub.s32 %v749, %v751
  %v753 = vrot.slane %v739, %v752
  %v754 = vcombine.high %v746, %v746
  %v755 = vcombine.high %v753, %v753
  %v757 = vunpack.c.l.s4 1966171168
  %v758 = vunpack.c.0.s8 %v757
  %v759 = vlaneseq
  %v760 = vshrl.u32 %v759, 7
  %v761 = vsub.s32 %v758, %v760
  %v762 = vrot.slane %v746, %v761
  %v764 = vunpack.c.l.s4 1966171168
  %v765 = vunpack.c.0.s8 %v764
  %v766 = vlaneseq
  %v767 = vshrl.u32 %v766, 7
  %v768 = vsub.s32 %v765, %v767
  %v769 = vrot.slane %v753, %v768
  %v771 = vunpack.c.l.s4 1966171168
  %v772 = vunpack.c.0.s8 %v771
  %v773 = vlaneseq
  %v774 = vshrl.u32 %v773, 7
  %v775 = vsub.s32 %v772, %v774
  %v776 = vrot.slane %v754, %v775
  %v778 = vunpack.c.l.s4 1966171168
  %v779 = vunpack.c.0.s8 %v778
  %v780 = vlaneseq
  %v781 = vshrl.u32 %v780, 7
  %v782 = vsub.s32 %v779, %v781
  %v783 = vrot.slane %v755, %v782
  %v784 = vcombine.high %v762, %v762
  %v785 = vcombine.high %v769, %v769
  %v786 = vcombine.high %v776, %v776
  %v787 = vcombine.high %v783, %v783
  %v788 = vlaneseq
  %v789 = vshrl.u32 %v788, 7
  %v790 = vsub.s32 0, %v789
  %v791 = vrot.slane %v762, %v790
  %v792 = vlaneseq
  %v793 = vshrl.u32 %v792, 7
  %v794 = vsub.s32 0, %v793
  %v795 = vrot.slane %v776, %v794
  %v796 = vlaneseq
  %v797 = vshrl.u32 %v796, 7
  %v798 = vsub.s32 0, %v797
  %v799 = vrot.slane %v784, %v798
  %v800 = vlaneseq
  %v801 = vshrl.u32 %v800, 7
  %v802 = vsub.s32 0, %v801
  %v803 = vrot.slane %v786, %v802
  %v804 = vlaneseq
  %v805 = vshrl.u32 %v804, 7
  %v806 = vsub.s32 0, %v805
  %v807 = vrot.slane %v769, %v806
  %v808 = vlaneseq
  %v809 = vshrl.u32 %v808, 7
  %v810 = vsub.s32 0, %v809
  %v811 = vrot.slane %v783, %v810
  %v812 = vlaneseq
  %v813 = vshrl.u32 %v812, 7
  %v814 = vsub.s32 0, %v813
  %v815 = vrot.slane %v785, %v814
  %v816 = vlaneseq
  %v817 = vshrl.u32 %v816, 7
  %v818 = vsub.s32 0, %v817
  %v819 = vrot.slane %v787, %v818
  %v828 = vsub.f32 %v791, %v213
  %v829 = vsub.f32 %v795, %v213
  %v830 = vsub.f32 %v799, %v213
  %v831 = vsub.f32 %v803, %v213
  %v832 = vsub.f32 %v807, %v213
  %v833 = vsub.f32 %v811, %v213
  %v834 = vsub.f32 %v815, %v213
  %v835 = vsub.f32 %v819, %v213
  %v836 = vmul.f32 %v828, %v828
  %v837 = vmul.f32 %v829, %v829
  %v838 = vmul.f32 %v830, %v830
  %v839 = vmul.f32 %v831, %v831
  %v840 = vmul.f32 %v832, %v832
  %v841 = vmul.f32 %v833, %v833
  %v842 = vmul.f32 %v834, %v834
  %v843 = vmul.f32 %v835, %v835
  %v844 = vadd.f32 %v836, 0.0
  %v845 = vadd.f32 %v837, 0.0
  %v846 = vadd.f32 %v838, 0.0
  %v847 = vadd.f32 %v839, 0.0
  %v848 = vadd.f32 %v840, 0.0
  %v849 = vadd.f32 %v841, 0.0
  %v850 = vadd.f32 %v842, 0.0
  %v851 = vadd.f32 %v843, 0.0
  %v853 = vcombine.high %v218, %v218
  %v855 = vunpack.c.l.s4 1966171168
  %v856 = vunpack.c.0.s8 %v855
  %v857 = vlaneseq
  %v858 = vshrl.u32 %v857, 7
  %v859 = vsub.s32 %v856, %v858
  %v860 = vrot.slane %v218, %v859
  %v862 = vunpack.c.l.s4 1966171168
  %v863 = vunpack.c.0.s8 %v862
  %v864 = vlaneseq
  %v865 = vshrl.u32 %v864, 7
  %v866 = vsub.s32 %v863, %v865
  %v867 = vrot.slane %v853, %v866
  %v868 = vcombine.high %v860, %v860
  %v869 = vcombine.high %v867, %v867
  %v871 = vunpack.c.l.s4 1966171168
  %v872 = vunpack.c.0.s8 %v871
  %v873 = vlaneseq
  %v874 = vshrl.u32 %v873, 7
  %v875 = vsub.s32 %v872, %v874
  %v876 = vrot.slane %v860, %v875
  %v878 = vunpack.c.l.s4 1966171168
  %v879 = vunpack.c.0.s8 %v878
  %v880 = vlaneseq
  %v881 = vshrl.u32 %v880, 7
  %v882 = vsub.s32 %v879, %v881
  %v883 = vrot.slane %v867, %v882
  %v885 = vunpack.c.l.s4 1966171168
  %v886 = vunpack.c.0.s8 %v885
  %v887 = vlaneseq
  %v888 = vshrl.u32 %v887, 7
  %v889 = vsub.s32 %v886, %v888
  %v890 = vrot.slane %v868, %v889
  %v892 = vunpack.c.l.s4 1966171168
  %v893 = vunpack.c.0.s8 %v892
  %v894 = vlaneseq
  %v895 = vshrl.u32 %v894, 7
  %v896 = vsub.s32 %v893, %v895
  %v897 = vrot.slane %v869, %v896
  %v898 = vcombine.high %v876, %v876
  %v899 = vcombine.high %v883, %v883
  %v900 = vcombine.high %v890, %v890
  %v901 = vcombine.high %v897, %v897
  %v902 = vlaneseq
  %v903 = vshrl.u32 %v902, 7
  %v904 = vsub.s32 0, %v903
  %v905 = vrot.slane %v876, %v904
  %v906 = vlaneseq
  %v907 = vshrl.u32 %v906, 7
  %v908 = vsub.s32 0, %v907
  %v909 = vrot.slane %v890, %v908
  %v910 = vlaneseq
  %v911 = vshrl.u32 %v910, 7
  %v912 = vsub.s32 0, %v911
  %v913 = vrot.slane %v898, %v912
  %v914 = vlaneseq
  %v915 = vshrl.u32 %v914, 7
  %v916 = vsub.s32 0, %v915
  %v917 = vrot.slane %v900, %v916
  %v918 = vlaneseq
  %v919 = vshrl.u32 %v918, 7
  %v920 = vsub.s32 0, %v919
  %v921 = vrot.slane %v883, %v920
  %v922 = vlaneseq
  %v923 = vshrl.u32 %v922, 7
  %v924 = vsub.s32 0, %v923
  %v925 = vrot.slane %v897, %v924
  %v926 = vlaneseq
  %v927 = vshrl.u32 %v926, 7
  %v928 = vsub.s32 0, %v927
  %v929 = vrot.slane %v899, %v928
  %v930 = vlaneseq
  %v931 = vshrl.u32 %v930, 7
  %v932 = vsub.s32 0, %v931
  %v933 = vrot.slane %v901, %v932
  %v942 = vsub.f32 %v905, %v218
  %v943 = vsub.f32 %v909, %v218
  %v944 = vsub.f32 %v913, %v218
  %v945 = vsub.f32 %v917, %v218
  %v946 = vsub.f32 %v921, %v218
  %v947 = vsub.f32 %v925, %v218
  %v948 = vsub.f32 %v929, %v218
  %v949 = vsub.f32 %v933, %v218
  %v950 = vmul.f32 %v942, %v942
  %v951 = vmul.f32 %v943, %v943
  %v952 = vmul.f32 %v944, %v944
  %v953 = vmul.f32 %v945, %v945
  %v954 = vmul.f32 %v946, %v946
  %v955 = vmul.f32 %v947, %v947
  %v956 = vmul.f32 %v948, %v948
  %v957 = vmul.f32 %v949, %v949
  %v958 = vadd.f32 %v844, %v950
  %v959 = vadd.f32 %v845, %v951
  %v960 = vadd.f32 %v846, %v952
  %v961 = vadd.f32 %v847, %v953
  %v962 = vadd.f32 %v848, %v954
  %v963 = vadd.f32 %v849, %v955
  %v964 = vadd.f32 %v850, %v956
  %v965 = vadd.f32 %v851, %v957
  %v967 = vcombine.high %v223, %v223
  %v969 = vunpack.c.l.s4 1966171168
  %v970 = vunpack.c.0.s8 %v969
  %v971 = vlaneseq
  %v972 = vshrl.u32 %v971, 7
  %v973 = vsub.s32 %v970, %v972
  %v974 = vrot.slane %v223, %v973
  %v976 = vunpack.c.l.s4 1966171168
  %v977 = vunpack.c.0.s8 %v976
  %v978 = vlaneseq
  %v979 = vshrl.u32 %v978, 7
  %v980 = vsub.s32 %v977, %v979
  %v981 = vrot.slane %v967, %v980
  %v982 = vcombine.high %v974, %v974
  %v983 = vcombine.high %v981, %v981
  %v985 = vunpack.c.l.s4 1966171168
  %v986 = vunpack.c.0.s8 %v985
  %v987 = vlaneseq
  %v988 = vshrl.u32 %v987, 7
  %v989 = vsub.s32 %v986, %v988
  %v990 = vrot.slane %v974, %v989
  %v992 = vunpack.c.l.s4 1966171168
  %v993 = vunpack.c.0.s8 %v992
  %v994 = vlaneseq
  %v995 = vshrl.u32 %v994, 7
  %v996 = vsub.s32 %v993, %v995
  %v997 = vrot.slane %v981, %v996
  %v999 = vunpack.c.l.s4 1966171168
  %v1000 = vunpack.c.0.s8 %v999
  %v1001 = vlaneseq
  %v1002 = vshrl.u32 %v1001, 7
  %v1003 = vsub.s32 %v1000, %v1002
  %v1004 = vrot.slane %v982, %v1003
  %v1006 = vunpack.c.l.s4 1966171168
  %v1007 = vunpack.c.0.s8 %v1006
  %v1008 = vlaneseq
  %v1009 = vshrl.u32 %v1008, 7
  %v1010 = vsub.s32 %v1007, %v1009
  %v1011 = vrot.slane %v983, %v1010
  %v1012 = vcombine.high %v990, %v990
  %v1013 = vcombine.high %v997, %v997
  %v1014 = vcombine.high %v1004, %v1004
  %v1015 = vcombine.high %v1011, %v1011
  %v1016 = vlaneseq
  %v1017 = vshrl.u32 %v1016, 7
  %v1018 = vsub.s32 0, %v1017
  %v1019 = vrot.slane %v990, %v1018
  %v1020 = vlaneseq
  %v1021 = vshrl.u32 %v1020, 7
  %v1022 = vsub.s32 0, %v1021
  %v1023 = vrot.slane %v1004, %v1022
  %v1024 = vlaneseq
  %v1025 = vshrl.u32 %v1024, 7
  %v1026 = vsub.s32 0, %v1025
  %v1027 = vrot.slane %v1012, %v1026
  %v1028 = vlaneseq
  %v1029 = vshrl.u32 %v1028, 7
  %v1030 = vsub.s32 0, %v1029
  %v1031 = vrot.slane %v1014, %v1030
  %v1032 = vlaneseq
  %v1033 = vshrl.u32 %v1032, 7
  %v1034 = vsub.s32 0, %v1033
  %v1035 = vrot.slane %v997, %v1034
  %v1036 = vlaneseq
  %v1037 = vshrl.u32 %v1036, 7
  %v1038 = vsub.s32 0, %v1037
  %v1039 = vrot.slane %v1011, %v1038
  %v1040 = vlaneseq
  %v1041 = vshrl.u32 %v1040, 7
  %v1042 = vsub.s32 0, %v1041
  %v1043 = vrot.slane %v1013, %v1042
  %v1044 = vlaneseq
  %v1045 = vshrl.u32 %v1044, 7
  %v1046 = vsub.s32 0, %v1045
  %v1047 = vrot.slane %v1015, %v1046
  %v1056 = vsub.f32 %v1019, %v223
  %v1057 = vsub.f32 %v1023, %v223
  %v1058 = vsub.f32 %v1027, %v223
  %v1059 = vsub.f32 %v1031, %v223
  %v1060 = vsub.f32 %v1035, %v223
  %v1061 = vsub.f32 %v1039, %v223
  %v1062 = vsub.f32 %v1043, %v223
  %v1063 = vsub.f32 %v1047, %v223
  %v1064 = vmul.f32 %v1056, %v1056
  %v1065 = vmul.f32 %v1057, %v1057
  %v1066 = vmul.f32 %v1058, %v1058
  %v1067 = vmul.f32 %v1059, %v1059
  %v1068 = vmul.f32 %v1060, %v1060
  %v1069 = vmul.f32 %v1061, %v1061
  %v1070 = vmul.f32 %v1062, %v1062
  %v1071 = vmul.f32 %v1063, %v1063
  %v1072 = vadd.f32 %v958, %v1064
  %v1073 = vadd.f32 %v959, %v1065
  %v1074 = vadd.f32 %v960, %v1066
  %v1075 = vadd.f32 %v961, %v1067
  %v1076 = vadd.f32 %v962, %v1068
  %v1077 = vadd.f32 %v963, %v1069
  %v1078 = vadd.f32 %v964, %v1070
  %v1079 = vadd.f32 %v965, %v1071
  %v1080 = vrsqrt.pop %v1072
  %v1081 = vmul.f32 %v1072, %v1080
  %vm1082 = vcmp.eq.f32.partialorder %v1072, inf
  %v1083 = vsel %vm1082, %v1072, %v1081
  %vm1084 = vcmp.eq.f32.partialorder %v1072, 0.0
  %v1085 = vand.u32 %v1072, 2147483648
  %v1086 = vsel %vm1084, %v1085, %v1083
  %v1087 = vrsqrt.pop %v1073
  %v1088 = vmul.f32 %v1073, %v1087
  %vm1089 = vcmp.eq.f32.partialorder %v1073, inf
  %v1090 = vsel %vm1089, %v1073, %v1088
  %vm1091 = vcmp.eq.f32.partialorder %v1073, 0.0
  %v1092 = vand.u32 %v1073, 2147483648
  %v1093 = vsel %vm1091, %v1092, %v1090
  %v1094 = vrsqrt.pop %v1074
  %v1095 = vmul.f32 %v1074, %v1094
  %vm1096 = vcmp.eq.f32.partialorder %v1074, inf
  %v1097 = vsel %vm1096, %v1074, %v1095
  %vm1098 = vcmp.eq.f32.partialorder %v1074, 0.0
  %v1099 = vand.u32 %v1074, 2147483648
  %v1100 = vsel %vm1098, %v1099, %v1097
  %v1101 = vrsqrt.pop %v1075
  %v1102 = vmul.f32 %v1075, %v1101
  %vm1103 = vcmp.eq.f32.partialorder %v1075, inf
  %v1104 = vsel %vm1103, %v1075, %v1102
  %vm1105 = vcmp.eq.f32.partialorder %v1075, 0.0
  %v1106 = vand.u32 %v1075, 2147483648
  %v1107 = vsel %vm1105, %v1106, %v1104
  %v1108 = vrsqrt.pop %v1076
  %v1109 = vmul.f32 %v1076, %v1108
  %vm1110 = vcmp.eq.f32.partialorder %v1076, inf
  %v1111 = vsel %vm1110, %v1076, %v1109
  %vm1112 = vcmp.eq.f32.partialorder %v1076, 0.0
  %v1113 = vand.u32 %v1076, 2147483648
  %v1114 = vsel %vm1112, %v1113, %v1111
  %v1115 = vrsqrt.pop %v1077
  %v1116 = vmul.f32 %v1077, %v1115
  %vm1117 = vcmp.eq.f32.partialorder %v1077, inf
  %v1118 = vsel %vm1117, %v1077, %v1116
  %vm1119 = vcmp.eq.f32.partialorder %v1077, 0.0
  %v1120 = vand.u32 %v1077, 2147483648
  %v1121 = vsel %vm1119, %v1120, %v1118
  %v1122 = vrsqrt.pop %v1078
  %v1123 = vmul.f32 %v1078, %v1122
  %vm1124 = vcmp.eq.f32.partialorder %v1078, inf
  %v1125 = vsel %vm1124, %v1078, %v1123
  %vm1126 = vcmp.eq.f32.partialorder %v1078, 0.0
  %v1127 = vand.u32 %v1078, 2147483648
  %v1128 = vsel %vm1126, %v1127, %v1125
  %v1129 = vrsqrt.pop %v1079
  %v1130 = vmul.f32 %v1079, %v1129
  %vm1131 = vcmp.eq.f32.partialorder %v1079, inf
  %v1132 = vsel %vm1131, %v1079, %v1130
  %vm1133 = vcmp.eq.f32.partialorder %v1079, 0.0
  %v1134 = vand.u32 %v1079, 2147483648
  %v1135 = vsel %vm1133, %v1134, %v1132
  %v1136 = vlaneseq
  %v1137 = vshrl.u32 %v1136, 7
  %v1138 = vsub.s32 0, %v1137
  %v1139 = vrot.slane %v339, %v1138
  %vm1140 = vcmask 261120
  %v1142 = vsel %vm1140, %v688, 0
  %v1145 = vsel %vm1140, %v695, 0
  %v1148 = vsel %vm1140, %v702, 0
  %v1151 = vsel %vm1140, %v709, 0
  %v1154 = vsel %vm1140, %v716, 0
  %v1157 = vsel %vm1140, %v723, 0
  %v1160 = vsel %vm1140, %v730, 0
  %v1163 = vsel %vm1140, %v737, 0
  %v1166 = vsel %vm1140, %v1086, 0
  %v1169 = vsel %vm1140, %v1093, 0
  %v1172 = vsel %vm1140, %v1100, 0
  %v1175 = vsel %vm1140, %v1107, 0
  %v1178 = vsel %vm1140, %v1114, 0
  %v1181 = vsel %vm1140, %v1121, 0
  %v1184 = vsel %vm1140, %v1128, 0
  %v1187 = vsel %vm1140, %v1135, 0
  %1189 = vmatprep.subr.mxu0 0.0
  %1190 = vmatpush1.msra.mxu0 0.0
  %1191 = vmatprep.subr.mxu0 0.0
  %1192 = vmatpush1.msra.mxu0 0.0
  %1193 = vmatprep.subr.mxu0 0.0
  %1194 = vmatpush1.msra.mxu0 0.0
  %1195 = vmatprep.subr.mxu0 0.0
  %1196 = vmatpush1.msra.mxu0 0.0
  %1197 = vmatprep.subr.mxu0 0.0
  %1198 = vmatpush1.msra.mxu0 0.0
  %1199 = vmatprep.subr.mxu0 0.0
  %1200 = vmatpush1.msra.mxu0 0.0
  %1201 = vmatprep.subr.mxu0 0.0
  %1202 = vmatpush1.msra.mxu0 0.0
  %1203 = vmatprep.subr.mxu0 0.0
  %1204 = vmatpush1.msra.mxu0 0.0
  %1205 = vmatprep.subr.mxu0 0.0
  %1206 = vmatpush1.msra.mxu0 0.0
  %1207 = vmatprep.subr.mxu0 0.0
  %1208 = vmatpush1.msra.mxu0 0.0
  %1209 = vmatprep.subr.mxu0 0.0
  %1210 = vmatpush1.msra.mxu0 0.0
  %1211 = vmatprep.subr.mxu0 0.0
  %1212 = vmatpush1.msra.mxu0 0.0
  %1213 = vmatprep.subr.mxu0 0.0
  %1214 = vmatpush1.msra.mxu0 %v314
  %1215 = vmatprep.subr.mxu0 0.0
  %1216 = vmatpush1.msra.mxu0 %v313
  %1217 = vmatprep.subr.mxu0 0.0
  %1218 = vmatpush1.msra.mxu0 %v312
  %1219 = vmatprep.subr.mxu0 0.0
  %1220 = vmatpush1.msra.mxu0 %v311
  %1221 = vmatprep.subr.mxu0 0.0
  %1222 = vmatpush2.msra.mxu0 0.0
  %1223 = vmatprep.subr.mxu0 0.0
  %1224 = vmatpush2.msra.mxu0 0.0
  %1225 = vmatprep.subr.mxu0 0.0
  %1226 = vmatpush2.msra.mxu0 0.0
  %1227 = vmatprep.subr.mxu0 0.0
  %1228 = vmatpush2.msra.mxu0 0.0
  %1229 = vmatprep.subr.mxu0 0.0
  %1230 = vmatpush2.msra.mxu0 0.0
  %1231 = vmatprep.subr.mxu0 0.0
  %1232 = vmatpush2.msra.mxu0 0.0
  %1233 = vmatprep.subr.mxu0 0.0
  %1234 = vmatpush2.msra.mxu0 0.0
  %1235 = vmatprep.subr.mxu0 0.0
  %1236 = vmatpush2.msra.mxu0 0.0
  %1237 = vmatprep.subr.mxu0 0.0
  %1238 = vmatpush2.msra.mxu0 0.0
  %1239 = vmatprep.subr.mxu0 0.0
  %1240 = vmatpush2.msra.mxu0 0.0
  %1241 = vmatprep.subr.mxu0 0.0
  %1242 = vmatpush2.msra.mxu0 0.0
  %1243 = vmatprep.subr.mxu0 0.0
  %1244 = vmatpush2.msra.mxu0 0.0
  %1245 = vmatprep.subr.mxu0 0.0
  %1246 = vmatpush2.msra.mxu0 0.0
  %1247 = vmatprep.subr.mxu0 0.0
  %1248 = vmatpush2.msra.mxu0 0.0
  %1249 = vmatprep.subr.mxu0 0.0
  %1250 = vmatpush2.msra.mxu0 0.0
  %1251 = vmatprep.subr.mxu0 0.0
  %1252 = vmatpush2.msra.mxu0 0.0
  %1253 = vmatprep.mubr.f32.mxu0 0.0
  %1254 = vmatmul.mubr.f32.gmra.mxu0 %v1142
  %v1255 = vpop.f32.mrf.mxu0
  %v1256 = vadd.f32 %v1139, %v1255
  %v1257 = vpop.f32.mrf.mxu0
  %1258 = vmatprep.mubr.f32.mxu0 0.0
  %1259 = vmatmul.mubr.f32.gmra.mxu0 %v1145
  %v1260 = vpop.f32.mrf.mxu0
  %v1261 = vadd.f32 %v1139, %v1260
  %v1262 = vpop.f32.mrf.mxu0
  %1263 = vmatprep.mubr.f32.mxu0 0.0
  %1264 = vmatmul.mubr.f32.gmra.mxu0 %v1148
  %v1265 = vpop.f32.mrf.mxu0
  %v1266 = vadd.f32 %v1139, %v1265
  %v1267 = vpop.f32.mrf.mxu0
  %1268 = vmatprep.mubr.f32.mxu0 0.0
  %1269 = vmatmul.mubr.f32.gmra.mxu0 %v1151
  %v1270 = vpop.f32.mrf.mxu0
  %v1271 = vadd.f32 %v1139, %v1270
  %v1272 = vpop.f32.mrf.mxu0
  %1273 = vmatprep.mubr.f32.mxu0 0.0
  %1274 = vmatmul.mubr.f32.gmra.mxu0 %v1154
  %v1275 = vpop.f32.mrf.mxu0
  %v1276 = vadd.f32 %v1139, %v1275
  %v1277 = vpop.f32.mrf.mxu0
  %1278 = vmatprep.mubr.f32.mxu0 0.0
  %1279 = vmatmul.mubr.f32.gmra.mxu0 %v1157
  %v1280 = vpop.f32.mrf.mxu0
  %v1281 = vadd.f32 %v1139, %v1280
  %v1282 = vpop.f32.mrf.mxu0
  %1283 = vmatprep.mubr.f32.mxu0 0.0
  %1284 = vmatmul.mubr.f32.gmra.mxu0 %v1160
  %v1285 = vpop.f32.mrf.mxu0
  %v1286 = vadd.f32 %v1139, %v1285
  %v1287 = vpop.f32.mrf.mxu0
  %1288 = vmatprep.mubr.f32.mxu0 0.0
  %1289 = vmatmul.mubr.f32.gmra.mxu0 %v1163
  %v1290 = vpop.f32.mrf.mxu0
  %v1291 = vadd.f32 %v1139, %v1290
  %v1292 = vpop.f32.mrf.mxu0
  %1293 = vmatprep.mubr.f32.mxu0 0.0
  %1294 = vmatmul.mubr.f32.gmra.mxu0 %v1166
  %v1295 = vpop.f32.mrf.mxu0
  %v1296 = vadd.f32 %v1139, %v1295
  %v1297 = vpop.f32.mrf.mxu0
  %1298 = vmatprep.mubr.f32.mxu0 0.0
  %1299 = vmatmul.mubr.f32.gmra.mxu0 %v1169
  %v1300 = vpop.f32.mrf.mxu0
  %v1301 = vadd.f32 %v1139, %v1300
  %v1302 = vpop.f32.mrf.mxu0
  %1303 = vmatprep.mubr.f32.mxu0 0.0
  %1304 = vmatmul.mubr.f32.gmra.mxu0 %v1172
  %v1305 = vpop.f32.mrf.mxu0
  %v1306 = vadd.f32 %v1139, %v1305
  %v1307 = vpop.f32.mrf.mxu0
  %1308 = vmatprep.mubr.f32.mxu0 0.0
  %1309 = vmatmul.mubr.f32.gmra.mxu0 %v1175
  %v1310 = vpop.f32.mrf.mxu0
  %v1311 = vadd.f32 %v1139, %v1310
  %v1312 = vpop.f32.mrf.mxu0
  %1313 = vmatprep.mubr.f32.mxu0 0.0
  %1314 = vmatmul.mubr.f32.gmra.mxu0 %v1178
  %v1315 = vpop.f32.mrf.mxu0
  %v1316 = vadd.f32 %v1139, %v1315
  %v1317 = vpop.f32.mrf.mxu0
  %1318 = vmatprep.mubr.f32.mxu0 0.0
  %1319 = vmatmul.mubr.f32.gmra.mxu0 %v1181
  %v1320 = vpop.f32.mrf.mxu0
  %v1321 = vadd.f32 %v1139, %v1320
  %v1322 = vpop.f32.mrf.mxu0
  %1323 = vmatprep.mubr.f32.mxu0 0.0
  %1324 = vmatmul.mubr.f32.gmra.mxu0 %v1184
  %v1325 = vpop.f32.mrf.mxu0
  %v1326 = vadd.f32 %v1139, %v1325
  %v1327 = vpop.f32.mrf.mxu0
  %1328 = vmatprep.mubr.f32.mxu0 0.0
  %1329 = vmatmul.mubr.f32.gmra.mxu0 %v1187
  %v1330 = vpop.f32.mrf.mxu0
  %v1331 = vadd.f32 %v1139, %v1330
  %v1332 = vpop.f32.mrf.mxu0
  %1333 = vdwg.mxu0
  %v1334 = vxor.u32 %v1256, 2147483648
  %v1335 = vxor.u32 %v1261, 2147483648
  %v1336 = vxor.u32 %v1266, 2147483648
  %v1337 = vxor.u32 %v1271, 2147483648
  %v1338 = vxor.u32 %v1276, 2147483648
  %v1339 = vxor.u32 %v1281, 2147483648
  %v1340 = vxor.u32 %v1286, 2147483648
  %v1341 = vxor.u32 %v1291, 2147483648
  %v1342 = vxor.u32 %v1296, 2147483648
  %v1343 = vxor.u32 %v1301, 2147483648
  %v1344 = vxor.u32 %v1306, 2147483648
  %v1345 = vxor.u32 %v1311, 2147483648
  %v1346 = vxor.u32 %v1316, 2147483648
  %v1347 = vxor.u32 %v1321, 2147483648
  %v1348 = vxor.u32 %v1326, 2147483648
  %v1349 = vxor.u32 %v1331, 2147483648
  %v1350 = vmul.f32 %v1334, 1.442695
  %v1351 = vpow.pop %v1350
  %v1352 = vmul.f32 %v1335, 1.442695
  %v1353 = vpow.pop %v1352
  %v1354 = vmul.f32 %v1336, 1.442695
  %v1355 = vpow.pop %v1354
  %v1356 = vmul.f32 %v1337, 1.442695
  %v1357 = vpow.pop %v1356
  %v1358 = vmul.f32 %v1338, 1.442695
  %v1359 = vpow.pop %v1358
  %v1360 = vmul.f32 %v1339, 1.442695
  %v1361 = vpow.pop %v1360
  %v1362 = vmul.f32 %v1340, 1.442695
  %v1363 = vpow.pop %v1362
  %v1364 = vmul.f32 %v1341, 1.442695
  %v1365 = vpow.pop %v1364
  %v1366 = vmul.f32 %v1342, 1.442695
  %v1367 = vpow.pop %v1366
  %v1368 = vmul.f32 %v1343, 1.442695
  %v1369 = vpow.pop %v1368
  %v1370 = vmul.f32 %v1344, 1.442695
  %v1371 = vpow.pop %v1370
  %v1372 = vmul.f32 %v1345, 1.442695
  %v1373 = vpow.pop %v1372
  %v1374 = vmul.f32 %v1346, 1.442695
  %v1375 = vpow.pop %v1374
  %v1376 = vmul.f32 %v1347, 1.442695
  %v1377 = vpow.pop %v1376
  %v1378 = vmul.f32 %v1348, 1.442695
  %v1379 = vpow.pop %v1378
  %v1380 = vmul.f32 %v1349, 1.442695
  %v1381 = vpow.pop %v1380
  %v1382 = vadd.f32 %v1351, 1.0
  %v1383 = vadd.f32 %v1353, 1.0
  %v1384 = vadd.f32 %v1355, 1.0
  %v1385 = vadd.f32 %v1357, 1.0
  %v1386 = vadd.f32 %v1359, 1.0
  %v1387 = vadd.f32 %v1361, 1.0
  %v1388 = vadd.f32 %v1363, 1.0
  %v1389 = vadd.f32 %v1365, 1.0
  %v1390 = vadd.f32 %v1367, 1.0
  %v1391 = vadd.f32 %v1369, 1.0
  %v1392 = vadd.f32 %v1371, 1.0
  %v1393 = vadd.f32 %v1373, 1.0
  %v1394 = vadd.f32 %v1375, 1.0
  %v1395 = vadd.f32 %v1377, 1.0
  %v1396 = vadd.f32 %v1379, 1.0
  %v1397 = vadd.f32 %v1381, 1.0
  %v1398 = vrcp.pop %v1382
  %v1399 = vmul.f32 1.0, %v1398
  %v1400 = vrcp.pop %v1383
  %v1401 = vmul.f32 1.0, %v1400
  %v1402 = vrcp.pop %v1384
  %v1403 = vmul.f32 1.0, %v1402
  %v1404 = vrcp.pop %v1385
  %v1405 = vmul.f32 1.0, %v1404
  %v1406 = vrcp.pop %v1386
  %v1407 = vmul.f32 1.0, %v1406
  %v1408 = vrcp.pop %v1387
  %v1409 = vmul.f32 1.0, %v1408
  %v1410 = vrcp.pop %v1388
  %v1411 = vmul.f32 1.0, %v1410
  %v1412 = vrcp.pop %v1389
  %v1413 = vmul.f32 1.0, %v1412
  %v1414 = vrcp.pop %v1390
  %v1415 = vmul.f32 1.0, %v1414
  %v1416 = vrcp.pop %v1391
  %v1417 = vmul.f32 1.0, %v1416
  %v1418 = vrcp.pop %v1392
  %v1419 = vmul.f32 1.0, %v1418
  %v1420 = vrcp.pop %v1393
  %v1421 = vmul.f32 1.0, %v1420
  %v1422 = vrcp.pop %v1394
  %v1423 = vmul.f32 1.0, %v1422
  %v1424 = vrcp.pop %v1395
  %v1425 = vmul.f32 1.0, %v1424
  %v1426 = vrcp.pop %v1396
  %v1427 = vmul.f32 1.0, %v1426
  %v1428 = vrcp.pop %v1397
  %v1429 = vmul.f32 1.0, %v1428
  %v1430 = vmul.f32 %v1256, %v1399
  %v1431 = vmul.f32 %v1261, %v1401
  %v1432 = vmul.f32 %v1266, %v1403
  %v1433 = vmul.f32 %v1271, %v1405
  %v1434 = vmul.f32 %v1276, %v1407
  %v1435 = vmul.f32 %v1281, %v1409
  %v1436 = vmul.f32 %v1286, %v1411
  %v1437 = vmul.f32 %v1291, %v1413
  %v1438 = vmul.f32 %v1296, %v1415
  %v1439 = vmul.f32 %v1301, %v1417
  %v1440 = vmul.f32 %v1306, %v1419
  %v1441 = vmul.f32 %v1311, %v1421
  %v1442 = vmul.f32 %v1316, %v1423
  %v1443 = vmul.f32 %v1321, %v1425
  %v1444 = vmul.f32 %v1326, %v1427
  %v1445 = vmul.f32 %v1331, %v1429
  %v1446 = vlaneseq
  %v1447 = vshrl.u32 %v1446, 7
  %v1448 = vsub.s32 1, %v1447
  %v1449 = vrot.slane %v339, %v1448
  %1454 = vrot.lane.b32.xlu0 %v311, 96
  %v1455 = vpop.permute.xlu0 %1454
  %1456 = vrot.lane.b32.xlu0 %v312, 96
  %v1457 = vpop.permute.xlu0 %1456
  %1458 = vrot.lane.b32.xlu0 %v313, 96
  %v1459 = vpop.permute.xlu0 %1458
  %1460 = vrot.lane.b32.xlu0 %v314, 96
  %v1461 = vpop.permute.xlu0 %1460
  %v1467 = vsel %vm1140, %v1430, 0
  %v1470 = vsel %vm1140, %v1431, 0
  %v1473 = vsel %vm1140, %v1432, 0
  %v1476 = vsel %vm1140, %v1433, 0
  %v1479 = vsel %vm1140, %v1434, 0
  %v1482 = vsel %vm1140, %v1435, 0
  %v1485 = vsel %vm1140, %v1436, 0
  %v1488 = vsel %vm1140, %v1437, 0
  %v1491 = vsel %vm1140, %v1438, 0
  %v1494 = vsel %vm1140, %v1439, 0
  %v1497 = vsel %vm1140, %v1440, 0
  %v1500 = vsel %vm1140, %v1441, 0
  %v1503 = vsel %vm1140, %v1442, 0
  %v1506 = vsel %vm1140, %v1443, 0
  %v1509 = vsel %vm1140, %v1444, 0
  %v1512 = vsel %vm1140, %v1445, 0
  %1514 = vmatprep.subr.mxu0 0.0
  %1515 = vmatpush1.msra.mxu0 0.0
  %1516 = vmatprep.subr.mxu0 0.0
  %1517 = vmatpush1.msra.mxu0 0.0
  %1518 = vmatprep.subr.mxu0 0.0
  %1519 = vmatpush1.msra.mxu0 0.0
  %1520 = vmatprep.subr.mxu0 0.0
  %1521 = vmatpush1.msra.mxu0 0.0
  %1522 = vmatprep.subr.mxu0 0.0
  %1523 = vmatpush1.msra.mxu0 0.0
  %1524 = vmatprep.subr.mxu0 0.0
  %1525 = vmatpush1.msra.mxu0 0.0
  %1526 = vmatprep.subr.mxu0 0.0
  %1527 = vmatpush1.msra.mxu0 0.0
  %1528 = vmatprep.subr.mxu0 0.0
  %1529 = vmatpush1.msra.mxu0 0.0
  %1530 = vmatprep.subr.mxu0 0.0
  %1531 = vmatpush1.msra.mxu0 0.0
  %1532 = vmatprep.subr.mxu0 0.0
  %1533 = vmatpush1.msra.mxu0 0.0
  %1534 = vmatprep.subr.mxu0 0.0
  %1535 = vmatpush1.msra.mxu0 0.0
  %1536 = vmatprep.subr.mxu0 0.0
  %1537 = vmatpush1.msra.mxu0 0.0
  %1538 = vmatprep.subr.mxu0 0.0
  %1539 = vmatpush1.msra.mxu0 %v1461
  %1540 = vmatprep.subr.mxu0 0.0
  %1541 = vmatpush1.msra.mxu0 %v1459
  %1542 = vmatprep.subr.mxu0 0.0
  %1543 = vmatpush1.msra.mxu0 %v1457
  %1544 = vmatprep.subr.mxu0 0.0
  %1545 = vmatpush1.msra.mxu0 %v1455
  %1546 = vmatprep.subr.mxu0 0.0
  %1547 = vmatpush2.msra.mxu0 0.0
  %1548 = vmatprep.subr.mxu0 0.0
  %1549 = vmatpush2.msra.mxu0 0.0
  %1550 = vmatprep.subr.mxu0 0.0
  %1551 = vmatpush2.msra.mxu0 0.0
  %1552 = vmatprep.subr.mxu0 0.0
  %1553 = vmatpush2.msra.mxu0 0.0
  %1554 = vmatprep.subr.mxu0 0.0
  %1555 = vmatpush2.msra.mxu0 0.0
  %1556 = vmatprep.subr.mxu0 0.0
  %1557 = vmatpush2.msra.mxu0 0.0
  %1558 = vmatprep.subr.mxu0 0.0
  %1559 = vmatpush2.msra.mxu0 0.0
  %1560 = vmatprep.subr.mxu0 0.0
  %1561 = vmatpush2.msra.mxu0 0.0
  %1562 = vmatprep.subr.mxu0 0.0
  %1563 = vmatpush2.msra.mxu0 0.0
  %1564 = vmatprep.subr.mxu0 0.0
  %1565 = vmatpush2.msra.mxu0 0.0
  %1566 = vmatprep.subr.mxu0 0.0
  %1567 = vmatpush2.msra.mxu0 0.0
  %1568 = vmatprep.subr.mxu0 0.0
  %1569 = vmatpush2.msra.mxu0 0.0
  %1570 = vmatprep.subr.mxu0 0.0
  %1571 = vmatpush2.msra.mxu0 0.0
  %1572 = vmatprep.subr.mxu0 0.0
  %1573 = vmatpush2.msra.mxu0 0.0
  %1574 = vmatprep.subr.mxu0 0.0
  %1575 = vmatpush2.msra.mxu0 0.0
  %1576 = vmatprep.subr.mxu0 0.0
  %1577 = vmatpush2.msra.mxu0 0.0
  %1578 = vmatprep.mubr.f32.mxu0 0.0
  %1579 = vmatmul.mubr.f32.gmra.mxu0 %v1467
  %v1580 = vpop.f32.mrf.mxu0
  %v1581 = vadd.f32 %v1449, %v1580
  %v1582 = vpop.f32.mrf.mxu0
  %1583 = vmatprep.mubr.f32.mxu0 0.0
  %1584 = vmatmul.mubr.f32.gmra.mxu0 %v1470
  %v1585 = vpop.f32.mrf.mxu0
  %v1586 = vadd.f32 %v1449, %v1585
  %v1587 = vpop.f32.mrf.mxu0
  %1588 = vmatprep.mubr.f32.mxu0 0.0
  %1589 = vmatmul.mubr.f32.gmra.mxu0 %v1473
  %v1590 = vpop.f32.mrf.mxu0
  %v1591 = vadd.f32 %v1449, %v1590
  %v1592 = vpop.f32.mrf.mxu0
  %1593 = vmatprep.mubr.f32.mxu0 0.0
  %1594 = vmatmul.mubr.f32.gmra.mxu0 %v1476
  %v1595 = vpop.f32.mrf.mxu0
  %v1596 = vadd.f32 %v1449, %v1595
  %v1597 = vpop.f32.mrf.mxu0
  %1598 = vmatprep.mubr.f32.mxu0 0.0
  %1599 = vmatmul.mubr.f32.gmra.mxu0 %v1479
  %v1600 = vpop.f32.mrf.mxu0
  %v1601 = vadd.f32 %v1449, %v1600
  %v1602 = vpop.f32.mrf.mxu0
  %1603 = vmatprep.mubr.f32.mxu0 0.0
  %1604 = vmatmul.mubr.f32.gmra.mxu0 %v1482
  %v1605 = vpop.f32.mrf.mxu0
  %v1606 = vadd.f32 %v1449, %v1605
  %v1607 = vpop.f32.mrf.mxu0
  %1608 = vmatprep.mubr.f32.mxu0 0.0
  %1609 = vmatmul.mubr.f32.gmra.mxu0 %v1485
  %v1610 = vpop.f32.mrf.mxu0
  %v1611 = vadd.f32 %v1449, %v1610
  %v1612 = vpop.f32.mrf.mxu0
  %1613 = vmatprep.mubr.f32.mxu0 0.0
  %1614 = vmatmul.mubr.f32.gmra.mxu0 %v1488
  %v1615 = vpop.f32.mrf.mxu0
  %v1616 = vadd.f32 %v1449, %v1615
  %v1617 = vpop.f32.mrf.mxu0
  %1618 = vmatprep.mubr.f32.mxu0 0.0
  %1619 = vmatmul.mubr.f32.gmra.mxu0 %v1491
  %v1620 = vpop.f32.mrf.mxu0
  %v1621 = vadd.f32 %v1449, %v1620
  %v1622 = vpop.f32.mrf.mxu0
  %1623 = vmatprep.mubr.f32.mxu0 0.0
  %1624 = vmatmul.mubr.f32.gmra.mxu0 %v1494
  %v1625 = vpop.f32.mrf.mxu0
  %v1626 = vadd.f32 %v1449, %v1625
  %v1627 = vpop.f32.mrf.mxu0
  %1628 = vmatprep.mubr.f32.mxu0 0.0
  %1629 = vmatmul.mubr.f32.gmra.mxu0 %v1497
  %v1630 = vpop.f32.mrf.mxu0
  %v1631 = vadd.f32 %v1449, %v1630
  %v1632 = vpop.f32.mrf.mxu0
  %1633 = vmatprep.mubr.f32.mxu0 0.0
  %1634 = vmatmul.mubr.f32.gmra.mxu0 %v1500
  %v1635 = vpop.f32.mrf.mxu0
  %v1636 = vadd.f32 %v1449, %v1635
  %v1637 = vpop.f32.mrf.mxu0
  %1638 = vmatprep.mubr.f32.mxu0 0.0
  %1639 = vmatmul.mubr.f32.gmra.mxu0 %v1503
  %v1640 = vpop.f32.mrf.mxu0
  %v1641 = vadd.f32 %v1449, %v1640
  %v1642 = vpop.f32.mrf.mxu0
  %1643 = vmatprep.mubr.f32.mxu0 0.0
  %1644 = vmatmul.mubr.f32.gmra.mxu0 %v1506
  %v1645 = vpop.f32.mrf.mxu0
  %v1646 = vadd.f32 %v1449, %v1645
  %v1647 = vpop.f32.mrf.mxu0
  %1648 = vmatprep.mubr.f32.mxu0 0.0
  %1649 = vmatmul.mubr.f32.gmra.mxu0 %v1509
  %v1650 = vpop.f32.mrf.mxu0
  %v1651 = vadd.f32 %v1449, %v1650
  %v1652 = vpop.f32.mrf.mxu0
  %1653 = vmatprep.mubr.f32.mxu0 0.0
  %1654 = vmatmul.mubr.f32.gmra.mxu0 %v1512
  %v1655 = vpop.f32.mrf.mxu0
  %v1656 = vadd.f32 %v1449, %v1655
  %v1657 = vpop.f32.mrf.mxu0
  %1658 = vdwg.mxu0
  %v1659 = vxor.u32 %v1581, 2147483648
  %v1660 = vxor.u32 %v1586, 2147483648
  %v1661 = vxor.u32 %v1591, 2147483648
  %v1662 = vxor.u32 %v1596, 2147483648
  %v1663 = vxor.u32 %v1601, 2147483648
  %v1664 = vxor.u32 %v1606, 2147483648
  %v1665 = vxor.u32 %v1611, 2147483648
  %v1666 = vxor.u32 %v1616, 2147483648
  %v1667 = vxor.u32 %v1621, 2147483648
  %v1668 = vxor.u32 %v1626, 2147483648
  %v1669 = vxor.u32 %v1631, 2147483648
  %v1670 = vxor.u32 %v1636, 2147483648
  %v1671 = vxor.u32 %v1641, 2147483648
  %v1672 = vxor.u32 %v1646, 2147483648
  %v1673 = vxor.u32 %v1651, 2147483648
  %v1674 = vxor.u32 %v1656, 2147483648
  %v1675 = vmul.f32 %v1659, 1.442695
  %v1676 = vpow.pop %v1675
  %v1677 = vmul.f32 %v1660, 1.442695
  %v1678 = vpow.pop %v1677
  %v1679 = vmul.f32 %v1661, 1.442695
  %v1680 = vpow.pop %v1679
  %v1681 = vmul.f32 %v1662, 1.442695
  %v1682 = vpow.pop %v1681
  %v1683 = vmul.f32 %v1663, 1.442695
  %v1684 = vpow.pop %v1683
  %v1685 = vmul.f32 %v1664, 1.442695
  %v1686 = vpow.pop %v1685
  %v1687 = vmul.f32 %v1665, 1.442695
  %v1688 = vpow.pop %v1687
  %v1689 = vmul.f32 %v1666, 1.442695
  %v1690 = vpow.pop %v1689
  %v1691 = vmul.f32 %v1667, 1.442695
  %v1692 = vpow.pop %v1691
  %v1693 = vmul.f32 %v1668, 1.442695
  %v1694 = vpow.pop %v1693
  %v1695 = vmul.f32 %v1669, 1.442695
  %v1696 = vpow.pop %v1695
  %v1697 = vmul.f32 %v1670, 1.442695
  %v1698 = vpow.pop %v1697
  %v1699 = vmul.f32 %v1671, 1.442695
  %v1700 = vpow.pop %v1699
  %v1701 = vmul.f32 %v1672, 1.442695
  %v1702 = vpow.pop %v1701
  %v1703 = vmul.f32 %v1673, 1.442695
  %v1704 = vpow.pop %v1703
  %v1705 = vmul.f32 %v1674, 1.442695
  %v1706 = vpow.pop %v1705
  %v1707 = vadd.f32 %v1676, 1.0
  %v1708 = vadd.f32 %v1678, 1.0
  %v1709 = vadd.f32 %v1680, 1.0
  %v1710 = vadd.f32 %v1682, 1.0
  %v1711 = vadd.f32 %v1684, 1.0
  %v1712 = vadd.f32 %v1686, 1.0
  %v1713 = vadd.f32 %v1688, 1.0
  %v1714 = vadd.f32 %v1690, 1.0
  %v1715 = vadd.f32 %v1692, 1.0
  %v1716 = vadd.f32 %v1694, 1.0
  %v1717 = vadd.f32 %v1696, 1.0
  %v1718 = vadd.f32 %v1698, 1.0
  %v1719 = vadd.f32 %v1700, 1.0
  %v1720 = vadd.f32 %v1702, 1.0
  %v1721 = vadd.f32 %v1704, 1.0
  %v1722 = vadd.f32 %v1706, 1.0
  %v1723 = vrcp.pop %v1707
  %v1724 = vmul.f32 1.0, %v1723
  %v1725 = vrcp.pop %v1708
  %v1726 = vmul.f32 1.0, %v1725
  %v1727 = vrcp.pop %v1709
  %v1728 = vmul.f32 1.0, %v1727
  %v1729 = vrcp.pop %v1710
  %v1730 = vmul.f32 1.0, %v1729
  %v1731 = vrcp.pop %v1711
  %v1732 = vmul.f32 1.0, %v1731
  %v1733 = vrcp.pop %v1712
  %v1734 = vmul.f32 1.0, %v1733
  %v1735 = vrcp.pop %v1713
  %v1736 = vmul.f32 1.0, %v1735
  %v1737 = vrcp.pop %v1714
  %v1738 = vmul.f32 1.0, %v1737
  %v1739 = vrcp.pop %v1715
  %v1740 = vmul.f32 1.0, %v1739
  %v1741 = vrcp.pop %v1716
  %v1742 = vmul.f32 1.0, %v1741
  %v1743 = vrcp.pop %v1717
  %v1744 = vmul.f32 1.0, %v1743
  %v1745 = vrcp.pop %v1718
  %v1746 = vmul.f32 1.0, %v1745
  %v1747 = vrcp.pop %v1719
  %v1748 = vmul.f32 1.0, %v1747
  %v1749 = vrcp.pop %v1720
  %v1750 = vmul.f32 1.0, %v1749
  %v1751 = vrcp.pop %v1721
  %v1752 = vmul.f32 1.0, %v1751
  %v1753 = vrcp.pop %v1722
  %v1754 = vmul.f32 1.0, %v1753
  %v1755 = vmul.f32 %v1581, %v1724
  %v1756 = vmul.f32 %v1586, %v1726
  %v1757 = vmul.f32 %v1591, %v1728
  %v1758 = vmul.f32 %v1596, %v1730
  %v1759 = vmul.f32 %v1601, %v1732
  %v1760 = vmul.f32 %v1606, %v1734
  %v1761 = vmul.f32 %v1611, %v1736
  %v1762 = vmul.f32 %v1616, %v1738
  %v1763 = vmul.f32 %v1621, %v1740
  %v1764 = vmul.f32 %v1626, %v1742
  %v1765 = vmul.f32 %v1631, %v1744
  %v1766 = vmul.f32 %v1636, %v1746
  %v1767 = vmul.f32 %v1641, %v1748
  %v1768 = vmul.f32 %v1646, %v1750
  %v1769 = vmul.f32 %v1651, %v1752
  %v1770 = vmul.f32 %v1656, %v1754
  %v1772 = vsel %vm1140, %v303, 0
  %v1775 = vsel %vm1140, %v308, 0
  %1777 = vmatprep.subr.mxu0 0.0
  %1778 = vmatpush1.msra.mxu0 0.0
  %1779 = vmatprep.subr.mxu0 0.0
  %1780 = vmatpush1.msra.mxu0 0.0
  %1781 = vmatprep.subr.mxu0 0.0
  %1782 = vmatpush1.msra.mxu0 0.0
  %1783 = vmatprep.subr.mxu0 0.0
  %1784 = vmatpush1.msra.mxu0 0.0
  %1785 = vmatprep.subr.mxu0 0.0
  %1786 = vmatpush1.msra.mxu0 0.0
  %1787 = vmatprep.subr.mxu0 0.0
  %1788 = vmatpush1.msra.mxu0 0.0
  %1789 = vmatprep.subr.mxu0 0.0
  %1790 = vmatpush1.msra.mxu0 0.0
  %1791 = vmatprep.subr.mxu0 0.0
  %1792 = vmatpush1.msra.mxu0 0.0
  %1793 = vmatprep.subr.mxu0 0.0
  %1794 = vmatpush1.msra.mxu0 0.0
  %1795 = vmatprep.subr.mxu0 0.0
  %1796 = vmatpush1.msra.mxu0 0.0
  %1797 = vmatprep.subr.mxu0 0.0
  %1798 = vmatpush1.msra.mxu0 0.0
  %1799 = vmatprep.subr.mxu0 0.0
  %1800 = vmatpush1.msra.mxu0 0.0
  %1801 = vmatprep.subr.mxu0 0.0
  %1802 = vmatpush1.msra.mxu0 %v318
  %1803 = vmatprep.subr.mxu0 0.0
  %1804 = vmatpush1.msra.mxu0 %v317
  %1805 = vmatprep.subr.mxu0 0.0
  %1806 = vmatpush1.msra.mxu0 %v316
  %1807 = vmatprep.subr.mxu0 0.0
  %1808 = vmatpush1.msra.mxu0 %v315
  %1809 = vmatprep.subr.mxu0 0.0
  %1810 = vmatpush2.msra.mxu0 0.0
  %1811 = vmatprep.subr.mxu0 0.0
  %1812 = vmatpush2.msra.mxu0 0.0
  %1813 = vmatprep.subr.mxu0 0.0
  %1814 = vmatpush2.msra.mxu0 0.0
  %1815 = vmatprep.subr.mxu0 0.0
  %1816 = vmatpush2.msra.mxu0 0.0
  %1817 = vmatprep.subr.mxu0 0.0
  %1818 = vmatpush2.msra.mxu0 0.0
  %1819 = vmatprep.subr.mxu0 0.0
  %1820 = vmatpush2.msra.mxu0 0.0
  %1821 = vmatprep.subr.mxu0 0.0
  %1822 = vmatpush2.msra.mxu0 0.0
  %1823 = vmatprep.subr.mxu0 0.0
  %1824 = vmatpush2.msra.mxu0 0.0
  %1825 = vmatprep.subr.mxu0 0.0
  %1826 = vmatpush2.msra.mxu0 0.0
  %1827 = vmatprep.subr.mxu0 0.0
  %1828 = vmatpush2.msra.mxu0 0.0
  %1829 = vmatprep.subr.mxu0 0.0
  %1830 = vmatpush2.msra.mxu0 0.0
  %1831 = vmatprep.subr.mxu0 0.0
  %1832 = vmatpush2.msra.mxu0 0.0
  %1833 = vmatprep.subr.mxu0 0.0
  %1834 = vmatpush2.msra.mxu0 0.0
  %1835 = vmatprep.subr.mxu0 0.0
  %1836 = vmatpush2.msra.mxu0 0.0
  %1837 = vmatprep.subr.mxu0 0.0
  %1838 = vmatpush2.msra.mxu0 0.0
  %1839 = vmatprep.subr.mxu0 0.0
  %1840 = vmatpush2.msra.mxu0 0.0
  %1841 = vmatprep.mubr.f32.mxu0 0.0
  %1842 = vmatmul.mubr.f32.gmra.mxu0 %v1772
  %v1843 = vpop.f32.mrf.mxu0
  %v1844 = vadd.f32 0.0, %v1843
  %v1845 = vpop.f32.mrf.mxu0
  %1846 = vmatprep.mubr.f32.mxu0 0.0
  %1847 = vmatmul.mubr.f32.gmra.mxu0 %v1775
  %v1848 = vpop.f32.mrf.mxu0
  %v1849 = vadd.f32 0.0, %v1848
  %v1850 = vpop.f32.mrf.mxu0
  %1851 = vdwg.mxu0
  %v1853 = vsel %vm1140, %v1755, 0
  %v1856 = vsel %vm1140, %v1756, 0
  %v1859 = vsel %vm1140, %v1757, 0
  %v1862 = vsel %vm1140, %v1758, 0
  %v1865 = vsel %vm1140, %v1759, 0
  %v1868 = vsel %vm1140, %v1760, 0
  %v1871 = vsel %vm1140, %v1761, 0
  %v1874 = vsel %vm1140, %v1762, 0
  %v1877 = vsel %vm1140, %v1763, 0
  %v1880 = vsel %vm1140, %v1764, 0
  %v1883 = vsel %vm1140, %v1765, 0
  %v1886 = vsel %vm1140, %v1766, 0
  %v1889 = vsel %vm1140, %v1767, 0
  %v1892 = vsel %vm1140, %v1768, 0
  %v1895 = vsel %vm1140, %v1769, 0
  %v1898 = vsel %vm1140, %v1770, 0
  %1900 = vmatprep.subr.mxu0 0.0
  %1901 = vmatpush1.msra.mxu0 0.0
  %1902 = vmatprep.subr.mxu0 0.0
  %1903 = vmatpush1.msra.mxu0 0.0
  %1904 = vmatprep.subr.mxu0 0.0
  %1905 = vmatpush1.msra.mxu0 0.0
  %1906 = vmatprep.subr.mxu0 0.0
  %1907 = vmatpush1.msra.mxu0 0.0
  %1908 = vmatprep.subr.mxu0 0.0
  %1909 = vmatpush1.msra.mxu0 0.0
  %1910 = vmatprep.subr.mxu0 0.0
  %1911 = vmatpush1.msra.mxu0 0.0
  %1912 = vmatprep.subr.mxu0 0.0
  %1913 = vmatpush1.msra.mxu0 0.0
  %1914 = vmatprep.subr.mxu0 0.0
  %1915 = vmatpush1.msra.mxu0 0.0
  %1916 = vmatprep.subr.mxu0 0.0
  %1917 = vmatpush1.msra.mxu0 0.0
  %1918 = vmatprep.subr.mxu0 0.0
  %1919 = vmatpush1.msra.mxu0 0.0
  %1920 = vmatprep.subr.mxu0 0.0
  %1921 = vmatpush1.msra.mxu0 0.0
  %1922 = vmatprep.subr.mxu0 0.0
  %1923 = vmatpush1.msra.mxu0 0.0
  %1924 = vmatprep.subr.mxu0 0.0
  %1925 = vmatpush1.msra.mxu0 %v326
  %1926 = vmatprep.subr.mxu0 0.0
  %1927 = vmatpush1.msra.mxu0 %v325
  %1928 = vmatprep.subr.mxu0 0.0
  %1929 = vmatpush1.msra.mxu0 %v324
  %1930 = vmatprep.subr.mxu0 0.0
  %1931 = vmatpush1.msra.mxu0 %v323
  %1932 = vmatprep.subr.mxu0 0.0
  %1933 = vmatpush2.msra.mxu0 0.0
  %1934 = vmatprep.subr.mxu0 0.0
  %1935 = vmatpush2.msra.mxu0 0.0
  %1936 = vmatprep.subr.mxu0 0.0
  %1937 = vmatpush2.msra.mxu0 0.0
  %1938 = vmatprep.subr.mxu0 0.0
  %1939 = vmatpush2.msra.mxu0 0.0
  %1940 = vmatprep.subr.mxu0 0.0
  %1941 = vmatpush2.msra.mxu0 0.0
  %1942 = vmatprep.subr.mxu0 0.0
  %1943 = vmatpush2.msra.mxu0 0.0
  %1944 = vmatprep.subr.mxu0 0.0
  %1945 = vmatpush2.msra.mxu0 0.0
  %1946 = vmatprep.subr.mxu0 0.0
  %1947 = vmatpush2.msra.mxu0 0.0
  %1948 = vmatprep.subr.mxu0 0.0
  %1949 = vmatpush2.msra.mxu0 0.0
  %1950 = vmatprep.subr.mxu0 0.0
  %1951 = vmatpush2.msra.mxu0 0.0
  %1952 = vmatprep.subr.mxu0 0.0
  %1953 = vmatpush2.msra.mxu0 0.0
  %1954 = vmatprep.subr.mxu0 0.0
  %1955 = vmatpush2.msra.mxu0 0.0
  %1956 = vmatprep.subr.mxu0 0.0
  %1957 = vmatpush2.msra.mxu0 0.0
  %1958 = vmatprep.subr.mxu0 0.0
  %1959 = vmatpush2.msra.mxu0 0.0
  %1960 = vmatprep.subr.mxu0 0.0
  %1961 = vmatpush2.msra.mxu0 0.0
  %1962 = vmatprep.subr.mxu0 0.0
  %1963 = vmatpush2.msra.mxu0 0.0
  %1964 = vmatprep.mubr.f32.mxu0 0.0
  %1965 = vmatmul.mubr.f32.gmra.mxu0 %v1853
  %v1966 = vpop.f32.mrf.mxu0
  %v1967 = vadd.f32 0.0, %v1966
  %v1968 = vpop.f32.mrf.mxu0
  %1969 = vmatprep.mubr.f32.mxu0 0.0
  %1970 = vmatmul.mubr.f32.gmra.mxu0 %v1856
  %v1971 = vpop.f32.mrf.mxu0
  %v1972 = vadd.f32 0.0, %v1971
  %v1973 = vpop.f32.mrf.mxu0
  %1974 = vmatprep.mubr.f32.mxu0 0.0
  %1975 = vmatmul.mubr.f32.gmra.mxu0 %v1859
  %v1976 = vpop.f32.mrf.mxu0
  %v1977 = vadd.f32 0.0, %v1976
  %v1978 = vpop.f32.mrf.mxu0
  %1979 = vmatprep.mubr.f32.mxu0 0.0
  %1980 = vmatmul.mubr.f32.gmra.mxu0 %v1862
  %v1981 = vpop.f32.mrf.mxu0
  %v1982 = vadd.f32 0.0, %v1981
  %v1983 = vpop.f32.mrf.mxu0
  %1984 = vmatprep.mubr.f32.mxu0 0.0
  %1985 = vmatmul.mubr.f32.gmra.mxu0 %v1865
  %v1986 = vpop.f32.mrf.mxu0
  %v1987 = vadd.f32 0.0, %v1986
  %v1988 = vpop.f32.mrf.mxu0
  %1989 = vmatprep.mubr.f32.mxu0 0.0
  %1990 = vmatmul.mubr.f32.gmra.mxu0 %v1868
  %v1991 = vpop.f32.mrf.mxu0
  %v1992 = vadd.f32 0.0, %v1991
  %v1993 = vpop.f32.mrf.mxu0
  %1994 = vmatprep.mubr.f32.mxu0 0.0
  %1995 = vmatmul.mubr.f32.gmra.mxu0 %v1871
  %v1996 = vpop.f32.mrf.mxu0
  %v1997 = vadd.f32 0.0, %v1996
  %v1998 = vpop.f32.mrf.mxu0
  %1999 = vmatprep.mubr.f32.mxu0 0.0
  %2000 = vmatmul.mubr.f32.gmra.mxu0 %v1874
  %v2001 = vpop.f32.mrf.mxu0
  %v2002 = vadd.f32 0.0, %v2001
  %v2003 = vpop.f32.mrf.mxu0
  %2004 = vmatprep.mubr.f32.mxu0 0.0
  %2005 = vmatmul.mubr.f32.gmra.mxu0 %v1877
  %v2006 = vpop.f32.mrf.mxu0
  %v2007 = vadd.f32 0.0, %v2006
  %v2008 = vpop.f32.mrf.mxu0
  %2009 = vmatprep.mubr.f32.mxu0 0.0
  %2010 = vmatmul.mubr.f32.gmra.mxu0 %v1880
  %v2011 = vpop.f32.mrf.mxu0
  %v2012 = vadd.f32 0.0, %v2011
  %v2013 = vpop.f32.mrf.mxu0
  %2014 = vmatprep.mubr.f32.mxu0 0.0
  %2015 = vmatmul.mubr.f32.gmra.mxu0 %v1883
  %v2016 = vpop.f32.mrf.mxu0
  %v2017 = vadd.f32 0.0, %v2016
  %v2018 = vpop.f32.mrf.mxu0
  %2019 = vmatprep.mubr.f32.mxu0 0.0
  %2020 = vmatmul.mubr.f32.gmra.mxu0 %v1886
  %v2021 = vpop.f32.mrf.mxu0
  %v2022 = vadd.f32 0.0, %v2021
  %v2023 = vpop.f32.mrf.mxu0
  %2024 = vmatprep.mubr.f32.mxu0 0.0
  %2025 = vmatmul.mubr.f32.gmra.mxu0 %v1889
  %v2026 = vpop.f32.mrf.mxu0
  %v2027 = vadd.f32 0.0, %v2026
  %v2028 = vpop.f32.mrf.mxu0
  %2029 = vmatprep.mubr.f32.mxu0 0.0
  %2030 = vmatmul.mubr.f32.gmra.mxu0 %v1892
  %v2031 = vpop.f32.mrf.mxu0
  %v2032 = vadd.f32 0.0, %v2031
  %v2033 = vpop.f32.mrf.mxu0
  %2034 = vmatprep.mubr.f32.mxu0 0.0
  %2035 = vmatmul.mubr.f32.gmra.mxu0 %v1895
  %v2036 = vpop.f32.mrf.mxu0
  %v2037 = vadd.f32 0.0, %v2036
  %v2038 = vpop.f32.mrf.mxu0
  %2039 = vmatprep.mubr.f32.mxu0 0.0
  %2040 = vmatmul.mubr.f32.gmra.mxu0 %v1898
  %v2041 = vpop.f32.mrf.mxu0
  %v2042 = vadd.f32 0.0, %v2041
  %v2043 = vpop.f32.mrf.mxu0
  %2044 = vdwg.mxu0
  %v2046 = vcombine.high %v1844, %v1844
  %v2048 = vunpack.c.l.s4 1966171168
  %v2049 = vunpack.c.0.s8 %v2048
  %v2050 = vlaneseq
  %v2051 = vshrl.u32 %v2050, 7
  %v2052 = vsub.s32 %v2049, %v2051
  %v2053 = vrot.slane %v1844, %v2052
  %v2055 = vunpack.c.l.s4 1966171168
  %v2056 = vunpack.c.0.s8 %v2055
  %v2057 = vlaneseq
  %v2058 = vshrl.u32 %v2057, 7
  %v2059 = vsub.s32 %v2056, %v2058
  %v2060 = vrot.slane %v2046, %v2059
  %v2061 = vcombine.high %v2053, %v2053
  %v2062 = vcombine.high %v2060, %v2060
  %v2064 = vunpack.c.l.s4 1966171168
  %v2065 = vunpack.c.0.s8 %v2064
  %v2066 = vlaneseq
  %v2067 = vshrl.u32 %v2066, 7
  %v2068 = vsub.s32 %v2065, %v2067
  %v2069 = vrot.slane %v2053, %v2068
  %v2071 = vunpack.c.l.s4 1966171168
  %v2072 = vunpack.c.0.s8 %v2071
  %v2073 = vlaneseq
  %v2074 = vshrl.u32 %v2073, 7
  %v2075 = vsub.s32 %v2072, %v2074
  %v2076 = vrot.slane %v2060, %v2075
  %v2078 = vunpack.c.l.s4 1966171168
  %v2079 = vunpack.c.0.s8 %v2078
  %v2080 = vlaneseq
  %v2081 = vshrl.u32 %v2080, 7
  %v2082 = vsub.s32 %v2079, %v2081
  %v2083 = vrot.slane %v2061, %v2082
  %v2085 = vunpack.c.l.s4 1966171168
  %v2086 = vunpack.c.0.s8 %v2085
  %v2087 = vlaneseq
  %v2088 = vshrl.u32 %v2087, 7
  %v2089 = vsub.s32 %v2086, %v2088
  %v2090 = vrot.slane %v2062, %v2089
  %v2091 = vcombine.high %v2069, %v2069
  %v2092 = vcombine.high %v2076, %v2076
  %v2093 = vcombine.high %v2083, %v2083
  %v2094 = vcombine.high %v2090, %v2090
  %v2095 = vlaneseq
  %v2096 = vshrl.u32 %v2095, 7
  %v2097 = vsub.s32 0, %v2096
  %v2098 = vrot.slane %v2069, %v2097
  %v2099 = vlaneseq
  %v2100 = vshrl.u32 %v2099, 7
  %v2101 = vsub.s32 0, %v2100
  %v2102 = vrot.slane %v2083, %v2101
  %v2103 = vlaneseq
  %v2104 = vshrl.u32 %v2103, 7
  %v2105 = vsub.s32 0, %v2104
  %v2106 = vrot.slane %v2091, %v2105
  %v2107 = vlaneseq
  %v2108 = vshrl.u32 %v2107, 7
  %v2109 = vsub.s32 0, %v2108
  %v2110 = vrot.slane %v2093, %v2109
  %v2111 = vlaneseq
  %v2112 = vshrl.u32 %v2111, 7
  %v2113 = vsub.s32 0, %v2112
  %v2114 = vrot.slane %v2076, %v2113
  %v2115 = vlaneseq
  %v2116 = vshrl.u32 %v2115, 7
  %v2117 = vsub.s32 0, %v2116
  %v2118 = vrot.slane %v2090, %v2117
  %v2119 = vlaneseq
  %v2120 = vshrl.u32 %v2119, 7
  %v2121 = vsub.s32 0, %v2120
  %v2122 = vrot.slane %v2092, %v2121
  %v2123 = vlaneseq
  %v2124 = vshrl.u32 %v2123, 7
  %v2125 = vsub.s32 0, %v2124
  %v2126 = vrot.slane %v2094, %v2125
  %v2135 = vadd.f32 %v1967, %v2098
  %v2136 = vadd.f32 %v1972, %v2102
  %v2137 = vadd.f32 %v1977, %v2106
  %v2138 = vadd.f32 %v1982, %v2110
  %v2139 = vadd.f32 %v1987, %v2114
  %v2140 = vadd.f32 %v1992, %v2118
  %v2141 = vadd.f32 %v1997, %v2122
  %v2142 = vadd.f32 %v2002, %v2126
  %2143 = vrot.lane.b32.xlu0 %v1844, 96
  %v2144 = vpop.permute.xlu0 %2143
  %v2146 = vadd.f32 %v2135, %v2144
  %v2147 = vadd.f32 %v2136, %v2144
  %v2148 = vadd.f32 %v2137, %v2144
  %v2149 = vadd.f32 %v2138, %v2144
  %v2150 = vadd.f32 %v2139, %v2144
  %v2151 = vadd.f32 %v2140, %v2144
  %v2152 = vadd.f32 %v2141, %v2144
  %v2153 = vadd.f32 %v2142, %v2144
  %v2155 = vcombine.high %v1849, %v1849
  %v2157 = vunpack.c.l.s4 1966171168
  %v2158 = vunpack.c.0.s8 %v2157
  %v2159 = vlaneseq
  %v2160 = vshrl.u32 %v2159, 7
  %v2161 = vsub.s32 %v2158, %v2160
  %v2162 = vrot.slane %v1849, %v2161
  %v2164 = vunpack.c.l.s4 1966171168
  %v2165 = vunpack.c.0.s8 %v2164
  %v2166 = vlaneseq
  %v2167 = vshrl.u32 %v2166, 7
  %v2168 = vsub.s32 %v2165, %v2167
  %v2169 = vrot.slane %v2155, %v2168
  %v2170 = vcombine.high %v2162, %v2162
  %v2171 = vcombine.high %v2169, %v2169
  %v2173 = vunpack.c.l.s4 1966171168
  %v2174 = vunpack.c.0.s8 %v2173
  %v2175 = vlaneseq
  %v2176 = vshrl.u32 %v2175, 7
  %v2177 = vsub.s32 %v2174, %v2176
  %v2178 = vrot.slane %v2162, %v2177
  %v2180 = vunpack.c.l.s4 1966171168
  %v2181 = vunpack.c.0.s8 %v2180
  %v2182 = vlaneseq
  %v2183 = vshrl.u32 %v2182, 7
  %v2184 = vsub.s32 %v2181, %v2183
  %v2185 = vrot.slane %v2169, %v2184
  %v2187 = vunpack.c.l.s4 1966171168
  %v2188 = vunpack.c.0.s8 %v2187
  %v2189 = vlaneseq
  %v2190 = vshrl.u32 %v2189, 7
  %v2191 = vsub.s32 %v2188, %v2190
  %v2192 = vrot.slane %v2170, %v2191
  %v2194 = vunpack.c.l.s4 1966171168
  %v2195 = vunpack.c.0.s8 %v2194
  %v2196 = vlaneseq
  %v2197 = vshrl.u32 %v2196, 7
  %v2198 = vsub.s32 %v2195, %v2197
  %v2199 = vrot.slane %v2171, %v2198
  %v2200 = vcombine.high %v2178, %v2178
  %v2201 = vcombine.high %v2185, %v2185
  %v2202 = vcombine.high %v2192, %v2192
  %v2203 = vcombine.high %v2199, %v2199
  %v2204 = vlaneseq
  %v2205 = vshrl.u32 %v2204, 7
  %v2206 = vsub.s32 0, %v2205
  %v2207 = vrot.slane %v2178, %v2206
  %v2208 = vlaneseq
  %v2209 = vshrl.u32 %v2208, 7
  %v2210 = vsub.s32 0, %v2209
  %v2211 = vrot.slane %v2192, %v2210
  %v2212 = vlaneseq
  %v2213 = vshrl.u32 %v2212, 7
  %v2214 = vsub.s32 0, %v2213
  %v2215 = vrot.slane %v2200, %v2214
  %v2216 = vlaneseq
  %v2217 = vshrl.u32 %v2216, 7
  %v2218 = vsub.s32 0, %v2217
  %v2219 = vrot.slane %v2202, %v2218
  %v2220 = vlaneseq
  %v2221 = vshrl.u32 %v2220, 7
  %v2222 = vsub.s32 0, %v2221
  %v2223 = vrot.slane %v2185, %v2222
  %v2224 = vlaneseq
  %v2225 = vshrl.u32 %v2224, 7
  %v2226 = vsub.s32 0, %v2225
  %v2227 = vrot.slane %v2199, %v2226
  %v2228 = vlaneseq
  %v2229 = vshrl.u32 %v2228, 7
  %v2230 = vsub.s32 0, %v2229
  %v2231 = vrot.slane %v2201, %v2230
  %v2232 = vlaneseq
  %v2233 = vshrl.u32 %v2232, 7
  %v2234 = vsub.s32 0, %v2233
  %v2235 = vrot.slane %v2203, %v2234
  %v2244 = vadd.f32 %v2007, %v2207
  %v2245 = vadd.f32 %v2012, %v2211
  %v2246 = vadd.f32 %v2017, %v2215
  %v2247 = vadd.f32 %v2022, %v2219
  %v2248 = vadd.f32 %v2027, %v2223
  %v2249 = vadd.f32 %v2032, %v2227
  %v2250 = vadd.f32 %v2037, %v2231
  %v2251 = vadd.f32 %v2042, %v2235
  %2252 = vrot.lane.b32.xlu0 %v1849, 96
  %v2253 = vpop.permute.xlu0 %2252
  %v2255 = vadd.f32 %v2244, %v2253
  %v2256 = vadd.f32 %v2245, %v2253
  %v2257 = vadd.f32 %v2246, %v2253
  %v2258 = vadd.f32 %v2247, %v2253
  %v2259 = vadd.f32 %v2248, %v2253
  %v2260 = vadd.f32 %v2249, %v2253
  %v2261 = vadd.f32 %v2250, %v2253
  %v2262 = vadd.f32 %v2251, %v2253
  %v2263 = vlaneseq
  %v2264 = vshrl.u32 %v2263, 7
  %v2265 = vsub.s32 2, %v2264
  %v2266 = vrot.slane %v339, %v2265
  %v2267 = vadd.f32 %v2146, %v2266
  %v2268 = vadd.f32 %v2147, %v2266
  %v2269 = vadd.f32 %v2148, %v2266
  %v2270 = vadd.f32 %v2149, %v2266
  %v2271 = vadd.f32 %v2150, %v2266
  %v2272 = vadd.f32 %v2151, %v2266
  %v2273 = vadd.f32 %v2152, %v2266
  %v2274 = vadd.f32 %v2153, %v2266
  %v2275 = vadd.f32 %v2255, %v2266
  %v2276 = vadd.f32 %v2256, %v2266
  %v2277 = vadd.f32 %v2257, %v2266
  %v2278 = vadd.f32 %v2258, %v2266
  %v2279 = vadd.f32 %v2259, %v2266
  %v2280 = vadd.f32 %v2260, %v2266
  %v2281 = vadd.f32 %v2261, %v2266
  %v2282 = vadd.f32 %v2262, %v2266
  %v2283 = vxor.u32 %v2267, 2147483648
  %v2284 = vxor.u32 %v2268, 2147483648
  %v2285 = vxor.u32 %v2269, 2147483648
  %v2286 = vxor.u32 %v2270, 2147483648
  %v2287 = vxor.u32 %v2271, 2147483648
  %v2288 = vxor.u32 %v2272, 2147483648
  %v2289 = vxor.u32 %v2273, 2147483648
  %v2290 = vxor.u32 %v2274, 2147483648
  %v2291 = vxor.u32 %v2275, 2147483648
  %v2292 = vxor.u32 %v2276, 2147483648
  %v2293 = vxor.u32 %v2277, 2147483648
  %v2294 = vxor.u32 %v2278, 2147483648
  %v2295 = vxor.u32 %v2279, 2147483648
  %v2296 = vxor.u32 %v2280, 2147483648
  %v2297 = vxor.u32 %v2281, 2147483648
  %v2298 = vxor.u32 %v2282, 2147483648
  %v2299 = vmul.f32 %v2283, 1.442695
  %v2300 = vpow.pop %v2299
  %v2301 = vmul.f32 %v2284, 1.442695
  %v2302 = vpow.pop %v2301
  %v2303 = vmul.f32 %v2285, 1.442695
  %v2304 = vpow.pop %v2303
  %v2305 = vmul.f32 %v2286, 1.442695
  %v2306 = vpow.pop %v2305
  %v2307 = vmul.f32 %v2287, 1.442695
  %v2308 = vpow.pop %v2307
  %v2309 = vmul.f32 %v2288, 1.442695
  %v2310 = vpow.pop %v2309
  %v2311 = vmul.f32 %v2289, 1.442695
  %v2312 = vpow.pop %v2311
  %v2313 = vmul.f32 %v2290, 1.442695
  %v2314 = vpow.pop %v2313
  %v2315 = vmul.f32 %v2291, 1.442695
  %v2316 = vpow.pop %v2315
  %v2317 = vmul.f32 %v2292, 1.442695
  %v2318 = vpow.pop %v2317
  %v2319 = vmul.f32 %v2293, 1.442695
  %v2320 = vpow.pop %v2319
  %v2321 = vmul.f32 %v2294, 1.442695
  %v2322 = vpow.pop %v2321
  %v2323 = vmul.f32 %v2295, 1.442695
  %v2324 = vpow.pop %v2323
  %v2325 = vmul.f32 %v2296, 1.442695
  %v2326 = vpow.pop %v2325
  %v2327 = vmul.f32 %v2297, 1.442695
  %v2328 = vpow.pop %v2327
  %v2329 = vmul.f32 %v2298, 1.442695
  %v2330 = vpow.pop %v2329
  %v2331 = vadd.f32 %v2300, 1.0
  %v2332 = vadd.f32 %v2302, 1.0
  %v2333 = vadd.f32 %v2304, 1.0
  %v2334 = vadd.f32 %v2306, 1.0
  %v2335 = vadd.f32 %v2308, 1.0
  %v2336 = vadd.f32 %v2310, 1.0
  %v2337 = vadd.f32 %v2312, 1.0
  %v2338 = vadd.f32 %v2314, 1.0
  %v2339 = vadd.f32 %v2316, 1.0
  %v2340 = vadd.f32 %v2318, 1.0
  %v2341 = vadd.f32 %v2320, 1.0
  %v2342 = vadd.f32 %v2322, 1.0
  %v2343 = vadd.f32 %v2324, 1.0
  %v2344 = vadd.f32 %v2326, 1.0
  %v2345 = vadd.f32 %v2328, 1.0
  %v2346 = vadd.f32 %v2330, 1.0
  %v2347 = vrcp.pop %v2331
  %v2348 = vmul.f32 1.0, %v2347
  %v2349 = vrcp.pop %v2332
  %v2350 = vmul.f32 1.0, %v2349
  %v2351 = vrcp.pop %v2333
  %v2352 = vmul.f32 1.0, %v2351
  %v2353 = vrcp.pop %v2334
  %v2354 = vmul.f32 1.0, %v2353
  %v2355 = vrcp.pop %v2335
  %v2356 = vmul.f32 1.0, %v2355
  %v2357 = vrcp.pop %v2336
  %v2358 = vmul.f32 1.0, %v2357
  %v2359 = vrcp.pop %v2337
  %v2360 = vmul.f32 1.0, %v2359
  %v2361 = vrcp.pop %v2338
  %v2362 = vmul.f32 1.0, %v2361
  %v2363 = vrcp.pop %v2339
  %v2364 = vmul.f32 1.0, %v2363
  %v2365 = vrcp.pop %v2340
  %v2366 = vmul.f32 1.0, %v2365
  %v2367 = vrcp.pop %v2341
  %v2368 = vmul.f32 1.0, %v2367
  %v2369 = vrcp.pop %v2342
  %v2370 = vmul.f32 1.0, %v2369
  %v2371 = vrcp.pop %v2343
  %v2372 = vmul.f32 1.0, %v2371
  %v2373 = vrcp.pop %v2344
  %v2374 = vmul.f32 1.0, %v2373
  %v2375 = vrcp.pop %v2345
  %v2376 = vmul.f32 1.0, %v2375
  %v2377 = vrcp.pop %v2346
  %v2378 = vmul.f32 1.0, %v2377
  %v2379 = vmul.f32 %v2267, %v2348
  %v2380 = vmul.f32 %v2268, %v2350
  %v2381 = vmul.f32 %v2269, %v2352
  %v2382 = vmul.f32 %v2270, %v2354
  %v2383 = vmul.f32 %v2271, %v2356
  %v2384 = vmul.f32 %v2272, %v2358
  %v2385 = vmul.f32 %v2273, %v2360
  %v2386 = vmul.f32 %v2274, %v2362
  %v2387 = vmul.f32 %v2275, %v2364
  %v2388 = vmul.f32 %v2276, %v2366
  %v2389 = vmul.f32 %v2277, %v2368
  %v2390 = vmul.f32 %v2278, %v2370
  %v2391 = vmul.f32 %v2279, %v2372
  %v2392 = vmul.f32 %v2280, %v2374
  %v2393 = vmul.f32 %v2281, %v2376
  %v2394 = vmul.f32 %v2282, %v2378
  %v2395 = vlaneseq
  %v2396 = vshrl.u32 %v2395, 7
  %v2397 = vsub.s32 3, %v2396
  %v2398 = vrot.slane %v339, %v2397
  %v2400 = vsel %vm1140, %v2379, 0
  %v2403 = vsel %vm1140, %v2380, 0
  %v2406 = vsel %vm1140, %v2381, 0
  %v2409 = vsel %vm1140, %v2382, 0
  %v2412 = vsel %vm1140, %v2383, 0
  %v2415 = vsel %vm1140, %v2384, 0
  %v2418 = vsel %vm1140, %v2385, 0
  %v2421 = vsel %vm1140, %v2386, 0
  %v2424 = vsel %vm1140, %v2387, 0
  %v2427 = vsel %vm1140, %v2388, 0
  %v2430 = vsel %vm1140, %v2389, 0
  %v2433 = vsel %vm1140, %v2390, 0
  %v2436 = vsel %vm1140, %v2391, 0
  %v2439 = vsel %vm1140, %v2392, 0
  %v2442 = vsel %vm1140, %v2393, 0
  %v2445 = vsel %vm1140, %v2394, 0
  %2447 = vmatprep.subr.mxu0 0.0
  %2448 = vmatpush1.msra.mxu0 0.0
  %2449 = vmatprep.subr.mxu0 0.0
  %2450 = vmatpush1.msra.mxu0 0.0
  %2451 = vmatprep.subr.mxu0 0.0
  %2452 = vmatpush1.msra.mxu0 0.0
  %2453 = vmatprep.subr.mxu0 0.0
  %2454 = vmatpush1.msra.mxu0 0.0
  %2455 = vmatprep.subr.mxu0 0.0
  %2456 = vmatpush1.msra.mxu0 0.0
  %2457 = vmatprep.subr.mxu0 0.0
  %2458 = vmatpush1.msra.mxu0 0.0
  %2459 = vmatprep.subr.mxu0 0.0
  %2460 = vmatpush1.msra.mxu0 0.0
  %2461 = vmatprep.subr.mxu0 0.0
  %2462 = vmatpush1.msra.mxu0 0.0
  %2463 = vmatprep.subr.mxu0 0.0
  %2464 = vmatpush1.msra.mxu0 0.0
  %2465 = vmatprep.subr.mxu0 0.0
  %2466 = vmatpush1.msra.mxu0 0.0
  %2467 = vmatprep.subr.mxu0 0.0
  %2468 = vmatpush1.msra.mxu0 0.0
  %2469 = vmatprep.subr.mxu0 0.0
  %2470 = vmatpush1.msra.mxu0 0.0
  %2471 = vmatprep.subr.mxu0 0.0
  %2472 = vmatpush1.msra.mxu0 %v330
  %2473 = vmatprep.subr.mxu0 0.0
  %2474 = vmatpush1.msra.mxu0 %v329
  %2475 = vmatprep.subr.mxu0 0.0
  %2476 = vmatpush1.msra.mxu0 %v328
  %2477 = vmatprep.subr.mxu0 0.0
  %2478 = vmatpush1.msra.mxu0 %v327
  %2479 = vmatprep.subr.mxu0 0.0
  %2480 = vmatpush2.msra.mxu0 0.0
  %2481 = vmatprep.subr.mxu0 0.0
  %2482 = vmatpush2.msra.mxu0 0.0
  %2483 = vmatprep.subr.mxu0 0.0
  %2484 = vmatpush2.msra.mxu0 0.0
  %2485 = vmatprep.subr.mxu0 0.0
  %2486 = vmatpush2.msra.mxu0 0.0
  %2487 = vmatprep.subr.mxu0 0.0
  %2488 = vmatpush2.msra.mxu0 0.0
  %2489 = vmatprep.subr.mxu0 0.0
  %2490 = vmatpush2.msra.mxu0 0.0
  %2491 = vmatprep.subr.mxu0 0.0
  %2492 = vmatpush2.msra.mxu0 0.0
  %2493 = vmatprep.subr.mxu0 0.0
  %2494 = vmatpush2.msra.mxu0 0.0
  %2495 = vmatprep.subr.mxu0 0.0
  %2496 = vmatpush2.msra.mxu0 0.0
  %2497 = vmatprep.subr.mxu0 0.0
  %2498 = vmatpush2.msra.mxu0 0.0
  %2499 = vmatprep.subr.mxu0 0.0
  %2500 = vmatpush2.msra.mxu0 0.0
  %2501 = vmatprep.subr.mxu0 0.0
  %2502 = vmatpush2.msra.mxu0 0.0
  %2503 = vmatprep.subr.mxu0 0.0
  %2504 = vmatpush2.msra.mxu0 0.0
  %2505 = vmatprep.subr.mxu0 0.0
  %2506 = vmatpush2.msra.mxu0 0.0
  %2507 = vmatprep.subr.mxu0 0.0
  %2508 = vmatpush2.msra.mxu0 0.0
  %2509 = vmatprep.subr.mxu0 0.0
  %2510 = vmatpush2.msra.mxu0 0.0
  %2511 = vmatprep.mubr.f32.mxu0 0.0
  %2512 = vmatmul.mubr.f32.gmra.mxu0 %v2400
  %v2513 = vpop.f32.mrf.mxu0
  %v2514 = vadd.f32 %v2398, %v2513
  %v2515 = vpop.f32.mrf.mxu0
  %2516 = vmatprep.mubr.f32.mxu0 0.0
  %2517 = vmatmul.mubr.f32.gmra.mxu0 %v2403
  %v2518 = vpop.f32.mrf.mxu0
  %v2519 = vadd.f32 %v2398, %v2518
  %v2520 = vpop.f32.mrf.mxu0
  %2521 = vmatprep.mubr.f32.mxu0 0.0
  %2522 = vmatmul.mubr.f32.gmra.mxu0 %v2406
  %v2523 = vpop.f32.mrf.mxu0
  %v2524 = vadd.f32 %v2398, %v2523
  %v2525 = vpop.f32.mrf.mxu0
  %2526 = vmatprep.mubr.f32.mxu0 0.0
  %2527 = vmatmul.mubr.f32.gmra.mxu0 %v2409
  %v2528 = vpop.f32.mrf.mxu0
  %v2529 = vadd.f32 %v2398, %v2528
  %v2530 = vpop.f32.mrf.mxu0
  %2531 = vmatprep.mubr.f32.mxu0 0.0
  %2532 = vmatmul.mubr.f32.gmra.mxu0 %v2412
  %v2533 = vpop.f32.mrf.mxu0
  %v2534 = vadd.f32 %v2398, %v2533
  %v2535 = vpop.f32.mrf.mxu0
  %2536 = vmatprep.mubr.f32.mxu0 0.0
  %2537 = vmatmul.mubr.f32.gmra.mxu0 %v2415
  %v2538 = vpop.f32.mrf.mxu0
  %v2539 = vadd.f32 %v2398, %v2538
  %v2540 = vpop.f32.mrf.mxu0
  %2541 = vmatprep.mubr.f32.mxu0 0.0
  %2542 = vmatmul.mubr.f32.gmra.mxu0 %v2418
  %v2543 = vpop.f32.mrf.mxu0
  %v2544 = vadd.f32 %v2398, %v2543
  %v2545 = vpop.f32.mrf.mxu0
  %2546 = vmatprep.mubr.f32.mxu0 0.0
  %2547 = vmatmul.mubr.f32.gmra.mxu0 %v2421
  %v2548 = vpop.f32.mrf.mxu0
  %v2549 = vadd.f32 %v2398, %v2548
  %v2550 = vpop.f32.mrf.mxu0
  %2551 = vmatprep.mubr.f32.mxu0 0.0
  %2552 = vmatmul.mubr.f32.gmra.mxu0 %v2424
  %v2553 = vpop.f32.mrf.mxu0
  %v2554 = vadd.f32 %v2398, %v2553
  %v2555 = vpop.f32.mrf.mxu0
  %2556 = vmatprep.mubr.f32.mxu0 0.0
  %2557 = vmatmul.mubr.f32.gmra.mxu0 %v2427
  %v2558 = vpop.f32.mrf.mxu0
  %v2559 = vadd.f32 %v2398, %v2558
  %v2560 = vpop.f32.mrf.mxu0
  %2561 = vmatprep.mubr.f32.mxu0 0.0
  %2562 = vmatmul.mubr.f32.gmra.mxu0 %v2430
  %v2563 = vpop.f32.mrf.mxu0
  %v2564 = vadd.f32 %v2398, %v2563
  %v2565 = vpop.f32.mrf.mxu0
  %2566 = vmatprep.mubr.f32.mxu0 0.0
  %2567 = vmatmul.mubr.f32.gmra.mxu0 %v2433
  %v2568 = vpop.f32.mrf.mxu0
  %v2569 = vadd.f32 %v2398, %v2568
  %v2570 = vpop.f32.mrf.mxu0
  %2571 = vmatprep.mubr.f32.mxu0 0.0
  %2572 = vmatmul.mubr.f32.gmra.mxu0 %v2436
  %v2573 = vpop.f32.mrf.mxu0
  %v2574 = vadd.f32 %v2398, %v2573
  %v2575 = vpop.f32.mrf.mxu0
  %2576 = vmatprep.mubr.f32.mxu0 0.0
  %2577 = vmatmul.mubr.f32.gmra.mxu0 %v2439
  %v2578 = vpop.f32.mrf.mxu0
  %v2579 = vadd.f32 %v2398, %v2578
  %v2580 = vpop.f32.mrf.mxu0
  %2581 = vmatprep.mubr.f32.mxu0 0.0
  %2582 = vmatmul.mubr.f32.gmra.mxu0 %v2442
  %v2583 = vpop.f32.mrf.mxu0
  %v2584 = vadd.f32 %v2398, %v2583
  %v2585 = vpop.f32.mrf.mxu0
  %2586 = vmatprep.mubr.f32.mxu0 0.0
  %2587 = vmatmul.mubr.f32.gmra.mxu0 %v2445
  %v2588 = vpop.f32.mrf.mxu0
  %v2589 = vadd.f32 %v2398, %v2588
  %v2590 = vpop.f32.mrf.mxu0
  %2591 = vdwg.mxu0
  %v2592 = vxor.u32 %v2514, 2147483648
  %v2593 = vxor.u32 %v2519, 2147483648
  %v2594 = vxor.u32 %v2524, 2147483648
  %v2595 = vxor.u32 %v2529, 2147483648
  %v2596 = vxor.u32 %v2534, 2147483648
  %v2597 = vxor.u32 %v2539, 2147483648
  %v2598 = vxor.u32 %v2544, 2147483648
  %v2599 = vxor.u32 %v2549, 2147483648
  %v2600 = vxor.u32 %v2554, 2147483648
  %v2601 = vxor.u32 %v2559, 2147483648
  %v2602 = vxor.u32 %v2564, 2147483648
  %v2603 = vxor.u32 %v2569, 2147483648
  %v2604 = vxor.u32 %v2574, 2147483648
  %v2605 = vxor.u32 %v2579, 2147483648
  %v2606 = vxor.u32 %v2584, 2147483648
  %v2607 = vxor.u32 %v2589, 2147483648
  %v2608 = vmul.f32 %v2592, 1.442695
  %v2609 = vpow.pop %v2608
  %v2610 = vmul.f32 %v2593, 1.442695
  %v2611 = vpow.pop %v2610
  %v2612 = vmul.f32 %v2594, 1.442695
  %v2613 = vpow.pop %v2612
  %v2614 = vmul.f32 %v2595, 1.442695
  %v2615 = vpow.pop %v2614
  %v2616 = vmul.f32 %v2596, 1.442695
  %v2617 = vpow.pop %v2616
  %v2618 = vmul.f32 %v2597, 1.442695
  %v2619 = vpow.pop %v2618
  %v2620 = vmul.f32 %v2598, 1.442695
  %v2621 = vpow.pop %v2620
  %v2622 = vmul.f32 %v2599, 1.442695
  %v2623 = vpow.pop %v2622
  %v2624 = vmul.f32 %v2600, 1.442695
  %v2625 = vpow.pop %v2624
  %v2626 = vmul.f32 %v2601, 1.442695
  %v2627 = vpow.pop %v2626
  %v2628 = vmul.f32 %v2602, 1.442695
  %v2629 = vpow.pop %v2628
  %v2630 = vmul.f32 %v2603, 1.442695
  %v2631 = vpow.pop %v2630
  %v2632 = vmul.f32 %v2604, 1.442695
  %v2633 = vpow.pop %v2632
  %v2634 = vmul.f32 %v2605, 1.442695
  %v2635 = vpow.pop %v2634
  %v2636 = vmul.f32 %v2606, 1.442695
  %v2637 = vpow.pop %v2636
  %v2638 = vmul.f32 %v2607, 1.442695
  %v2639 = vpow.pop %v2638
  %v2640 = vadd.f32 %v2609, 1.0
  %v2641 = vadd.f32 %v2611, 1.0
  %v2642 = vadd.f32 %v2613, 1.0
  %v2643 = vadd.f32 %v2615, 1.0
  %v2644 = vadd.f32 %v2617, 1.0
  %v2645 = vadd.f32 %v2619, 1.0
  %v2646 = vadd.f32 %v2621, 1.0
  %v2647 = vadd.f32 %v2623, 1.0
  %v2648 = vadd.f32 %v2625, 1.0
  %v2649 = vadd.f32 %v2627, 1.0
  %v2650 = vadd.f32 %v2629, 1.0
  %v2651 = vadd.f32 %v2631, 1.0
  %v2652 = vadd.f32 %v2633, 1.0
  %v2653 = vadd.f32 %v2635, 1.0
  %v2654 = vadd.f32 %v2637, 1.0
  %v2655 = vadd.f32 %v2639, 1.0
  %v2656 = vrcp.pop %v2640
  %v2657 = vmul.f32 1.0, %v2656
  %v2658 = vrcp.pop %v2641
  %v2659 = vmul.f32 1.0, %v2658
  %v2660 = vrcp.pop %v2642
  %v2661 = vmul.f32 1.0, %v2660
  %v2662 = vrcp.pop %v2643
  %v2663 = vmul.f32 1.0, %v2662
  %v2664 = vrcp.pop %v2644
  %v2665 = vmul.f32 1.0, %v2664
  %v2666 = vrcp.pop %v2645
  %v2667 = vmul.f32 1.0, %v2666
  %v2668 = vrcp.pop %v2646
  %v2669 = vmul.f32 1.0, %v2668
  %v2670 = vrcp.pop %v2647
  %v2671 = vmul.f32 1.0, %v2670
  %v2672 = vrcp.pop %v2648
  %v2673 = vmul.f32 1.0, %v2672
  %v2674 = vrcp.pop %v2649
  %v2675 = vmul.f32 1.0, %v2674
  %v2676 = vrcp.pop %v2650
  %v2677 = vmul.f32 1.0, %v2676
  %v2678 = vrcp.pop %v2651
  %v2679 = vmul.f32 1.0, %v2678
  %v2680 = vrcp.pop %v2652
  %v2681 = vmul.f32 1.0, %v2680
  %v2682 = vrcp.pop %v2653
  %v2683 = vmul.f32 1.0, %v2682
  %v2684 = vrcp.pop %v2654
  %v2685 = vmul.f32 1.0, %v2684
  %v2686 = vrcp.pop %v2655
  %v2687 = vmul.f32 1.0, %v2686
  %v2688 = vmul.f32 %v2514, %v2657
  %v2689 = vmul.f32 %v2519, %v2659
  %v2690 = vmul.f32 %v2524, %v2661
  %v2691 = vmul.f32 %v2529, %v2663
  %v2692 = vmul.f32 %v2534, %v2665
  %v2693 = vmul.f32 %v2539, %v2667
  %v2694 = vmul.f32 %v2544, %v2669
  %v2695 = vmul.f32 %v2549, %v2671
  %v2696 = vmul.f32 %v2554, %v2673
  %v2697 = vmul.f32 %v2559, %v2675
  %v2698 = vmul.f32 %v2564, %v2677
  %v2699 = vmul.f32 %v2569, %v2679
  %v2700 = vmul.f32 %v2574, %v2681
  %v2701 = vmul.f32 %v2579, %v2683
  %v2702 = vmul.f32 %v2584, %v2685
  %v2703 = vmul.f32 %v2589, %v2687
  %v2704 = vld [vmem:[%s9] sm:$0xff]
  %v2705 = vld [vmem:[%s9 + $0x8] sm:$0xff]
  %2707 = vset.pattern.permute.xlu0 0
  %2708 = vperm.xlu0 %2707, %v51
  %v2709 = vpop.permute.xlu0 %2708
  %2712 = vset.pattern.permute.xlu0 0
  %2713 = vperm.xlu0 %2712, %v52
  %v2714 = vpop.permute.xlu0 %2713
  %2717 = vset.pattern.permute.xlu0 0
  %2718 = vperm.xlu0 %2717, %v53
  %v2719 = vpop.permute.xlu0 %2718
  %2722 = vset.pattern.permute.xlu0 0
  %2723 = vperm.xlu0 %2722, %v54
  %v2724 = vpop.permute.xlu0 %2723
  %2727 = vset.pattern.permute.xlu0 0
  %2728 = vperm.xlu0 %2727, %v55
  %v2729 = vpop.permute.xlu0 %2728
  %2732 = vset.pattern.permute.xlu0 0
  %2733 = vperm.xlu0 %2732, %v56
  %v2734 = vpop.permute.xlu0 %2733
  %2737 = vset.pattern.permute.xlu0 0
  %2738 = vperm.xlu0 %2737, %v57
  %v2739 = vpop.permute.xlu0 %2738
  %2742 = vset.pattern.permute.xlu0 0
  %2743 = vperm.xlu0 %2742, %v58
  %v2744 = vpop.permute.xlu0 %2743
  %2747 = vset.pattern.permute.xlu0 0
  %2748 = vperm.xlu0 %2747, %v59
  %v2749 = vpop.permute.xlu0 %2748
  %2752 = vset.pattern.permute.xlu0 0
  %2753 = vperm.xlu0 %2752, %v60
  %v2754 = vpop.permute.xlu0 %2753
  %2757 = vset.pattern.permute.xlu0 0
  %2758 = vperm.xlu0 %2757, %v61
  %v2759 = vpop.permute.xlu0 %2758
  %2762 = vset.pattern.permute.xlu0 0
  %2763 = vperm.xlu0 %2762, %v62
  %v2764 = vpop.permute.xlu0 %2763
  %2767 = vset.pattern.permute.xlu0 0
  %2768 = vperm.xlu0 %2767, %v63
  %v2769 = vpop.permute.xlu0 %2768
  %2772 = vset.pattern.permute.xlu0 0
  %2773 = vperm.xlu0 %2772, %v64
  %v2774 = vpop.permute.xlu0 %2773
  %2777 = vset.pattern.permute.xlu0 0
  %2778 = vperm.xlu0 %2777, %v65
  %v2779 = vpop.permute.xlu0 %2778
  %2782 = vset.pattern.permute.xlu0 0
  %2783 = vperm.xlu0 %2782, %v66
  %v2784 = vpop.permute.xlu0 %2783
  %v2786 = vmul.f32 %v2688, %v2709
  %v2787 = vmul.f32 %v2689, %v2714
  %v2788 = vmul.f32 %v2690, %v2719
  %v2789 = vmul.f32 %v2691, %v2724
  %v2790 = vmul.f32 %v2692, %v2729
  %v2791 = vmul.f32 %v2693, %v2734
  %v2792 = vmul.f32 %v2694, %v2739
  %v2793 = vmul.f32 %v2695, %v2744
  %v2794 = vmul.f32 %v2696, %v2749
  %v2795 = vmul.f32 %v2697, %v2754
  %v2796 = vmul.f32 %v2698, %v2759
  %v2797 = vmul.f32 %v2699, %v2764
  %v2798 = vmul.f32 %v2700, %v2769
  %v2799 = vmul.f32 %v2701, %v2774
  %v2800 = vmul.f32 %v2702, %v2779
  %v2801 = vmul.f32 %v2703, %v2784
  %2802 = vmatprep.subr.mxu0 0.0
  %2803 = vmatpush1.msra.mxu0 %v2801
  %2804 = vmatprep.subr.mxu0 0.0
  %2805 = vmatpush1.msra.mxu0 %v2800
  %2806 = vmatprep.subr.mxu0 0.0
  %2807 = vmatpush1.msra.mxu0 %v2799
  %2808 = vmatprep.subr.mxu0 0.0
  %2809 = vmatpush1.msra.mxu0 %v2798
  %2810 = vmatprep.subr.mxu0 0.0
  %2811 = vmatpush1.msra.mxu0 %v2797
  %2812 = vmatprep.subr.mxu0 0.0
  %2813 = vmatpush1.msra.mxu0 %v2796
  %2814 = vmatprep.subr.mxu0 0.0
  %2815 = vmatpush1.msra.mxu0 %v2795
  %2816 = vmatprep.subr.mxu0 0.0
  %2817 = vmatpush1.msra.mxu0 %v2794
  %2818 = vmatprep.subr.mxu0 0.0
  %2819 = vmatpush1.msra.mxu0 %v2793
  %2820 = vmatprep.subr.mxu0 0.0
  %2821 = vmatpush1.msra.mxu0 %v2792
  %2822 = vmatprep.subr.mxu0 0.0
  %2823 = vmatpush1.msra.mxu0 %v2791
  %2824 = vmatprep.subr.mxu0 0.0
  %2825 = vmatpush1.msra.mxu0 %v2790
  %2826 = vmatprep.subr.mxu0 0.0
  %2827 = vmatpush1.msra.mxu0 %v2789
  %2828 = vmatprep.subr.mxu0 0.0
  %2829 = vmatpush1.msra.mxu0 %v2788
  %2830 = vmatprep.subr.mxu0 0.0
  %2831 = vmatpush1.msra.mxu0 %v2787
  %2832 = vmatprep.subr.mxu0 0.0
  %2833 = vmatpush1.msra.mxu0 %v2786
  %2834 = vmatprep.subr.mxu0 0.0
  %2835 = vmatpush2.msra.mxu0 0.0
  %2836 = vmatprep.subr.mxu0 0.0
  %2837 = vmatpush2.msra.mxu0 0.0
  %2838 = vmatprep.subr.mxu0 0.0
  %2839 = vmatpush2.msra.mxu0 0.0
  %2840 = vmatprep.subr.mxu0 0.0
  %2841 = vmatpush2.msra.mxu0 0.0
  %2842 = vmatprep.subr.mxu0 0.0
  %2843 = vmatpush2.msra.mxu0 0.0
  %2844 = vmatprep.subr.mxu0 0.0
  %2845 = vmatpush2.msra.mxu0 0.0
  %2846 = vmatprep.subr.mxu0 0.0
  %2847 = vmatpush2.msra.mxu0 0.0
  %2848 = vmatprep.subr.mxu0 0.0
  %2849 = vmatpush2.msra.mxu0 0.0
  %2850 = vmatprep.subr.mxu0 0.0
  %2851 = vmatpush2.msra.mxu0 0.0
  %2852 = vmatprep.subr.mxu0 0.0
  %2853 = vmatpush2.msra.mxu0 0.0
  %2854 = vmatprep.subr.mxu0 0.0
  %2855 = vmatpush2.msra.mxu0 0.0
  %2856 = vmatprep.subr.mxu0 0.0
  %2857 = vmatpush2.msra.mxu0 0.0
  %2858 = vmatprep.subr.mxu0 0.0
  %2859 = vmatpush2.msra.mxu0 0.0
  %2860 = vmatprep.subr.mxu0 0.0
  %2861 = vmatpush2.msra.mxu0 0.0
  %2862 = vmatprep.subr.mxu0 0.0
  %2863 = vmatpush2.msra.mxu0 0.0
  %2864 = vmatprep.subr.mxu0 0.0
  %2865 = vmatpush2.msra.mxu0 0.0
  %2866 = vmatprep.mubr.f32.mxu0 0.0
  %2867 = vmatmul.mubr.f32.gmra.mxu0 %v2704
  %v2868 = vpop.f32.mrf.mxu0
  %v2869 = vadd.f32 0.0, %v2868
  %v2870 = vpop.f32.mrf.mxu0
  %2871 = vmatprep.mubr.f32.mxu0 0.0
  %2872 = vmatmul.mubr.f32.gmra.mxu0 %v2705
  %v2873 = vpop.f32.mrf.mxu0
  %v2874 = vadd.f32 0.0, %v2873
  %v2875 = vpop.f32.mrf.mxu0
  %2876 = vdwg.mxu0
  %2881 = vrot.lane.b32.xlu0 %v331, 96
  %v2882 = vpop.permute.xlu0 %2881
  %2883 = vrot.lane.b32.xlu0 %v332, 96
  %v2884 = vpop.permute.xlu0 %2883
  %2885 = vrot.lane.b32.xlu0 %v333, 96
  %v2886 = vpop.permute.xlu0 %2885
  %2887 = vrot.lane.b32.xlu0 %v334, 96
  %v2888 = vpop.permute.xlu0 %2887
  %v2894 = vsel %vm1140, %v2869, 0
  %v2897 = vsel %vm1140, %v2874, 0
  %2899 = vmatprep.subr.mxu0 0.0
  %2900 = vmatpush1.msra.mxu0 0.0
  %2901 = vmatprep.subr.mxu0 0.0
  %2902 = vmatpush1.msra.mxu0 0.0
  %2903 = vmatprep.subr.mxu0 0.0
  %2904 = vmatpush1.msra.mxu0 0.0
  %2905 = vmatprep.subr.mxu0 0.0
  %2906 = vmatpush1.msra.mxu0 0.0
  %2907 = vmatprep.subr.mxu0 0.0
  %2908 = vmatpush1.msra.mxu0 0.0
  %2909 = vmatprep.subr.mxu0 0.0
  %2910 = vmatpush1.msra.mxu0 0.0
  %2911 = vmatprep.subr.mxu0 0.0
  %2912 = vmatpush1.msra.mxu0 0.0
  %2913 = vmatprep.subr.mxu0 0.0
  %2914 = vmatpush1.msra.mxu0 0.0
  %2915 = vmatprep.subr.mxu0 0.0
  %2916 = vmatpush1.msra.mxu0 0.0
  %2917 = vmatprep.subr.mxu0 0.0
  %2918 = vmatpush1.msra.mxu0 0.0
  %2919 = vmatprep.subr.mxu0 0.0
  %2920 = vmatpush1.msra.mxu0 0.0
  %2921 = vmatprep.subr.mxu0 0.0
  %2922 = vmatpush1.msra.mxu0 0.0
  %2923 = vmatprep.subr.mxu0 0.0
  %2924 = vmatpush1.msra.mxu0 %v2888
  %2925 = vmatprep.subr.mxu0 0.0
  %2926 = vmatpush1.msra.mxu0 %v2886
  %2927 = vmatprep.subr.mxu0 0.0
  %2928 = vmatpush1.msra.mxu0 %v2884
  %2929 = vmatprep.subr.mxu0 0.0
  %2930 = vmatpush1.msra.mxu0 %v2882
  %2931 = vmatprep.subr.mxu0 0.0
  %2932 = vmatpush2.msra.mxu0 0.0
  %2933 = vmatprep.subr.mxu0 0.0
  %2934 = vmatpush2.msra.mxu0 0.0
  %2935 = vmatprep.subr.mxu0 0.0
  %2936 = vmatpush2.msra.mxu0 0.0
  %2937 = vmatprep.subr.mxu0 0.0
  %2938 = vmatpush2.msra.mxu0 0.0
  %2939 = vmatprep.subr.mxu0 0.0
  %2940 = vmatpush2.msra.mxu0 0.0
  %2941 = vmatprep.subr.mxu0 0.0
  %2942 = vmatpush2.msra.mxu0 0.0
  %2943 = vmatprep.subr.mxu0 0.0
  %2944 = vmatpush2.msra.mxu0 0.0
  %2945 = vmatprep.subr.mxu0 0.0
  %2946 = vmatpush2.msra.mxu0 0.0
  %2947 = vmatprep.subr.mxu0 0.0
  %2948 = vmatpush2.msra.mxu0 0.0
  %2949 = vmatprep.subr.mxu0 0.0
  %2950 = vmatpush2.msra.mxu0 0.0
  %2951 = vmatprep.subr.mxu0 0.0
  %2952 = vmatpush2.msra.mxu0 0.0
  %2953 = vmatprep.subr.mxu0 0.0
  %2954 = vmatpush2.msra.mxu0 0.0
  %2955 = vmatprep.subr.mxu0 0.0
  %2956 = vmatpush2.msra.mxu0 0.0
  %2957 = vmatprep.subr.mxu0 0.0
  %2958 = vmatpush2.msra.mxu0 0.0
  %2959 = vmatprep.subr.mxu0 0.0
  %2960 = vmatpush2.msra.mxu0 0.0
  %2961 = vmatprep.subr.mxu0 0.0
  %2962 = vmatpush2.msra.mxu0 0.0
  %2963 = vmatprep.mubr.f32.mxu0 0.0
  %2964 = vmatmul.mubr.f32.gmra.mxu0 %v2894
  %v2965 = vpop.f32.mrf.mxu0
  %v2966 = vadd.f32 0.0, %v2965
  %v2967 = vpop.f32.mrf.mxu0
  %2968 = vmatprep.mubr.f32.mxu0 0.0
  %2969 = vmatmul.mubr.f32.gmra.mxu0 %v2897
  %v2970 = vpop.f32.mrf.mxu0
  %v2971 = vadd.f32 0.0, %v2970
  %v2972 = vpop.f32.mrf.mxu0
  %2973 = vdwg.mxu0
  %2974 = vmatprep.subr.mxu0 0.0
  %2975 = vmatpush1.msra.mxu0 0.0
  %2976 = vmatprep.subr.mxu0 0.0
  %2977 = vmatpush1.msra.mxu0 0.0
  %2978 = vmatprep.subr.mxu0 0.0
  %2979 = vmatpush1.msra.mxu0 0.0
  %2980 = vmatprep.subr.mxu0 0.0
  %2981 = vmatpush1.msra.mxu0 0.0
  %2982 = vmatprep.subr.mxu0 0.0
  %2983 = vmatpush1.msra.mxu0 0.0
  %2984 = vmatprep.subr.mxu0 0.0
  %2985 = vmatpush1.msra.mxu0 0.0
  %2986 = vmatprep.subr.mxu0 0.0
  %2987 = vmatpush1.msra.mxu0 0.0
  %2988 = vmatprep.subr.mxu0 0.0
  %2989 = vmatpush1.msra.mxu0 0.0
  %2990 = vmatprep.subr.mxu0 0.0
  %2991 = vmatpush1.msra.mxu0 0.0
  %2992 = vmatprep.subr.mxu0 0.0
  %2993 = vmatpush1.msra.mxu0 0.0
  %2994 = vmatprep.subr.mxu0 0.0
  %2995 = vmatpush1.msra.mxu0 0.0
  %2996 = vmatprep.subr.mxu0 0.0
  %2997 = vmatpush1.msra.mxu0 0.0
  %2998 = vmatprep.subr.mxu0 0.0
  %2999 = vmatpush1.msra.mxu0 %v334
  %3000 = vmatprep.subr.mxu0 0.0
  %3001 = vmatpush1.msra.mxu0 %v333
  %3002 = vmatprep.subr.mxu0 0.0
  %3003 = vmatpush1.msra.mxu0 %v332
  %3004 = vmatprep.subr.mxu0 0.0
  %3005 = vmatpush1.msra.mxu0 %v331
  %3006 = vmatprep.subr.mxu0 0.0
  %3007 = vmatpush2.msra.mxu0 0.0
  %3008 = vmatprep.subr.mxu0 0.0
  %3009 = vmatpush2.msra.mxu0 0.0
  %3010 = vmatprep.subr.mxu0 0.0
  %3011 = vmatpush2.msra.mxu0 0.0
  %3012 = vmatprep.subr.mxu0 0.0
  %3013 = vmatpush2.msra.mxu0 0.0
  %3014 = vmatprep.subr.mxu0 0.0
  %3015 = vmatpush2.msra.mxu0 0.0
  %3016 = vmatprep.subr.mxu0 0.0
  %3017 = vmatpush2.msra.mxu0 0.0
  %3018 = vmatprep.subr.mxu0 0.0
  %3019 = vmatpush2.msra.mxu0 0.0
  %3020 = vmatprep.subr.mxu0 0.0
  %3021 = vmatpush2.msra.mxu0 0.0
  %3022 = vmatprep.subr.mxu0 0.0
  %3023 = vmatpush2.msra.mxu0 0.0
  %3024 = vmatprep.subr.mxu0 0.0
  %3025 = vmatpush2.msra.mxu0 0.0
  %3026 = vmatprep.subr.mxu0 0.0
  %3027 = vmatpush2.msra.mxu0 0.0
  %3028 = vmatprep.subr.mxu0 0.0
  %3029 = vmatpush2.msra.mxu0 0.0
  %3030 = vmatprep.subr.mxu0 0.0
  %3031 = vmatpush2.msra.mxu0 0.0
  %3032 = vmatprep.subr.mxu0 0.0
  %3033 = vmatpush2.msra.mxu0 0.0
  %3034 = vmatprep.subr.mxu0 0.0
  %3035 = vmatpush2.msra.mxu0 0.0
  %3036 = vmatprep.subr.mxu0 0.0
  %3037 = vmatpush2.msra.mxu0 0.0
  %3038 = vmatprep.mubr.f32.mxu0 0.0
  %3039 = vmatmul.mubr.f32.gmra.mxu0 %v1772
  %v3040 = vpop.f32.mrf.mxu0
  %v3041 = vadd.f32 %v2966, %v3040
  %v3042 = vpop.f32.mrf.mxu0
  %3043 = vmatprep.mubr.f32.mxu0 0.0
  %3044 = vmatmul.mubr.f32.gmra.mxu0 %v1775
  %v3045 = vpop.f32.mrf.mxu0
  %v3046 = vadd.f32 %v2971, %v3045
  %v3047 = vpop.f32.mrf.mxu0
  %3048 = vdwg.mxu0
  %v3049 = vlaneseq
  %v3050 = vshrl.u32 %v3049, 7
  %v3051 = vsub.s32 4, %v3050
  %v3052 = vrot.slane %v339, %v3051
  %v3053 = vadd.f32 %v3041, %v3052
  %v3054 = vadd.f32 %v3046, %v3052
  %v3055 = vxor.u32 %v3053, 2147483648
  %v3056 = vxor.u32 %v3054, 2147483648
  %v3057 = vmul.f32 %v3055, 1.442695
  %v3058 = vpow.pop %v3057
  %v3059 = vmul.f32 %v3056, 1.442695
  %v3060 = vpow.pop %v3059
  %v3061 = vadd.f32 %v3058, 1.0
  %v3062 = vadd.f32 %v3060, 1.0
  %v3063 = vrcp.pop %v3061
  %v3064 = vmul.f32 1.0, %v3063
  %v3065 = vrcp.pop %v3062
  %v3066 = vmul.f32 1.0, %v3065
  %v3067 = vmul.f32 %v3053, %v3064
  %v3068 = vmul.f32 %v3054, %v3066
  %v3069 = vlaneseq
  %v3070 = vshrl.u32 %v3069, 7
  %v3071 = vsub.s32 5, %v3070
  %v3072 = vrot.slane %v339, %v3071
  %3077 = vrot.lane.b32.xlu0 %v327, 96
  %v3078 = vpop.permute.xlu0 %3077
  %3079 = vrot.lane.b32.xlu0 %v328, 96
  %v3080 = vpop.permute.xlu0 %3079
  %3081 = vrot.lane.b32.xlu0 %v329, 96
  %v3082 = vpop.permute.xlu0 %3081
  %3083 = vrot.lane.b32.xlu0 %v330, 96
  %v3084 = vpop.permute.xlu0 %3083
  %v3090 = vsel %vm1140, %v3067, 0
  %v3093 = vsel %vm1140, %v3068, 0
  %3095 = vmatprep.subr.mxu0 0.0
  %3096 = vmatpush1.msra.mxu0 0.0
  %3097 = vmatprep.subr.mxu0 0.0
  %3098 = vmatpush1.msra.mxu0 0.0
  %3099 = vmatprep.subr.mxu0 0.0
  %3100 = vmatpush1.msra.mxu0 0.0
  %3101 = vmatprep.subr.mxu0 0.0
  %3102 = vmatpush1.msra.mxu0 0.0
  %3103 = vmatprep.subr.mxu0 0.0
  %3104 = vmatpush1.msra.mxu0 0.0
  %3105 = vmatprep.subr.mxu0 0.0
  %3106 = vmatpush1.msra.mxu0 0.0
  %3107 = vmatprep.subr.mxu0 0.0
  %3108 = vmatpush1.msra.mxu0 0.0
  %3109 = vmatprep.subr.mxu0 0.0
  %3110 = vmatpush1.msra.mxu0 0.0
  %3111 = vmatprep.subr.mxu0 0.0
  %3112 = vmatpush1.msra.mxu0 0.0
  %3113 = vmatprep.subr.mxu0 0.0
  %3114 = vmatpush1.msra.mxu0 0.0
  %3115 = vmatprep.subr.mxu0 0.0
  %3116 = vmatpush1.msra.mxu0 0.0
  %3117 = vmatprep.subr.mxu0 0.0
  %3118 = vmatpush1.msra.mxu0 0.0
  %3119 = vmatprep.subr.mxu0 0.0
  %3120 = vmatpush1.msra.mxu0 %v3084
  %3121 = vmatprep.subr.mxu0 0.0
  %3122 = vmatpush1.msra.mxu0 %v3082
  %3123 = vmatprep.subr.mxu0 0.0
  %3124 = vmatpush1.msra.mxu0 %v3080
  %3125 = vmatprep.subr.mxu0 0.0
  %3126 = vmatpush1.msra.mxu0 %v3078
  %3127 = vmatprep.subr.mxu0 0.0
  %3128 = vmatpush2.msra.mxu0 0.0
  %3129 = vmatprep.subr.mxu0 0.0
  %3130 = vmatpush2.msra.mxu0 0.0
  %3131 = vmatprep.subr.mxu0 0.0
  %3132 = vmatpush2.msra.mxu0 0.0
  %3133 = vmatprep.subr.mxu0 0.0
  %3134 = vmatpush2.msra.mxu0 0.0
  %3135 = vmatprep.subr.mxu0 0.0
  %3136 = vmatpush2.msra.mxu0 0.0
  %3137 = vmatprep.subr.mxu0 0.0
  %3138 = vmatpush2.msra.mxu0 0.0
  %3139 = vmatprep.subr.mxu0 0.0
  %3140 = vmatpush2.msra.mxu0 0.0
  %3141 = vmatprep.subr.mxu0 0.0
  %3142 = vmatpush2.msra.mxu0 0.0
  %3143 = vmatprep.subr.mxu0 0.0
  %3144 = vmatpush2.msra.mxu0 0.0
  %3145 = vmatprep.subr.mxu0 0.0
  %3146 = vmatpush2.msra.mxu0 0.0
  %3147 = vmatprep.subr.mxu0 0.0
  %3148 = vmatpush2.msra.mxu0 0.0
  %3149 = vmatprep.subr.mxu0 0.0
  %3150 = vmatpush2.msra.mxu0 0.0
  %3151 = vmatprep.subr.mxu0 0.0
  %3152 = vmatpush2.msra.mxu0 0.0
  %3153 = vmatprep.subr.mxu0 0.0
  %3154 = vmatpush2.msra.mxu0 0.0
  %3155 = vmatprep.subr.mxu0 0.0
  %3156 = vmatpush2.msra.mxu0 0.0
  %3157 = vmatprep.subr.mxu0 0.0
  %3158 = vmatpush2.msra.mxu0 0.0
  %3159 = vmatprep.mubr.f32.mxu0 0.0
  %3160 = vmatmul.mubr.f32.gmra.mxu0 %v3090
  %v3161 = vpop.f32.mrf.mxu0
  %v3162 = vadd.f32 %v3072, %v3161
  %v3163 = vpop.f32.mrf.mxu0
  %3164 = vmatprep.mubr.f32.mxu0 0.0
  %3165 = vmatmul.mubr.f32.gmra.mxu0 %v3093
  %v3166 = vpop.f32.mrf.mxu0
  %v3167 = vadd.f32 %v3072, %v3166
  %v3168 = vpop.f32.mrf.mxu0
  %3169 = vdwg.mxu0
  %v3170 = vxor.u32 %v3162, 2147483648
  %v3171 = vxor.u32 %v3167, 2147483648
  %v3172 = vmul.f32 %v3170, 1.442695
  %v3173 = vpow.pop %v3172
  %v3174 = vmul.f32 %v3171, 1.442695
  %v3175 = vpow.pop %v3174
  %v3176 = vadd.f32 %v3173, 1.0
  %v3177 = vadd.f32 %v3175, 1.0
  %v3178 = vrcp.pop %v3176
  %v3179 = vmul.f32 1.0, %v3178
  %v3180 = vrcp.pop %v3177
  %v3181 = vmul.f32 1.0, %v3180
  %v3182 = vmul.f32 %v3162, %v3179
  %v3183 = vmul.f32 %v3167, %v3181
  %v3185 = vsel %vm1140, %v3182, 0
  %v3188 = vsel %vm1140, %v3183, 0
  %3190 = vmatprep.subr.mxu0 0.0
  %3191 = vmatpush1.msra.mxu0 0.0
  %3192 = vmatprep.subr.mxu0 0.0
  %3193 = vmatpush1.msra.mxu0 0.0
  %3194 = vmatprep.subr.mxu0 0.0
  %3195 = vmatpush1.msra.mxu0 0.0
  %3196 = vmatprep.subr.mxu0 0.0
  %3197 = vmatpush1.msra.mxu0 0.0
  %3198 = vmatprep.subr.mxu0 0.0
  %3199 = vmatpush1.msra.mxu0 0.0
  %3200 = vmatprep.subr.mxu0 0.0
  %3201 = vmatpush1.msra.mxu0 0.0
  %3202 = vmatprep.subr.mxu0 0.0
  %3203 = vmatpush1.msra.mxu0 0.0
  %3204 = vmatprep.subr.mxu0 0.0
  %3205 = vmatpush1.msra.mxu0 0.0
  %3206 = vmatprep.subr.mxu0 0.0
  %3207 = vmatpush1.msra.mxu0 0.0
  %3208 = vmatprep.subr.mxu0 0.0
  %3209 = vmatpush1.msra.mxu0 0.0
  %3210 = vmatprep.subr.mxu0 0.0
  %3211 = vmatpush1.msra.mxu0 0.0
  %3212 = vmatprep.subr.mxu0 0.0
  %3213 = vmatpush1.msra.mxu0 0.0
  %3214 = vmatprep.subr.mxu0 0.0
  %3215 = vmatpush1.msra.mxu0 %v322
  %3216 = vmatprep.subr.mxu0 0.0
  %3217 = vmatpush1.msra.mxu0 %v321
  %3218 = vmatprep.subr.mxu0 0.0
  %3219 = vmatpush1.msra.mxu0 %v320
  %3220 = vmatprep.subr.mxu0 0.0
  %3221 = vmatpush1.msra.mxu0 %v319
  %3222 = vmatprep.subr.mxu0 0.0
  %3223 = vmatpush2.msra.mxu0 0.0
  %3224 = vmatprep.subr.mxu0 0.0
  %3225 = vmatpush2.msra.mxu0 0.0
  %3226 = vmatprep.subr.mxu0 0.0
  %3227 = vmatpush2.msra.mxu0 0.0
  %3228 = vmatprep.subr.mxu0 0.0
  %3229 = vmatpush2.msra.mxu0 0.0
  %3230 = vmatprep.subr.mxu0 0.0
  %3231 = vmatpush2.msra.mxu0 0.0
  %3232 = vmatprep.subr.mxu0 0.0
  %3233 = vmatpush2.msra.mxu0 0.0
  %3234 = vmatprep.subr.mxu0 0.0
  %3235 = vmatpush2.msra.mxu0 0.0
  %3236 = vmatprep.subr.mxu0 0.0
  %3237 = vmatpush2.msra.mxu0 0.0
  %3238 = vmatprep.subr.mxu0 0.0
  %3239 = vmatpush2.msra.mxu0 0.0
  %3240 = vmatprep.subr.mxu0 0.0
  %3241 = vmatpush2.msra.mxu0 0.0
  %3242 = vmatprep.subr.mxu0 0.0
  %3243 = vmatpush2.msra.mxu0 0.0
  %3244 = vmatprep.subr.mxu0 0.0
  %3245 = vmatpush2.msra.mxu0 0.0
  %3246 = vmatprep.subr.mxu0 0.0
  %3247 = vmatpush2.msra.mxu0 0.0
  %3248 = vmatprep.subr.mxu0 0.0
  %3249 = vmatpush2.msra.mxu0 0.0
  %3250 = vmatprep.subr.mxu0 0.0
  %3251 = vmatpush2.msra.mxu0 0.0
  %3252 = vmatprep.subr.mxu0 0.0
  %3253 = vmatpush2.msra.mxu0 0.0
  %3254 = vmatprep.mubr.f32.mxu0 0.0
  %3255 = vmatmul.mubr.f32.gmra.mxu0 %v3185
  %v3256 = vpop.f32.mrf.mxu0
  %v3257 = vadd.f32 0.0, %v3256
  %v3258 = vpop.f32.mrf.mxu0
  %3259 = vmatprep.mubr.f32.mxu0 0.0
  %3260 = vmatmul.mubr.f32.gmra.mxu0 %v3188
  %v3261 = vpop.f32.mrf.mxu0
  %v3262 = vadd.f32 0.0, %v3261
  %v3263 = vpop.f32.mrf.mxu0
  %3264 = vdwg.mxu0
  %v3266 = vcombine.high %v3257, %v3257
  %v3268 = vunpack.c.l.s4 1966171168
  %v3269 = vunpack.c.0.s8 %v3268
  %v3270 = vlaneseq
  %v3271 = vshrl.u32 %v3270, 7
  %v3272 = vsub.s32 %v3269, %v3271
  %v3273 = vrot.slane %v3257, %v3272
  %v3275 = vunpack.c.l.s4 1966171168
  %v3276 = vunpack.c.0.s8 %v3275
  %v3277 = vlaneseq
  %v3278 = vshrl.u32 %v3277, 7
  %v3279 = vsub.s32 %v3276, %v3278
  %v3280 = vrot.slane %v3266, %v3279
  %v3281 = vcombine.high %v3273, %v3273
  %v3282 = vcombine.high %v3280, %v3280
  %v3284 = vunpack.c.l.s4 1966171168
  %v3285 = vunpack.c.0.s8 %v3284
  %v3286 = vlaneseq
  %v3287 = vshrl.u32 %v3286, 7
  %v3288 = vsub.s32 %v3285, %v3287
  %v3289 = vrot.slane %v3273, %v3288
  %v3291 = vunpack.c.l.s4 1966171168
  %v3292 = vunpack.c.0.s8 %v3291
  %v3293 = vlaneseq
  %v3294 = vshrl.u32 %v3293, 7
  %v3295 = vsub.s32 %v3292, %v3294
  %v3296 = vrot.slane %v3280, %v3295
  %v3298 = vunpack.c.l.s4 1966171168
  %v3299 = vunpack.c.0.s8 %v3298
  %v3300 = vlaneseq
  %v3301 = vshrl.u32 %v3300, 7
  %v3302 = vsub.s32 %v3299, %v3301
  %v3303 = vrot.slane %v3281, %v3302
  %v3305 = vunpack.c.l.s4 1966171168
  %v3306 = vunpack.c.0.s8 %v3305
  %v3307 = vlaneseq
  %v3308 = vshrl.u32 %v3307, 7
  %v3309 = vsub.s32 %v3306, %v3308
  %v3310 = vrot.slane %v3282, %v3309
  %v3311 = vcombine.high %v3289, %v3289
  %v3312 = vcombine.high %v3296, %v3296
  %v3313 = vcombine.high %v3303, %v3303
  %v3314 = vcombine.high %v3310, %v3310
  %v3315 = vlaneseq
  %v3316 = vshrl.u32 %v3315, 7
  %v3317 = vsub.s32 0, %v3316
  %v3318 = vrot.slane %v3289, %v3317
  %v3319 = vlaneseq
  %v3320 = vshrl.u32 %v3319, 7
  %v3321 = vsub.s32 0, %v3320
  %v3322 = vrot.slane %v3303, %v3321
  %v3323 = vlaneseq
  %v3324 = vshrl.u32 %v3323, 7
  %v3325 = vsub.s32 0, %v3324
  %v3326 = vrot.slane %v3311, %v3325
  %v3327 = vlaneseq
  %v3328 = vshrl.u32 %v3327, 7
  %v3329 = vsub.s32 0, %v3328
  %v3330 = vrot.slane %v3313, %v3329
  %v3331 = vlaneseq
  %v3332 = vshrl.u32 %v3331, 7
  %v3333 = vsub.s32 0, %v3332
  %v3334 = vrot.slane %v3296, %v3333
  %v3335 = vlaneseq
  %v3336 = vshrl.u32 %v3335, 7
  %v3337 = vsub.s32 0, %v3336
  %v3338 = vrot.slane %v3310, %v3337
  %v3339 = vlaneseq
  %v3340 = vshrl.u32 %v3339, 7
  %v3341 = vsub.s32 0, %v3340
  %v3342 = vrot.slane %v3312, %v3341
  %v3343 = vlaneseq
  %v3344 = vshrl.u32 %v3343, 7
  %v3345 = vsub.s32 0, %v3344
  %v3346 = vrot.slane %v3314, %v3345
  %3347 = vrot.lane.b32.xlu0 %v3318, 32
  %v3348 = vpop.permute.xlu0 %3347
  %3349 = vrot.lane.b32.xlu0 %v3322, 32
  %v3350 = vpop.permute.xlu0 %3349
  %3351 = vrot.lane.b32.xlu0 %v3326, 32
  %v3352 = vpop.permute.xlu0 %3351
  %3353 = vrot.lane.b32.xlu0 %v3330, 32
  %v3354 = vpop.permute.xlu0 %3353
  %3355 = vrot.lane.b32.xlu0 %v3334, 32
  %v3356 = vpop.permute.xlu0 %3355
  %3357 = vrot.lane.b32.xlu0 %v3338, 32
  %v3358 = vpop.permute.xlu0 %3357
  %3359 = vrot.lane.b32.xlu0 %v3342, 32
  %v3360 = vpop.permute.xlu0 %3359
  %3361 = vrot.lane.b32.xlu0 %v3346, 32
  %v3362 = vpop.permute.xlu0 %3361
  %v3371 = vadd.f32 %v1967, %v3348
  %v3372 = vadd.f32 %v1972, %v3350
  %v3373 = vadd.f32 %v1977, %v3352
  %v3374 = vadd.f32 %v1982, %v3354
  %v3375 = vadd.f32 %v1987, %v3356
  %v3376 = vadd.f32 %v1992, %v3358
  %v3377 = vadd.f32 %v1997, %v3360
  %v3378 = vadd.f32 %v2002, %v3362
  %v3379 = vadd.f32 %v3371, %v3257
  %v3380 = vadd.f32 %v3372, %v3257
  %v3381 = vadd.f32 %v3373, %v3257
  %v3382 = vadd.f32 %v3374, %v3257
  %v3383 = vadd.f32 %v3375, %v3257
  %v3384 = vadd.f32 %v3376, %v3257
  %v3385 = vadd.f32 %v3377, %v3257
  %v3386 = vadd.f32 %v3378, %v3257
  %v3388 = vcombine.high %v3262, %v3262
  %v3390 = vunpack.c.l.s4 1966171168
  %v3391 = vunpack.c.0.s8 %v3390
  %v3392 = vlaneseq
  %v3393 = vshrl.u32 %v3392, 7
  %v3394 = vsub.s32 %v3391, %v3393
  %v3395 = vrot.slane %v3262, %v3394
  %v3397 = vunpack.c.l.s4 1966171168
  %v3398 = vunpack.c.0.s8 %v3397
  %v3399 = vlaneseq
  %v3400 = vshrl.u32 %v3399, 7
  %v3401 = vsub.s32 %v3398, %v3400
  %v3402 = vrot.slane %v3388, %v3401
  %v3403 = vcombine.high %v3395, %v3395
  %v3404 = vcombine.high %v3402, %v3402
  %v3406 = vunpack.c.l.s4 1966171168
  %v3407 = vunpack.c.0.s8 %v3406
  %v3408 = vlaneseq
  %v3409 = vshrl.u32 %v3408, 7
  %v3410 = vsub.s32 %v3407, %v3409
  %v3411 = vrot.slane %v3395, %v3410
  %v3413 = vunpack.c.l.s4 1966171168
  %v3414 = vunpack.c.0.s8 %v3413
  %v3415 = vlaneseq
  %v3416 = vshrl.u32 %v3415, 7
  %v3417 = vsub.s32 %v3414, %v3416
  %v3418 = vrot.slane %v3402, %v3417
  %v3420 = vunpack.c.l.s4 1966171168
  %v3421 = vunpack.c.0.s8 %v3420
  %v3422 = vlaneseq
  %v3423 = vshrl.u32 %v3422, 7
  %v3424 = vsub.s32 %v3421, %v3423
  %v3425 = vrot.slane %v3403, %v3424
  %v3427 = vunpack.c.l.s4 1966171168
  %v3428 = vunpack.c.0.s8 %v3427
  %v3429 = vlaneseq
  %v3430 = vshrl.u32 %v3429, 7
  %v3431 = vsub.s32 %v3428, %v3430
  %v3432 = vrot.slane %v3404, %v3431
  %v3433 = vcombine.high %v3411, %v3411
  %v3434 = vcombine.high %v3418, %v3418
  %v3435 = vcombine.high %v3425, %v3425
  %v3436 = vcombine.high %v3432, %v3432
  %v3437 = vlaneseq
  %v3438 = vshrl.u32 %v3437, 7
  %v3439 = vsub.s32 0, %v3438
  %v3440 = vrot.slane %v3411, %v3439
  %v3441 = vlaneseq
  %v3442 = vshrl.u32 %v3441, 7
  %v3443 = vsub.s32 0, %v3442
  %v3444 = vrot.slane %v3425, %v3443
  %v3445 = vlaneseq
  %v3446 = vshrl.u32 %v3445, 7
  %v3447 = vsub.s32 0, %v3446
  %v3448 = vrot.slane %v3433, %v3447
  %v3449 = vlaneseq
  %v3450 = vshrl.u32 %v3449, 7
  %v3451 = vsub.s32 0, %v3450
  %v3452 = vrot.slane %v3435, %v3451
  %v3453 = vlaneseq
  %v3454 = vshrl.u32 %v3453, 7
  %v3455 = vsub.s32 0, %v3454
  %v3456 = vrot.slane %v3418, %v3455
  %v3457 = vlaneseq
  %v3458 = vshrl.u32 %v3457, 7
  %v3459 = vsub.s32 0, %v3458
  %v3460 = vrot.slane %v3432, %v3459
  %v3461 = vlaneseq
  %v3462 = vshrl.u32 %v3461, 7
  %v3463 = vsub.s32 0, %v3462
  %v3464 = vrot.slane %v3434, %v3463
  %v3465 = vlaneseq
  %v3466 = vshrl.u32 %v3465, 7
  %v3467 = vsub.s32 0, %v3466
  %v3468 = vrot.slane %v3436, %v3467
  %3469 = vrot.lane.b32.xlu0 %v3440, 32
  %v3470 = vpop.permute.xlu0 %3469
  %3471 = vrot.lane.b32.xlu0 %v3444, 32
  %v3472 = vpop.permute.xlu0 %3471
  %3473 = vrot.lane.b32.xlu0 %v3448, 32
  %v3474 = vpop.permute.xlu0 %3473
  %3475 = vrot.lane.b32.xlu0 %v3452, 32
  %v3476 = vpop.permute.xlu0 %3475
  %3477 = vrot.lane.b32.xlu0 %v3456, 32
  %v3478 = vpop.permute.xlu0 %3477
  %3479 = vrot.lane.b32.xlu0 %v3460, 32
  %v3480 = vpop.permute.xlu0 %3479
  %3481 = vrot.lane.b32.xlu0 %v3464, 32
  %v3482 = vpop.permute.xlu0 %3481
  %3483 = vrot.lane.b32.xlu0 %v3468, 32
  %v3484 = vpop.permute.xlu0 %3483
  %v3493 = vadd.f32 %v2007, %v3470
  %v3494 = vadd.f32 %v2012, %v3472
  %v3495 = vadd.f32 %v2017, %v3474
  %v3496 = vadd.f32 %v2022, %v3476
  %v3497 = vadd.f32 %v2027, %v3478
  %v3498 = vadd.f32 %v2032, %v3480
  %v3499 = vadd.f32 %v2037, %v3482
  %v3500 = vadd.f32 %v2042, %v3484
  %v3501 = vadd.f32 %v3493, %v3262
  %v3502 = vadd.f32 %v3494, %v3262
  %v3503 = vadd.f32 %v3495, %v3262
  %v3504 = vadd.f32 %v3496, %v3262
  %v3505 = vadd.f32 %v3497, %v3262
  %v3506 = vadd.f32 %v3498, %v3262
  %v3507 = vadd.f32 %v3499, %v3262
  %v3508 = vadd.f32 %v3500, %v3262
  %v3509 = vlaneseq
  %v3510 = vshrl.u32 %v3509, 7
  %v3511 = vsub.s32 6, %v3510
  %v3512 = vrot.slane %v339, %v3511
  %3514 = vrot.lane.b32.xlu0 %v3512, 32
  %v3515 = vpop.permute.xlu0 %3514
  %v3517 = vadd.f32 %v3379, %v3515
  %v3518 = vadd.f32 %v3380, %v3515
  %v3519 = vadd.f32 %v3381, %v3515
  %v3520 = vadd.f32 %v3382, %v3515
  %v3521 = vadd.f32 %v3383, %v3515
  %v3522 = vadd.f32 %v3384, %v3515
  %v3523 = vadd.f32 %v3385, %v3515
  %v3524 = vadd.f32 %v3386, %v3515
  %v3525 = vadd.f32 %v3501, %v3515
  %v3526 = vadd.f32 %v3502, %v3515
  %v3527 = vadd.f32 %v3503, %v3515
  %v3528 = vadd.f32 %v3504, %v3515
  %v3529 = vadd.f32 %v3505, %v3515
  %v3530 = vadd.f32 %v3506, %v3515
  %v3531 = vadd.f32 %v3507, %v3515
  %v3532 = vadd.f32 %v3508, %v3515
  %v3533 = vxor.u32 %v3517, 2147483648
  %v3534 = vxor.u32 %v3518, 2147483648
  %v3535 = vxor.u32 %v3519, 2147483648
  %v3536 = vxor.u32 %v3520, 2147483648
  %v3537 = vxor.u32 %v3521, 2147483648
  %v3538 = vxor.u32 %v3522, 2147483648
  %v3539 = vxor.u32 %v3523, 2147483648
  %v3540 = vxor.u32 %v3524, 2147483648
  %v3541 = vxor.u32 %v3525, 2147483648
  %v3542 = vxor.u32 %v3526, 2147483648
  %v3543 = vxor.u32 %v3527, 2147483648
  %v3544 = vxor.u32 %v3528, 2147483648
  %v3545 = vxor.u32 %v3529, 2147483648
  %v3546 = vxor.u32 %v3530, 2147483648
  %v3547 = vxor.u32 %v3531, 2147483648
  %v3548 = vxor.u32 %v3532, 2147483648
  %v3549 = vmul.f32 %v3533, 1.442695
  %v3550 = vpow.pop %v3549
  %v3551 = vmul.f32 %v3534, 1.442695
  %v3552 = vpow.pop %v3551
  %v3553 = vmul.f32 %v3535, 1.442695
  %v3554 = vpow.pop %v3553
  %v3555 = vmul.f32 %v3536, 1.442695
  %v3556 = vpow.pop %v3555
  %v3557 = vmul.f32 %v3537, 1.442695
  %v3558 = vpow.pop %v3557
  %v3559 = vmul.f32 %v3538, 1.442695
  %v3560 = vpow.pop %v3559
  %v3561 = vmul.f32 %v3539, 1.442695
  %v3562 = vpow.pop %v3561
  %v3563 = vmul.f32 %v3540, 1.442695
  %v3564 = vpow.pop %v3563
  %v3565 = vmul.f32 %v3541, 1.442695
  %v3566 = vpow.pop %v3565
  %v3567 = vmul.f32 %v3542, 1.442695
  %v3568 = vpow.pop %v3567
  %v3569 = vmul.f32 %v3543, 1.442695
  %v3570 = vpow.pop %v3569
  %v3571 = vmul.f32 %v3544, 1.442695
  %v3572 = vpow.pop %v3571
  %v3573 = vmul.f32 %v3545, 1.442695
  %v3574 = vpow.pop %v3573
  %v3575 = vmul.f32 %v3546, 1.442695
  %v3576 = vpow.pop %v3575
  %v3577 = vmul.f32 %v3547, 1.442695
  %v3578 = vpow.pop %v3577
  %v3579 = vmul.f32 %v3548, 1.442695
  %v3580 = vpow.pop %v3579
  %v3581 = vadd.f32 %v3550, 1.0
  %v3582 = vadd.f32 %v3552, 1.0
  %v3583 = vadd.f32 %v3554, 1.0
  %v3584 = vadd.f32 %v3556, 1.0
  %v3585 = vadd.f32 %v3558, 1.0
  %v3586 = vadd.f32 %v3560, 1.0
  %v3587 = vadd.f32 %v3562, 1.0
  %v3588 = vadd.f32 %v3564, 1.0
  %v3589 = vadd.f32 %v3566, 1.0
  %v3590 = vadd.f32 %v3568, 1.0
  %v3591 = vadd.f32 %v3570, 1.0
  %v3592 = vadd.f32 %v3572, 1.0
  %v3593 = vadd.f32 %v3574, 1.0
  %v3594 = vadd.f32 %v3576, 1.0
  %v3595 = vadd.f32 %v3578, 1.0
  %v3596 = vadd.f32 %v3580, 1.0
  %v3597 = vrcp.pop %v3581
  %v3598 = vmul.f32 1.0, %v3597
  %v3599 = vrcp.pop %v3582
  %v3600 = vmul.f32 1.0, %v3599
  %v3601 = vrcp.pop %v3583
  %v3602 = vmul.f32 1.0, %v3601
  %v3603 = vrcp.pop %v3584
  %v3604 = vmul.f32 1.0, %v3603
  %v3605 = vrcp.pop %v3585
  %v3606 = vmul.f32 1.0, %v3605
  %v3607 = vrcp.pop %v3586
  %v3608 = vmul.f32 1.0, %v3607
  %v3609 = vrcp.pop %v3587
  %v3610 = vmul.f32 1.0, %v3609
  %v3611 = vrcp.pop %v3588
  %v3612 = vmul.f32 1.0, %v3611
  %v3613 = vrcp.pop %v3589
  %v3614 = vmul.f32 1.0, %v3613
  %v3615 = vrcp.pop %v3590
  %v3616 = vmul.f32 1.0, %v3615
  %v3617 = vrcp.pop %v3591
  %v3618 = vmul.f32 1.0, %v3617
  %v3619 = vrcp.pop %v3592
  %v3620 = vmul.f32 1.0, %v3619
  %v3621 = vrcp.pop %v3593
  %v3622 = vmul.f32 1.0, %v3621
  %v3623 = vrcp.pop %v3594
  %v3624 = vmul.f32 1.0, %v3623
  %v3625 = vrcp.pop %v3595
  %v3626 = vmul.f32 1.0, %v3625
  %v3627 = vrcp.pop %v3596
  %v3628 = vmul.f32 1.0, %v3627
  %v3629 = vmul.f32 %v3517, %v3598
  %v3630 = vmul.f32 %v3518, %v3600
  %v3631 = vmul.f32 %v3519, %v3602
  %v3632 = vmul.f32 %v3520, %v3604
  %v3633 = vmul.f32 %v3521, %v3606
  %v3634 = vmul.f32 %v3522, %v3608
  %v3635 = vmul.f32 %v3523, %v3610
  %v3636 = vmul.f32 %v3524, %v3612
  %v3637 = vmul.f32 %v3525, %v3614
  %v3638 = vmul.f32 %v3526, %v3616
  %v3639 = vmul.f32 %v3527, %v3618
  %v3640 = vmul.f32 %v3528, %v3620
  %v3641 = vmul.f32 %v3529, %v3622
  %v3642 = vmul.f32 %v3530, %v3624
  %v3643 = vmul.f32 %v3531, %v3626
  %v3644 = vmul.f32 %v3532, %v3628
  %3661 = vrot.lane.b32.xlu0 %v3629, 96
  %v3662 = vpop.permute.xlu0 %3661
  %3663 = vrot.lane.b32.xlu0 %v3630, 96
  %v3664 = vpop.permute.xlu0 %3663
  %3665 = vrot.lane.b32.xlu0 %v3631, 96
  %v3666 = vpop.permute.xlu0 %3665
  %3667 = vrot.lane.b32.xlu0 %v3632, 96
  %v3668 = vpop.permute.xlu0 %3667
  %3669 = vrot.lane.b32.xlu0 %v3633, 96
  %v3670 = vpop.permute.xlu0 %3669
  %3671 = vrot.lane.b32.xlu0 %v3634, 96
  %v3672 = vpop.permute.xlu0 %3671
  %3673 = vrot.lane.b32.xlu0 %v3635, 96
  %v3674 = vpop.permute.xlu0 %3673
  %3675 = vrot.lane.b32.xlu0 %v3636, 96
  %v3676 = vpop.permute.xlu0 %3675
  %3677 = vrot.lane.b32.xlu0 %v3637, 96
  %v3678 = vpop.permute.xlu0 %3677
  %3679 = vrot.lane.b32.xlu0 %v3638, 96
  %v3680 = vpop.permute.xlu0 %3679
  %3681 = vrot.lane.b32.xlu0 %v3639, 96
  %v3682 = vpop.permute.xlu0 %3681
  %3683 = vrot.lane.b32.xlu0 %v3640, 96
  %v3684 = vpop.permute.xlu0 %3683
  %3685 = vrot.lane.b32.xlu0 %v3641, 96
  %v3686 = vpop.permute.xlu0 %3685
  %3687 = vrot.lane.b32.xlu0 %v3642, 96
  %v3688 = vpop.permute.xlu0 %3687
  %3689 = vrot.lane.b32.xlu0 %v3643, 96
  %v3690 = vpop.permute.xlu0 %3689
  %3691 = vrot.lane.b32.xlu0 %v3644, 96
  %v3692 = vpop.permute.xlu0 %3691
  %v3693 = vsel %vm1140, %v3662, 0
  %v3695 = vsel %vm1140, %v3664, 0
  %v3697 = vsel %vm1140, %v3666, 0
  %v3699 = vsel %vm1140, %v3668, 0
  %v3701 = vsel %vm1140, %v3670, 0
  %v3703 = vsel %vm1140, %v3672, 0
  %v3705 = vsel %vm1140, %v3674, 0
  %v3707 = vsel %vm1140, %v3676, 0
  %v3709 = vsel %vm1140, %v3678, 0
  %v3711 = vsel %vm1140, %v3680, 0
  %v3713 = vsel %vm1140, %v3682, 0
  %v3715 = vsel %vm1140, %v3684, 0
  %v3717 = vsel %vm1140, %v3686, 0
  %v3719 = vsel %vm1140, %v3688, 0
  %v3721 = vsel %vm1140, %v3690, 0
  %v3723 = vsel %vm1140, %v3692, 0
  %3725 = vmatprep.subr.mxu0 0.0
  %3726 = vmatpush1.msra.mxu0 0.0
  %3727 = vmatprep.subr.mxu0 0.0
  %3728 = vmatpush1.msra.mxu0 0.0
  %3729 = vmatprep.subr.mxu0 0.0
  %3730 = vmatpush1.msra.mxu0 0.0
  %3731 = vmatprep.subr.mxu0 0.0
  %3732 = vmatpush1.msra.mxu0 0.0
  %3733 = vmatprep.subr.mxu0 0.0
  %3734 = vmatpush1.msra.mxu0 0.0
  %3735 = vmatprep.subr.mxu0 0.0
  %3736 = vmatpush1.msra.mxu0 0.0
  %3737 = vmatprep.subr.mxu0 0.0
  %3738 = vmatpush1.msra.mxu0 0.0
  %3739 = vmatprep.subr.mxu0 0.0
  %3740 = vmatpush1.msra.mxu0 0.0
  %3741 = vmatprep.subr.mxu0 0.0
  %3742 = vmatpush1.msra.mxu0 0.0
  %3743 = vmatprep.subr.mxu0 0.0
  %3744 = vmatpush1.msra.mxu0 0.0
  %3745 = vmatprep.subr.mxu0 0.0
  %3746 = vmatpush1.msra.mxu0 0.0
  %3747 = vmatprep.subr.mxu0 0.0
  %3748 = vmatpush1.msra.mxu0 0.0
  %3749 = vmatprep.subr.mxu0 0.0
  %3750 = vmatpush1.msra.mxu0 %v338
  %3751 = vmatprep.subr.mxu0 0.0
  %3752 = vmatpush1.msra.mxu0 %v337
  %3753 = vmatprep.subr.mxu0 0.0
  %3754 = vmatpush1.msra.mxu0 %v336
  %3755 = vmatprep.subr.mxu0 0.0
  %3756 = vmatpush1.msra.mxu0 %v335
  %3757 = vmatprep.subr.mxu0 0.0
  %3758 = vmatpush2.msra.mxu0 0.0
  %3759 = vmatprep.subr.mxu0 0.0
  %3760 = vmatpush2.msra.mxu0 0.0
  %3761 = vmatprep.subr.mxu0 0.0
  %3762 = vmatpush2.msra.mxu0 0.0
  %3763 = vmatprep.subr.mxu0 0.0
  %3764 = vmatpush2.msra.mxu0 0.0
  %3765 = vmatprep.subr.mxu0 0.0
  %3766 = vmatpush2.msra.mxu0 0.0
  %3767 = vmatprep.subr.mxu0 0.0
  %3768 = vmatpush2.msra.mxu0 0.0
  %3769 = vmatprep.subr.mxu0 0.0
  %3770 = vmatpush2.msra.mxu0 0.0
  %3771 = vmatprep.subr.mxu0 0.0
  %3772 = vmatpush2.msra.mxu0 0.0
  %3773 = vmatprep.subr.mxu0 0.0
  %3774 = vmatpush2.msra.mxu0 0.0
  %3775 = vmatprep.subr.mxu0 0.0
  %3776 = vmatpush2.msra.mxu0 0.0
  %3777 = vmatprep.subr.mxu0 0.0
  %3778 = vmatpush2.msra.mxu0 0.0
  %3779 = vmatprep.subr.mxu0 0.0
  %3780 = vmatpush2.msra.mxu0 0.0
  %3781 = vmatprep.subr.mxu0 0.0
  %3782 = vmatpush2.msra.mxu0 0.0
  %3783 = vmatprep.subr.mxu0 0.0
  %3784 = vmatpush2.msra.mxu0 0.0
  %3785 = vmatprep.subr.mxu0 0.0
  %3786 = vmatpush2.msra.mxu0 0.0
  %3787 = vmatprep.subr.mxu0 0.0
  %3788 = vmatpush2.msra.mxu0 0.0
  %3789 = vmatprep.mubr.f32.mxu0 0.0
  %3790 = vmatmul.mubr.f32.gmra.mxu0 %v3693
  %v3791 = vpop.f32.mrf.mxu0
  %v3792 = vadd.f32 0.0, %v3791
  %v3793 = vpop.f32.mrf.mxu0
  %3794 = vmatprep.mubr.f32.mxu0 0.0
  %3795 = vmatmul.mubr.f32.gmra.mxu0 %v3695
  %v3796 = vpop.f32.mrf.mxu0
  %v3797 = vadd.f32 0.0, %v3796
  %v3798 = vpop.f32.mrf.mxu0
  %3799 = vmatprep.mubr.f32.mxu0 0.0
  %3800 = vmatmul.mubr.f32.gmra.mxu0 %v3697
  %v3801 = vpop.f32.mrf.mxu0
  %v3802 = vadd.f32 0.0, %v3801
  %v3803 = vpop.f32.mrf.mxu0
  %3804 = vmatprep.mubr.f32.mxu0 0.0
  %3805 = vmatmul.mubr.f32.gmra.mxu0 %v3699
  %v3806 = vpop.f32.mrf.mxu0
  %v3807 = vadd.f32 0.0, %v3806
  %v3808 = vpop.f32.mrf.mxu0
  %3809 = vmatprep.mubr.f32.mxu0 0.0
  %3810 = vmatmul.mubr.f32.gmra.mxu0 %v3701
  %v3811 = vpop.f32.mrf.mxu0
  %v3812 = vadd.f32 0.0, %v3811
  %v3813 = vpop.f32.mrf.mxu0
  %3814 = vmatprep.mubr.f32.mxu0 0.0
  %3815 = vmatmul.mubr.f32.gmra.mxu0 %v3703
  %v3816 = vpop.f32.mrf.mxu0
  %v3817 = vadd.f32 0.0, %v3816
  %v3818 = vpop.f32.mrf.mxu0
  %3819 = vmatprep.mubr.f32.mxu0 0.0
  %3820 = vmatmul.mubr.f32.gmra.mxu0 %v3705
  %v3821 = vpop.f32.mrf.mxu0
  %v3822 = vadd.f32 0.0, %v3821
  %v3823 = vpop.f32.mrf.mxu0
  %3824 = vmatprep.mubr.f32.mxu0 0.0
  %3825 = vmatmul.mubr.f32.gmra.mxu0 %v3707
  %v3826 = vpop.f32.mrf.mxu0
  %v3827 = vadd.f32 0.0, %v3826
  %v3828 = vpop.f32.mrf.mxu0
  %3829 = vmatprep.mubr.f32.mxu0 0.0
  %3830 = vmatmul.mubr.f32.gmra.mxu0 %v3709
  %v3831 = vpop.f32.mrf.mxu0
  %v3832 = vadd.f32 0.0, %v3831
  %v3833 = vpop.f32.mrf.mxu0
  %3834 = vmatprep.mubr.f32.mxu0 0.0
  %3835 = vmatmul.mubr.f32.gmra.mxu0 %v3711
  %v3836 = vpop.f32.mrf.mxu0
  %v3837 = vadd.f32 0.0, %v3836
  %v3838 = vpop.f32.mrf.mxu0
  %3839 = vmatprep.mubr.f32.mxu0 0.0
  %3840 = vmatmul.mubr.f32.gmra.mxu0 %v3713
  %v3841 = vpop.f32.mrf.mxu0
  %v3842 = vadd.f32 0.0, %v3841
  %v3843 = vpop.f32.mrf.mxu0
  %3844 = vmatprep.mubr.f32.mxu0 0.0
  %3845 = vmatmul.mubr.f32.gmra.mxu0 %v3715
  %v3846 = vpop.f32.mrf.mxu0
  %v3847 = vadd.f32 0.0, %v3846
  %v3848 = vpop.f32.mrf.mxu0
  %3849 = vmatprep.mubr.f32.mxu0 0.0
  %3850 = vmatmul.mubr.f32.gmra.mxu0 %v3717
  %v3851 = vpop.f32.mrf.mxu0
  %v3852 = vadd.f32 0.0, %v3851
  %v3853 = vpop.f32.mrf.mxu0
  %3854 = vmatprep.mubr.f32.mxu0 0.0
  %3855 = vmatmul.mubr.f32.gmra.mxu0 %v3719
  %v3856 = vpop.f32.mrf.mxu0
  %v3857 = vadd.f32 0.0, %v3856
  %v3858 = vpop.f32.mrf.mxu0
  %3859 = vmatprep.mubr.f32.mxu0 0.0
  %3860 = vmatmul.mubr.f32.gmra.mxu0 %v3721
  %v3861 = vpop.f32.mrf.mxu0
  %v3862 = vadd.f32 0.0, %v3861
  %v3863 = vpop.f32.mrf.mxu0
  %3864 = vmatprep.mubr.f32.mxu0 0.0
  %3865 = vmatmul.mubr.f32.gmra.mxu0 %v3723
  %v3866 = vpop.f32.mrf.mxu0
  %v3867 = vadd.f32 0.0, %v3866
  %v3868 = vpop.f32.mrf.mxu0
  %3869 = vdwg.mxu0
  %v3870 = vlaneseq
  %v3871 = vshrl.u32 %v3870, 7
  %v3872 = vsub.s32 7, %v3871
  %v3873 = vrot.slane %v339, %v3872
  %v3874 = vadd.f32 %v3792, %v3873
  %v3875 = vadd.f32 %v3797, %v3873
  %v3876 = vadd.f32 %v3802, %v3873
  %v3877 = vadd.f32 %v3807, %v3873
  %v3878 = vadd.f32 %v3812, %v3873
  %v3879 = vadd.f32 %v3817, %v3873
  %v3880 = vadd.f32 %v3822, %v3873
  %v3881 = vadd.f32 %v3827, %v3873
  %v3882 = vadd.f32 %v3832, %v3873
  %v3883 = vadd.f32 %v3837, %v3873
  %v3884 = vadd.f32 %v3842, %v3873
  %v3885 = vadd.f32 %v3847, %v3873
  %v3886 = vadd.f32 %v3852, %v3873
  %v3887 = vadd.f32 %v3857, %v3873
  %v3888 = vadd.f32 %v3862, %v3873
  %v3889 = vadd.f32 %v3867, %v3873
  %v3890 = vxor.u32 %v3874, 2147483648
  %v3891 = vxor.u32 %v3875, 2147483648
  %v3892 = vxor.u32 %v3876, 2147483648
  %v3893 = vxor.u32 %v3877, 2147483648
  %v3894 = vxor.u32 %v3878, 2147483648
  %v3895 = vxor.u32 %v3879, 2147483648
  %v3896 = vxor.u32 %v3880, 2147483648
  %v3897 = vxor.u32 %v3881, 2147483648
  %v3898 = vxor.u32 %v3882, 2147483648
  %v3899 = vxor.u32 %v3883, 2147483648
  %v3900 = vxor.u32 %v3884, 2147483648
  %v3901 = vxor.u32 %v3885, 2147483648
  %v3902 = vxor.u32 %v3886, 2147483648
  %v3903 = vxor.u32 %v3887, 2147483648
  %v3904 = vxor.u32 %v3888, 2147483648
  %v3905 = vxor.u32 %v3889, 2147483648
  %v3906 = vmul.f32 %v3890, 1.442695
  %v3907 = vpow.pop %v3906
  %v3908 = vmul.f32 %v3891, 1.442695
  %v3909 = vpow.pop %v3908
  %v3910 = vmul.f32 %v3892, 1.442695
  %v3911 = vpow.pop %v3910
  %v3912 = vmul.f32 %v3893, 1.442695
  %v3913 = vpow.pop %v3912
  %v3914 = vmul.f32 %v3894, 1.442695
  %v3915 = vpow.pop %v3914
  %v3916 = vmul.f32 %v3895, 1.442695
  %v3917 = vpow.pop %v3916
  %v3918 = vmul.f32 %v3896, 1.442695
  %v3919 = vpow.pop %v3918
  %v3920 = vmul.f32 %v3897, 1.442695
  %v3921 = vpow.pop %v3920
  %v3922 = vmul.f32 %v3898, 1.442695
  %v3923 = vpow.pop %v3922
  %v3924 = vmul.f32 %v3899, 1.442695
  %v3925 = vpow.pop %v3924
  %v3926 = vmul.f32 %v3900, 1.442695
  %v3927 = vpow.pop %v3926
  %v3928 = vmul.f32 %v3901, 1.442695
  %v3929 = vpow.pop %v3928
  %v3930 = vmul.f32 %v3902, 1.442695
  %v3931 = vpow.pop %v3930
  %v3932 = vmul.f32 %v3903, 1.442695
  %v3933 = vpow.pop %v3932
  %v3934 = vmul.f32 %v3904, 1.442695
  %v3935 = vpow.pop %v3934
  %v3936 = vmul.f32 %v3905, 1.442695
  %v3937 = vpow.pop %v3936
  %v3938 = vadd.f32 %v3907, 1.0
  %v3939 = vadd.f32 %v3909, 1.0
  %v3940 = vadd.f32 %v3911, 1.0
  %v3941 = vadd.f32 %v3913, 1.0
  %v3942 = vadd.f32 %v3915, 1.0
  %v3943 = vadd.f32 %v3917, 1.0
  %v3944 = vadd.f32 %v3919, 1.0
  %v3945 = vadd.f32 %v3921, 1.0
  %v3946 = vadd.f32 %v3923, 1.0
  %v3947 = vadd.f32 %v3925, 1.0
  %v3948 = vadd.f32 %v3927, 1.0
  %v3949 = vadd.f32 %v3929, 1.0
  %v3950 = vadd.f32 %v3931, 1.0
  %v3951 = vadd.f32 %v3933, 1.0
  %v3952 = vadd.f32 %v3935, 1.0
  %v3953 = vadd.f32 %v3937, 1.0
  %v3954 = vrcp.pop %v3938
  %v3955 = vmul.f32 1.0, %v3954
  %v3956 = vrcp.pop %v3939
  %v3957 = vmul.f32 1.0, %v3956
  %v3958 = vrcp.pop %v3940
  %v3959 = vmul.f32 1.0, %v3958
  %v3960 = vrcp.pop %v3941
  %v3961 = vmul.f32 1.0, %v3960
  %v3962 = vrcp.pop %v3942
  %v3963 = vmul.f32 1.0, %v3962
  %v3964 = vrcp.pop %v3943
  %v3965 = vmul.f32 1.0, %v3964
  %v3966 = vrcp.pop %v3944
  %v3967 = vmul.f32 1.0, %v3966
  %v3968 = vrcp.pop %v3945
  %v3969 = vmul.f32 1.0, %v3968
  %v3970 = vrcp.pop %v3946
  %v3971 = vmul.f32 1.0, %v3970
  %v3972 = vrcp.pop %v3947
  %v3973 = vmul.f32 1.0, %v3972
  %v3974 = vrcp.pop %v3948
  %v3975 = vmul.f32 1.0, %v3974
  %v3976 = vrcp.pop %v3949
  %v3977 = vmul.f32 1.0, %v3976
  %v3978 = vrcp.pop %v3950
  %v3979 = vmul.f32 1.0, %v3978
  %v3980 = vrcp.pop %v3951
  %v3981 = vmul.f32 1.0, %v3980
  %v3982 = vrcp.pop %v3952
  %v3983 = vmul.f32 1.0, %v3982
  %v3984 = vrcp.pop %v3953
  %v3985 = vmul.f32 1.0, %v3984
  %v3986 = vmul.f32 %v3874, %v3955
  %v3987 = vmul.f32 %v3875, %v3957
  %v3988 = vmul.f32 %v3876, %v3959
  %v3989 = vmul.f32 %v3877, %v3961
  %v3990 = vmul.f32 %v3878, %v3963
  %v3991 = vmul.f32 %v3879, %v3965
  %v3992 = vmul.f32 %v3880, %v3967
  %v3993 = vmul.f32 %v3881, %v3969
  %v3994 = vmul.f32 %v3882, %v3971
  %v3995 = vmul.f32 %v3883, %v3973
  %v3996 = vmul.f32 %v3884, %v3975
  %v3997 = vmul.f32 %v3885, %v3977
  %v3998 = vmul.f32 %v3886, %v3979
  %v3999 = vmul.f32 %v3887, %v3981
  %v4000 = vmul.f32 %v3888, %v3983
  %v4001 = vmul.f32 %v3889, %v3985
  %vm4002 = vcmask 31744
  %v4003 = vsel %vm4002, %v3986, -inf
  %4004 = vmax.xlane.f32.xlu0 %v4003
  %v4005 = vpop.xlane.xlu0 %4004
  %v4006 = vsel %vm4002, %v3987, -inf
  %4007 = vmax.xlane.f32.xlu0 %v4006
  %v4008 = vpop.xlane.xlu0 %4007
  %v4009 = vsel %vm4002, %v3988, -inf
  %4010 = vmax.xlane.f32.xlu0 %v4009
  %v4011 = vpop.xlane.xlu0 %4010
  %v4012 = vsel %vm4002, %v3989, -inf
  %4013 = vmax.xlane.f32.xlu0 %v4012
  %v4014 = vpop.xlane.xlu0 %4013
  %v4015 = vsel %vm4002, %v3990, -inf
  %4016 = vmax.xlane.f32.xlu0 %v4015
  %v4017 = vpop.xlane.xlu0 %4016
  %v4018 = vsel %vm4002, %v3991, -inf
  %4019 = vmax.xlane.f32.xlu0 %v4018
  %v4020 = vpop.xlane.xlu0 %4019
  %v4021 = vsel %vm4002, %v3992, -inf
  %4022 = vmax.xlane.f32.xlu0 %v4021
  %v4023 = vpop.xlane.xlu0 %4022
  %v4024 = vsel %vm4002, %v3993, -inf
  %4025 = vmax.xlane.f32.xlu0 %v4024
  %v4026 = vpop.xlane.xlu0 %4025
  %v4027 = vsel %vm4002, %v3994, -inf
  %4028 = vmax.xlane.f32.xlu0 %v4027
  %v4029 = vpop.xlane.xlu0 %4028
  %v4030 = vsel %vm4002, %v3995, -inf
  %4031 = vmax.xlane.f32.xlu0 %v4030
  %v4032 = vpop.xlane.xlu0 %4031
  %v4033 = vsel %vm4002, %v3996, -inf
  %4034 = vmax.xlane.f32.xlu0 %v4033
  %v4035 = vpop.xlane.xlu0 %4034
  %v4036 = vsel %vm4002, %v3997, -inf
  %4037 = vmax.xlane.f32.xlu0 %v4036
  %v4038 = vpop.xlane.xlu0 %4037
  %v4039 = vsel %vm4002, %v3998, -inf
  %4040 = vmax.xlane.f32.xlu0 %v4039
  %v4041 = vpop.xlane.xlu0 %4040
  %v4042 = vsel %vm4002, %v3999, -inf
  %4043 = vmax.xlane.f32.xlu0 %v4042
  %v4044 = vpop.xlane.xlu0 %4043
  %v4045 = vsel %vm4002, %v4000, -inf
  %4046 = vmax.xlane.f32.xlu0 %v4045
  %v4047 = vpop.xlane.xlu0 %4046
  %v4048 = vsel %vm4002, %v4001, -inf
  %4049 = vmax.xlane.f32.xlu0 %v4048
  %v4050 = vpop.xlane.xlu0 %4049
  %v4051 = vsub.f32 %v3986, %v4005
  %v4052 = vsub.f32 %v3987, %v4008
  %v4053 = vsub.f32 %v3988, %v4011
  %v4054 = vsub.f32 %v3989, %v4014
  %v4055 = vsub.f32 %v3990, %v4017
  %v4056 = vsub.f32 %v3991, %v4020
  %v4057 = vsub.f32 %v3992, %v4023
  %v4058 = vsub.f32 %v3993, %v4026
  %v4059 = vsub.f32 %v3994, %v4029
  %v4060 = vsub.f32 %v3995, %v4032
  %v4061 = vsub.f32 %v3996, %v4035
  %v4062 = vsub.f32 %v3997, %v4038
  %v4063 = vsub.f32 %v3998, %v4041
  %v4064 = vsub.f32 %v3999, %v4044
  %v4065 = vsub.f32 %v4000, %v4047
  %v4066 = vsub.f32 %v4001, %v4050
  %v4067 = vmul.f32 %v4051, 1.442695
  %v4068 = vpow.pop %v4067
  %v4069 = vmul.f32 %v4052, 1.442695
  %v4070 = vpow.pop %v4069
  %v4071 = vmul.f32 %v4053, 1.442695
  %v4072 = vpow.pop %v4071
  %v4073 = vmul.f32 %v4054, 1.442695
  %v4074 = vpow.pop %v4073
  %v4075 = vmul.f32 %v4055, 1.442695
  %v4076 = vpow.pop %v4075
  %v4077 = vmul.f32 %v4056, 1.442695
  %v4078 = vpow.pop %v4077
  %v4079 = vmul.f32 %v4057, 1.442695
  %v4080 = vpow.pop %v4079
  %v4081 = vmul.f32 %v4058, 1.442695
  %v4082 = vpow.pop %v4081
  %v4083 = vmul.f32 %v4059, 1.442695
  %v4084 = vpow.pop %v4083
  %v4085 = vmul.f32 %v4060, 1.442695
  %v4086 = vpow.pop %v4085
  %v4087 = vmul.f32 %v4061, 1.442695
  %v4088 = vpow.pop %v4087
  %v4089 = vmul.f32 %v4062, 1.442695
  %v4090 = vpow.pop %v4089
  %v4091 = vmul.f32 %v4063, 1.442695
  %v4092 = vpow.pop %v4091
  %v4093 = vmul.f32 %v4064, 1.442695
  %v4094 = vpow.pop %v4093
  %v4095 = vmul.f32 %v4065, 1.442695
  %v4096 = vpow.pop %v4095
  %v4097 = vmul.f32 %v4066, 1.442695
  %v4098 = vpow.pop %v4097
  %v4099 = vsel %vm4002, %v4068, 0.0
  %4100 = vadd.xlane.f32.xlu0 %v4099
  %v4101 = vpop.xlane.xlu0 %4100
  %v4102 = vsel %vm4002, %v4070, 0.0
  %4103 = vadd.xlane.f32.xlu0 %v4102
  %v4104 = vpop.xlane.xlu0 %4103
  %v4105 = vsel %vm4002, %v4072, 0.0
  %4106 = vadd.xlane.f32.xlu0 %v4105
  %v4107 = vpop.xlane.xlu0 %4106
  %v4108 = vsel %vm4002, %v4074, 0.0
  %4109 = vadd.xlane.f32.xlu0 %v4108
  %v4110 = vpop.xlane.xlu0 %4109
  %v4111 = vsel %vm4002, %v4076, 0.0
  %4112 = vadd.xlane.f32.xlu0 %v4111
  %v4113 = vpop.xlane.xlu0 %4112
  %v4114 = vsel %vm4002, %v4078, 0.0
  %4115 = vadd.xlane.f32.xlu0 %v4114
  %v4116 = vpop.xlane.xlu0 %4115
  %v4117 = vsel %vm4002, %v4080, 0.0
  %4118 = vadd.xlane.f32.xlu0 %v4117
  %v4119 = vpop.xlane.xlu0 %4118
  %v4120 = vsel %vm4002, %v4082, 0.0
  %4121 = vadd.xlane.f32.xlu0 %v4120
  %v4122 = vpop.xlane.xlu0 %4121
  %v4123 = vsel %vm4002, %v4084, 0.0
  %4124 = vadd.xlane.f32.xlu0 %v4123
  %v4125 = vpop.xlane.xlu0 %4124
  %v4126 = vsel %vm4002, %v4086, 0.0
  %4127 = vadd.xlane.f32.xlu0 %v4126
  %v4128 = vpop.xlane.xlu0 %4127
  %v4129 = vsel %vm4002, %v4088, 0.0
  %4130 = vadd.xlane.f32.xlu0 %v4129
  %v4131 = vpop.xlane.xlu0 %4130
  %v4132 = vsel %vm4002, %v4090, 0.0
  %4133 = vadd.xlane.f32.xlu0 %v4132
  %v4134 = vpop.xlane.xlu0 %4133
  %v4135 = vsel %vm4002, %v4092, 0.0
  %4136 = vadd.xlane.f32.xlu0 %v4135
  %v4137 = vpop.xlane.xlu0 %4136
  %v4138 = vsel %vm4002, %v4094, 0.0
  %4139 = vadd.xlane.f32.xlu0 %v4138
  %v4140 = vpop.xlane.xlu0 %4139
  %v4141 = vsel %vm4002, %v4096, 0.0
  %4142 = vadd.xlane.f32.xlu0 %v4141
  %v4143 = vpop.xlane.xlu0 %4142
  %v4144 = vsel %vm4002, %v4098, 0.0
  %4145 = vadd.xlane.f32.xlu0 %v4144
  %v4146 = vpop.xlane.xlu0 %4145
  %v4147 = vrcp.pop %v4101
  %v4148 = vmul.f32 %v4068, %v4147
  %v4149 = vrcp.pop %v4104
  %v4150 = vmul.f32 %v4070, %v4149
  %v4151 = vrcp.pop %v4107
  %v4152 = vmul.f32 %v4072, %v4151
  %v4153 = vrcp.pop %v4110
  %v4154 = vmul.f32 %v4074, %v4153
  %v4155 = vrcp.pop %v4113
  %v4156 = vmul.f32 %v4076, %v4155
  %v4157 = vrcp.pop %v4116
  %v4158 = vmul.f32 %v4078, %v4157
  %v4159 = vrcp.pop %v4119
  %v4160 = vmul.f32 %v4080, %v4159
  %v4161 = vrcp.pop %v4122
  %v4162 = vmul.f32 %v4082, %v4161
  %v4163 = vrcp.pop %v4125
  %v4164 = vmul.f32 %v4084, %v4163
  %v4165 = vrcp.pop %v4128
  %v4166 = vmul.f32 %v4086, %v4165
  %v4167 = vrcp.pop %v4131
  %v4168 = vmul.f32 %v4088, %v4167
  %v4169 = vrcp.pop %v4134
  %v4170 = vmul.f32 %v4090, %v4169
  %v4171 = vrcp.pop %v4137
  %v4172 = vmul.f32 %v4092, %v4171
  %v4173 = vrcp.pop %v4140
  %v4174 = vmul.f32 %v4094, %v4173
  %v4175 = vrcp.pop %v4143
  %v4176 = vmul.f32 %v4096, %v4175
  %v4177 = vrcp.pop %v4146
  %v4178 = vmul.f32 %v4098, %v4177
  %4179 = vst.msk [vmem:[%s11] sm:$0xff] %vm4002, %v4148
  %4180 = vst.msk [vmem:[%s11 + $0x8] sm:$0xff] %vm4002, %v4150
  %4181 = vst.msk [vmem:[%s11 + $0x10] sm:$0xff] %vm4002, %v4152
  %4182 = vst.msk [vmem:[%s11 + $0x18] sm:$0xff] %vm4002, %v4154
  %4183 = vst.msk [vmem:[%s11 + $0x20] sm:$0xff] %vm4002, %v4156
  %4184 = vst.msk [vmem:[%s11 + $0x28] sm:$0xff] %vm4002, %v4158
  %4185 = vst.msk [vmem:[%s11 + $0x30] sm:$0xff] %vm4002, %v4160
  %4186 = vst.msk [vmem:[%s11 + $0x38] sm:$0xff] %vm4002, %v4162
  %4187 = vst.msk [vmem:[%s11 + $0x40] sm:$0xff] %vm4002, %v4164
  %4188 = vst.msk [vmem:[%s11 + $0x48] sm:$0xff] %vm4002, %v4166
  %4189 = vst.msk [vmem:[%s11 + $0x50] sm:$0xff] %vm4002, %v4168
  %4190 = vst.msk [vmem:[%s11 + $0x58] sm:$0xff] %vm4002, %v4170
  %4191 = vst.msk [vmem:[%s11 + $0x60] sm:$0xff] %vm4002, %v4172
  %4192 = vst.msk [vmem:[%s11 + $0x68] sm:$0xff] %vm4002, %v4174
  %4193 = vst.msk [vmem:[%s11 + $0x70] sm:$0xff] %vm4002, %v4176
  %4194 = vst.msk [vmem:[%s11 + $0x78] sm:$0xff] %vm4002, %v4178
  %4195 = vset.pattern.permute.xlu0 1
  %4196 = vperm.xlu0 %4195, %v45
  %v4197 = vpop.permute.xlu0 %4196
  %4199 = vset.pattern.permute.xlu0 1
  %4200 = vperm.xlu0 %4199, %v46
  %v4201 = vpop.permute.xlu0 %4200
  %4203 = vset.pattern.permute.xlu0 1
  %4204 = vperm.xlu0 %4203, %v47
  %v4205 = vpop.permute.xlu0 %4204
  %4207 = vset.pattern.permute.xlu0 1
  %4208 = vperm.xlu0 %4207, %v48
  %v4209 = vpop.permute.xlu0 %4208
  %4211 = vset.pattern.permute.xlu0 1
  %4212 = vperm.xlu0 %4211, %v49
  %v4213 = vpop.permute.xlu0 %4212
  %4215 = vset.pattern.permute.xlu0 1
  %4216 = vperm.xlu0 %4215, %v50
  %v4217 = vpop.permute.xlu0 %4216
  %v4219 = vmul.f32 %v198, %v4197
  %v4220 = vmul.f32 %v203, %v4201
  %v4221 = vmul.f32 %v208, %v4205
  %v4222 = vmul.f32 %v213, %v4209
  %v4223 = vmul.f32 %v218, %v4213
  %v4224 = vmul.f32 %v223, %v4217
  %v4225 = vsel %vm112, %v4219, 0.0
  %4226 = vadd.xlane.f32.xlu0 %v4225
  %v4227 = vpop.xlane.xlu0 %4226
  %v4228 = vsel %vm112, %v4220, 0.0
  %4229 = vadd.xlane.f32.xlu0 %v4228
  %v4230 = vpop.xlane.xlu0 %4229
  %v4231 = vsel %vm112, %v4221, 0.0
  %4232 = vadd.xlane.f32.xlu0 %v4231
  %v4233 = vpop.xlane.xlu0 %4232
  %v4234 = vsel %vm112, %v4222, 0.0
  %4235 = vadd.xlane.f32.xlu0 %v4234
  %v4236 = vpop.xlane.xlu0 %4235
  %v4237 = vsel %vm112, %v4223, 0.0
  %4238 = vadd.xlane.f32.xlu0 %v4237
  %v4239 = vpop.xlane.xlu0 %4238
  %v4240 = vsel %vm112, %v4224, 0.0
  %4241 = vadd.xlane.f32.xlu0 %v4240
  %v4242 = vpop.xlane.xlu0 %4241
  %v4243 = vld [vmem:[%s8] sm:$0xff]
  %v4244 = vld [vmem:[%s8 + $0x8] sm:$0xff]
  %v4245 = vld [vmem:[%s8 + $0x10] sm:$0xff]
  %v4246 = vld [vmem:[%s8 + $0x18] sm:$0xff]
  %v4247 = vld [vmem:[%s8 + $0x20] sm:$0xff]
  %v4248 = vld [vmem:[%s8 + $0x28] sm:$0xff]
  %vm4249 = vcmask 392192
  %v4251 = vsel %vm4249, %v4243, 0
  %v4254 = vsel %vm4249, %v4244, 0
  %v4257 = vsel %vm4249, %v4245, 0
  %v4260 = vsel %vm4249, %v4246, 0
  %v4263 = vsel %vm4249, %v4247, 0
  %v4266 = vsel %vm4249, %v4248, 0
  %4268 = vmatprep.subr.mxu0 0.0
  %4269 = vmatpush1.msra.mxu0 0.0
  %4270 = vmatprep.subr.mxu0 0.0
  %4271 = vmatpush1.msra.mxu0 0.0
  %4272 = vmatprep.subr.mxu0 0.0
  %4273 = vmatpush1.msra.mxu0 0.0
  %4274 = vmatprep.subr.mxu0 0.0
  %4275 = vmatpush1.msra.mxu0 0.0
  %4276 = vmatprep.subr.mxu0 0.0
  %4277 = vmatpush1.msra.mxu0 0.0
  %4278 = vmatprep.subr.mxu0 0.0
  %4279 = vmatpush1.msra.mxu0 0.0
  %4280 = vmatprep.subr.mxu0 0.0
  %4281 = vmatpush1.msra.mxu0 0.0
  %4282 = vmatprep.subr.mxu0 0.0
  %4283 = vmatpush1.msra.mxu0 0.0
  %4284 = vmatprep.subr.mxu0 0.0
  %4285 = vmatpush1.msra.mxu0 0.0
  %4286 = vmatprep.subr.mxu0 0.0
  %4287 = vmatpush1.msra.mxu0 0.0
  %4288 = vmatprep.subr.mxu0 0.0
  %4289 = vmatpush1.msra.mxu0 %v4242
  %4290 = vmatprep.subr.mxu0 0.0
  %4291 = vmatpush1.msra.mxu0 %v4239
  %4292 = vmatprep.subr.mxu0 0.0
  %4293 = vmatpush1.msra.mxu0 %v4236
  %4294 = vmatprep.subr.mxu0 0.0
  %4295 = vmatpush1.msra.mxu0 %v4233
  %4296 = vmatprep.subr.mxu0 0.0
  %4297 = vmatpush1.msra.mxu0 %v4230
  %4298 = vmatprep.subr.mxu0 0.0
  %4299 = vmatpush1.msra.mxu0 %v4227
  %4300 = vmatprep.subr.mxu0 0.0
  %4301 = vmatpush2.msra.mxu0 0.0
  %4302 = vmatprep.subr.mxu0 0.0
  %4303 = vmatpush2.msra.mxu0 0.0
  %4304 = vmatprep.subr.mxu0 0.0
  %4305 = vmatpush2.msra.mxu0 0.0
  %4306 = vmatprep.subr.mxu0 0.0
  %4307 = vmatpush2.msra.mxu0 0.0
  %4308 = vmatprep.subr.mxu0 0.0
  %4309 = vmatpush2.msra.mxu0 0.0
  %4310 = vmatprep.subr.mxu0 0.0
  %4311 = vmatpush2.msra.mxu0 0.0
  %4312 = vmatprep.subr.mxu0 0.0
  %4313 = vmatpush2.msra.mxu0 0.0
  %4314 = vmatprep.subr.mxu0 0.0
  %4315 = vmatpush2.msra.mxu0 0.0
  %4316 = vmatprep.subr.mxu0 0.0
  %4317 = vmatpush2.msra.mxu0 0.0
  %4318 = vmatprep.subr.mxu0 0.0
  %4319 = vmatpush2.msra.mxu0 0.0
  %4320 = vmatprep.subr.mxu0 0.0
  %4321 = vmatpush2.msra.mxu0 0.0
  %4322 = vmatprep.subr.mxu0 0.0
  %4323 = vmatpush2.msra.mxu0 0.0
  %4324 = vmatprep.subr.mxu0 0.0
  %4325 = vmatpush2.msra.mxu0 0.0
  %4326 = vmatprep.subr.mxu0 0.0
  %4327 = vmatpush2.msra.mxu0 0.0
  %4328 = vmatprep.subr.mxu0 0.0
  %4329 = vmatpush2.msra.mxu0 0.0
  %4330 = vmatprep.subr.mxu0 0.0
  %4331 = vmatpush2.msra.mxu0 0.0
  %4332 = vmatprep.mubr.f32.mxu0 0.0
  %4333 = vmatmul.mubr.f32.gmra.mxu0 %v4251
  %v4334 = vpop.f32.mrf.mxu0
  %v4335 = vadd.f32 0.0, %v4334
  %v4336 = vpop.f32.mrf.mxu0
  %4337 = vmatprep.mubr.f32.mxu0 0.0
  %4338 = vmatmul.mubr.f32.gmra.mxu0 %v4254
  %v4339 = vpop.f32.mrf.mxu0
  %v4340 = vadd.f32 0.0, %v4339
  %v4341 = vpop.f32.mrf.mxu0
  %4342 = vmatprep.mubr.f32.mxu0 0.0
  %4343 = vmatmul.mubr.f32.gmra.mxu0 %v4257
  %v4344 = vpop.f32.mrf.mxu0
  %v4345 = vadd.f32 0.0, %v4344
  %v4346 = vpop.f32.mrf.mxu0
  %4347 = vmatprep.mubr.f32.mxu0 0.0
  %4348 = vmatmul.mubr.f32.gmra.mxu0 %v4260
  %v4349 = vpop.f32.mrf.mxu0
  %v4350 = vadd.f32 0.0, %v4349
  %v4351 = vpop.f32.mrf.mxu0
  %4352 = vmatprep.mubr.f32.mxu0 0.0
  %4353 = vmatmul.mubr.f32.gmra.mxu0 %v4263
  %v4354 = vpop.f32.mrf.mxu0
  %v4355 = vadd.f32 0.0, %v4354
  %v4356 = vpop.f32.mrf.mxu0
  %4357 = vmatprep.mubr.f32.mxu0 0.0
  %4358 = vmatmul.mubr.f32.gmra.mxu0 %v4266
  %v4359 = vpop.f32.mrf.mxu0
  %v4360 = vadd.f32 0.0, %v4359
  %v4361 = vpop.f32.mrf.mxu0
  %4362 = vdwg.mxu0
  %v4363 = vld [vmem:[%s7] sm:$0xff]
  %v4364 = vld [vmem:[%s7 + $0x8] sm:$0xff]
  %v4365 = vld [vmem:[%s7 + $0x10] sm:$0xff]
  %v4366 = vld [vmem:[%s7 + $0x18] sm:$0xff]
  %v4367 = vld [vmem:[%s7 + $0x20] sm:$0xff]
  %v4368 = vld [vmem:[%s7 + $0x28] sm:$0xff]
  %4370 = vset.pattern.permute.xlu0 0
  %4371 = vperm.xlu0 %4370, %v4335
  %v4372 = vpop.permute.xlu0 %4371
  %4375 = vset.pattern.permute.xlu0 0
  %4376 = vperm.xlu0 %4375, %v4340
  %v4377 = vpop.permute.xlu0 %4376
  %4380 = vset.pattern.permute.xlu0 0
  %4381 = vperm.xlu0 %4380, %v4345
  %v4382 = vpop.permute.xlu0 %4381
  %4385 = vset.pattern.permute.xlu0 0
  %4386 = vperm.xlu0 %4385, %v4350
  %v4387 = vpop.permute.xlu0 %4386
  %4390 = vset.pattern.permute.xlu0 0
  %4391 = vperm.xlu0 %4390, %v4355
  %v4392 = vpop.permute.xlu0 %4391
  %4395 = vset.pattern.permute.xlu0 0
  %4396 = vperm.xlu0 %4395, %v4360
  %v4397 = vpop.permute.xlu0 %4396
  %v4399 = vlaneseq
  %v4400 = vshrl.u32 %v4399, 7
  %v4401 = vsub.s32 0, %v4400
  %v4402 = vrot.slane %v4367, %v4401
  %v4403 = vlaneseq
  %v4404 = vshrl.u32 %v4403, 7
  %v4405 = vsub.s32 0, %v4404
  %v4406 = vrot.slane %v4368, %v4405
  %v4407 = vmul.f32 %v4372, %v4402
  %v4408 = vmul.f32 %v4372, %v4406
  %v4409 = vmul.f32 %v4377, %v4402
  %v4410 = vmul.f32 %v4377, %v4406
  %v4411 = vmul.f32 %v4382, %v4402
  %v4412 = vmul.f32 %v4382, %v4406
  %v4413 = vmul.f32 %v4387, %v4402
  %v4414 = vmul.f32 %v4387, %v4406
  %v4415 = vmul.f32 %v4392, %v4402
  %v4416 = vmul.f32 %v4392, %v4406
  %v4417 = vmul.f32 %v4397, %v4402
  %v4418 = vmul.f32 %v4397, %v4406
  %v4419 = vsel %vm112, %v198, 0
  %v4421 = vsel %vm112, %v203, 0
  %v4423 = vsel %vm112, %v208, 0
  %v4425 = vsel %vm112, %v213, 0
  %v4427 = vsel %vm112, %v218, 0
  %v4429 = vsel %vm112, %v223, 0
  %4431 = vmatprep.subr.mxu0 0.0
  %4432 = vmatpush1.msra.mxu0 0.0
  %4433 = vmatprep.subr.mxu0 0.0
  %4434 = vmatpush1.msra.mxu0 0.0
  %4435 = vmatprep.subr.mxu0 0.0
  %4436 = vmatpush1.msra.mxu0 0.0
  %4437 = vmatprep.subr.mxu0 0.0
  %4438 = vmatpush1.msra.mxu0 0.0
  %4439 = vmatprep.subr.mxu0 0.0
  %4440 = vmatpush1.msra.mxu0 0.0
  %4441 = vmatprep.subr.mxu0 0.0
  %4442 = vmatpush1.msra.mxu0 0.0
  %4443 = vmatprep.subr.mxu0 0.0
  %4444 = vmatpush1.msra.mxu0 0.0
  %4445 = vmatprep.subr.mxu0 0.0
  %4446 = vmatpush1.msra.mxu0 0.0
  %4447 = vmatprep.subr.mxu0 0.0
  %4448 = vmatpush1.msra.mxu0 0.0
  %4449 = vmatprep.subr.mxu0 0.0
  %4450 = vmatpush1.msra.mxu0 0.0
  %4451 = vmatprep.subr.mxu0 0.0
  %4452 = vmatpush1.msra.mxu0 0.0
  %4453 = vmatprep.subr.mxu0 0.0
  %4454 = vmatpush1.msra.mxu0 0.0
  %4455 = vmatprep.subr.mxu0 0.0
  %4456 = vmatpush1.msra.mxu0 0.0
  %4457 = vmatprep.subr.mxu0 0.0
  %4458 = vmatpush1.msra.mxu0 0.0
  %4459 = vmatprep.subr.mxu0 %v4366
  %4460 = vmatpush1.msra.mxu0 %v4365
  %4461 = vmatprep.subr.mxu0 %v4364
  %4462 = vmatpush1.msra.mxu0 %v4363
  %4463 = vmatprep.subr.mxu0 0.0
  %4464 = vmatpush2.msra.mxu0 0.0
  %4465 = vmatprep.subr.mxu0 0.0
  %4466 = vmatpush2.msra.mxu0 0.0
  %4467 = vmatprep.subr.mxu0 0.0
  %4468 = vmatpush2.msra.mxu0 0.0
  %4469 = vmatprep.subr.mxu0 0.0
  %4470 = vmatpush2.msra.mxu0 0.0
  %4471 = vmatprep.subr.mxu0 0.0
  %4472 = vmatpush2.msra.mxu0 0.0
  %4473 = vmatprep.subr.mxu0 0.0
  %4474 = vmatpush2.msra.mxu0 0.0
  %4475 = vmatprep.subr.mxu0 0.0
  %4476 = vmatpush2.msra.mxu0 0.0
  %4477 = vmatprep.subr.mxu0 0.0
  %4478 = vmatpush2.msra.mxu0 0.0
  %4479 = vmatprep.subr.mxu0 0.0
  %4480 = vmatpush2.msra.mxu0 0.0
  %4481 = vmatprep.subr.mxu0 0.0
  %4482 = vmatpush2.msra.mxu0 0.0
  %4483 = vmatprep.subr.mxu0 0.0
  %4484 = vmatpush2.msra.mxu0 0.0
  %4485 = vmatprep.subr.mxu0 0.0
  %4486 = vmatpush2.msra.mxu0 0.0
  %4487 = vmatprep.subr.mxu0 0.0
  %4488 = vmatpush2.msra.mxu0 0.0
  %4489 = vmatprep.subr.mxu0 0.0
  %4490 = vmatpush2.msra.mxu0 0.0
  %4491 = vmatprep.subr.mxu0 0.0
  %4492 = vmatpush2.msra.mxu0 0.0
  %4493 = vmatprep.subr.mxu0 0.0
  %4494 = vmatpush2.msra.mxu0 0.0
  %4495 = vmatprep.mubr.f32.mxu0 0.0
  %4496 = vmatmul.mubr.f32.gmra.mxu0 %v4419
  %v4497 = vpop.f32.mrf.mxu0
  %v4498 = vadd.f32 %v4407, %v4497
  %v4499 = vpop.f32.mrf.mxu0
  %v4500 = vadd.f32 %v4408, %v4499
  %4501 = vmatprep.mubr.f32.mxu0 0.0
  %4502 = vmatmul.mubr.f32.gmra.mxu0 %v4421
  %v4503 = vpop.f32.mrf.mxu0
  %v4504 = vadd.f32 %v4409, %v4503
  %v4505 = vpop.f32.mrf.mxu0
  %v4506 = vadd.f32 %v4410, %v4505
  %4507 = vmatprep.mubr.f32.mxu0 0.0
  %4508 = vmatmul.mubr.f32.gmra.mxu0 %v4423
  %v4509 = vpop.f32.mrf.mxu0
  %v4510 = vadd.f32 %v4411, %v4509
  %v4511 = vpop.f32.mrf.mxu0
  %v4512 = vadd.f32 %v4412, %v4511
  %4513 = vmatprep.mubr.f32.mxu0 0.0
  %4514 = vmatmul.mubr.f32.gmra.mxu0 %v4425
  %v4515 = vpop.f32.mrf.mxu0
  %v4516 = vadd.f32 %v4413, %v4515
  %v4517 = vpop.f32.mrf.mxu0
  %v4518 = vadd.f32 %v4414, %v4517
  %4519 = vmatprep.mubr.f32.mxu0 0.0
  %4520 = vmatmul.mubr.f32.gmra.mxu0 %v4427
  %v4521 = vpop.f32.mrf.mxu0
  %v4522 = vadd.f32 %v4415, %v4521
  %v4523 = vpop.f32.mrf.mxu0
  %v4524 = vadd.f32 %v4416, %v4523
  %4525 = vmatprep.mubr.f32.mxu0 0.0
  %4526 = vmatmul.mubr.f32.gmra.mxu0 %v4429
  %v4527 = vpop.f32.mrf.mxu0
  %v4528 = vadd.f32 %v4417, %v4527
  %v4529 = vpop.f32.mrf.mxu0
  %v4530 = vadd.f32 %v4418, %v4529
  %4531 = vdwg.mxu0
  %4532 = vset.pattern.permute.xlu0 2
  %4533 = vperm.xlu0 %4532, %v45
  %v4534 = vpop.permute.xlu0 %4533
  %4536 = vset.pattern.permute.xlu0 2
  %4537 = vperm.xlu0 %4536, %v46
  %v4538 = vpop.permute.xlu0 %4537
  %4540 = vset.pattern.permute.xlu0 2
  %4541 = vperm.xlu0 %4540, %v47
  %v4542 = vpop.permute.xlu0 %4541
  %4544 = vset.pattern.permute.xlu0 2
  %4545 = vperm.xlu0 %4544, %v48
  %v4546 = vpop.permute.xlu0 %4545
  %4548 = vset.pattern.permute.xlu0 2
  %4549 = vperm.xlu0 %4548, %v49
  %v4550 = vpop.permute.xlu0 %4549
  %4552 = vset.pattern.permute.xlu0 2
  %4553 = vperm.xlu0 %4552, %v50
  %v4554 = vpop.permute.xlu0 %4553
  %v4556 = vadd.f32 %v4498, %v4534
  %v4557 = vadd.f32 %v4500, %v4534
  %v4558 = vadd.f32 %v4504, %v4538
  %v4559 = vadd.f32 %v4506, %v4538
  %v4560 = vadd.f32 %v4510, %v4542
  %v4561 = vadd.f32 %v4512, %v4542
  %v4562 = vadd.f32 %v4516, %v4546
  %v4563 = vadd.f32 %v4518, %v4546
  %v4564 = vadd.f32 %v4522, %v4550
  %v4565 = vadd.f32 %v4524, %v4550
  %v4566 = vadd.f32 %v4528, %v4554
  %v4567 = vadd.f32 %v4530, %v4554
  %4568 = vst [vmem:[%s10] sm:$0xff] %v4556
  %vm4569 = vcmask 588800
  %4570 = vst.msk [vmem:[%s10 + $0x8] sm:$0xff] %vm4569, %v4557
  %4571 = vst [vmem:[%s10 + $0x10] sm:$0xff] %v4558
  %4572 = vst.msk [vmem:[%s10 + $0x18] sm:$0xff] %vm4569, %v4559
  %4573 = vst [vmem:[%s10 + $0x20] sm:$0xff] %v4560
  %4574 = vst.msk [vmem:[%s10 + $0x28] sm:$0xff] %vm4569, %v4561
  %4575 = vst [vmem:[%s10 + $0x30] sm:$0xff] %v4562
  %4576 = vst.msk [vmem:[%s10 + $0x38] sm:$0xff] %vm4569, %v4563
  %4577 = vst [vmem:[%s10 + $0x40] sm:$0xff] %v4564
  %4578 = vst.msk [vmem:[%s10 + $0x48] sm:$0xff] %vm4569, %v4565
  %4579 = vst [vmem:[%s10 + $0x50] sm:$0xff] %v4566
  %4580 = vst.msk [vmem:[%s10 + $0x58] sm:$0xff] %vm4569, %v4567
  // Predicated region
  $region42: #{eqmotion_forward.1} parent=0 // pred_check
    _
  $region43: #{eqmotion_forward.1} parent=0 // pred_check_branch
    %4582 = sbr.rel (0) target = $region45
  $region44: #{eqmotion_forward.1} parent=0 // pred_region
    _
  $region45: #{eqmotion_forward.1} parent=0 // pred_fallthru
    _
  // Predicated region
  $region46: #{eqmotion_forward.1} parent=0 // pred_check
    _
  $region47: #{eqmotion_forward.1} parent=0 // pred_check_branch
    %4584 = sbr.rel (0) target = $region49
  $region48: #{eqmotion_forward.1} parent=0 // pred_region
    _
  $region49: #{eqmotion_forward.1} parent=0 // pred_fallthru
    _
  // Predicated region
  $region50: #{eqmotion_forward.1} parent=0 // pred_check
    _
  $region51: #{eqmotion_forward.1} parent=0 // pred_check_branch
    %4586 = sbr.rel (0) target = $region53
  $region52: #{eqmotion_forward.1} parent=0 // pred_region
    _
  $region53: #{eqmotion_forward.1} parent=0 // pred_fallthru
    _
  // Predicated region
  $region54: #{eqmotion_forward.1} parent=0 // pred_check
    _
  $region55: #{eqmotion_forward.1} parent=0 // pred_check_branch
    %4588 = sbr.rel (0) target = $region57
  $region56: #{eqmotion_forward.1} parent=0 // pred_region
    _
  $region57: #{eqmotion_forward.1} parent=0 // pred_fallthru
    _

</llo_original>
